<compile_context>
chip_gen: v6e
topology: v6e:2x2x1
jax: 0.10.0
libtpu: 0.0.40
codegen_flags: <defaults>
</compile_context>

<pallas_src>
import functools
import math

import jax
import jax.numpy as jnp
import numpy as np
from jax.experimental import pallas as pl
from jax.experimental.pallas import tpu as pltpu

EPS = 1e-5                                                # torch.nn.LayerNorm default
NEG_INF = -0.7 * float(np.finfo(np.float32).max)          # finite mask fill (flash-safe)


def _layernorm(x, gamma, beta):
    mean = jnp.mean(x, axis=-1, keepdims=True)
    var = jnp.mean((x - mean) ** 2, axis=-1, keepdims=True)
    return (x - mean) * jax.lax.rsqrt(var + EPS) * gamma + beta


# --------------------- kernel 1: LN1 + fused QKV (heads-major out) ---------------------
def qkv_kernel(x_ref, ln1_g_ref, ln1_b_ref, wqkv_ref, bqkv_ref,
               xn_ref, q_ref, k_ref, v_ref, *, n_heads, head_dim, qk_scale):
    x = x_ref[...].astype(jnp.float32)                         # (TS, E)
    xn = _layernorm(x, ln1_g_ref[...], ln1_b_ref[...])          # (TS, E) f32
    xn_ref[...] = xn.astype(xn_ref.dtype)                       # bf16 residual carrier
    qkv = jnp.dot(xn.astype(jnp.bfloat16), wqkv_ref[...],
                  preferred_element_type=jnp.float32) + bqkv_ref[...]   # (TS, 3D) f32
    d_model = n_heads * head_dim
    # Head split happens once, in VMEM (static loop over heads) -> q/k/v leave the kernel
    # already in (H, tokens, head_dim) layout; 1/sqrt(head_dim) folded into q.
    for h in range(n_heads):
        lo = h * head_dim
        q_ref[h] = (qkv[:, lo:lo + head_dim] * qk_scale).astype(q_ref.dtype)
        k_ref[h] = qkv[:, d_model + lo:d_model + lo + head_dim].astype(k_ref.dtype)
        v_ref[h] = qkv[:, 2 * d_model + lo:2 * d_model + lo + head_dim].astype(v_ref.dtype)


# ----------- kernel 2: flash attention + out-proj + residual + LN2 + FFN -----------
def attn_ffn_kernel(q_ref, k_ref, v_ref, xn_ref,
                    wo_ref, bo_ref, ln2_g_ref, ln2_b_ref,
                    w1_ref, b1_ref, w2_ref, b2_ref,
                    out_ref,
                    m_scr, l_scr, acc_scr,
                    *, tq, tk, sliding_window):
    qi = pl.program_id(1)
    ki = pl.program_id(2)
    nk = pl.num_programs(2)

    @pl.when(ki == 0)
    def _init():
        m_scr[...] = jnp.full(m_scr.shape, NEG_INF, jnp.float32)
        l_scr[...] = jnp.zeros(l_scr.shape, jnp.float32)
        acc_scr[...] = jnp.zeros(acc_scr.shape, jnp.float32)

    q_start = qi * tq
    k_start = ki * tk
    # Tile needed at all: not entirely in the causal future, not entirely older than the window.
    needed = k_start <= q_start + (tq - 1)
    if sliding_window is not None:
        needed = jnp.logical_and(needed,
                                 k_start + (tk - 1) >= q_start - sliding_window)
    # Fully-unmasked interior tile: every (row, col) pair is causal and inside the window.
    unmasked = k_start + (tk - 1) <= q_start
    if sliding_window is not None:
        unmasked = jnp.logical_and(unmasked,
                                   (q_start + tq - 1) - k_start <= sliding_window)

    def _scores():
        # q is pre-scaled by 1/sqrt(head_dim) in kernel 1.
        return jnp.einsum("hqd,hkd->hqk", q_ref[...], k_ref[...],
                          preferred_element_type=jnp.float32)       # (H, TQ, TK) f32

    def _online_update(s):
        # Lane-replicated running max / denom (H, TQ, 128): full-lane stores in the hot loop.
        m_prev = m_scr[...]
        l_prev = l_scr[...]
        m_new = jnp.maximum(m_prev, jnp.max(s, axis=-1, keepdims=True))   # (H,TQ,128)
        alpha = jnp.exp(m_prev - m_new)                                    # (H,TQ,128)
        p = jnp.exp(s - m_new[:, :, :1])                                   # (H,TQ,TK)
        l_scr[...] = alpha * l_prev + jnp.sum(p, axis=-1, keepdims=True)
        acc_scr[...] = alpha[:, :, :1] * acc_scr[...] + jnp.einsum(
            "hqk,hkd->hqd", p.astype(v_ref.dtype), v_ref[...],
            preferred_element_type=jnp.float32)
        m_scr[...] = m_new

    @pl.when(jnp.logical_and(needed, unmasked))
    def _fast():                      # interior tile: no iota / compare / select work
        _online_update(_scores())

    @pl.when(jnp.logical_and(needed, jnp.logical_not(unmasked)))
    def _masked():                    # diagonal / window-edge tile
        s = _scores()
        row = q_start + jax.lax.broadcasted_iota(jnp.int32, (tq, tk), 0)
        col = k_start + jax.lax.broadcasted_iota(jnp.int32, (tq, tk), 1)
        mask = col > row
        if sliding_window is not None:
            mask = jnp.logical_or(mask, (row - col) > sliding_window)
        # Rows whose valid columns all lie in later tiles accumulate exp(0)=1 garbage here;
        # it is annihilated by alpha=exp(NEG_INF - m_real)=0 once the row reaches its diagonal
        # tile (every row always does), so this is safe for self-attention.
        _online_update(jnp.where(mask[None, :, :], NEG_INF, s))

    @pl.when(ki == nk - 1)
    def _finalize():
        inv_l = pl.reciprocal(l_scr[:, :, :1], approx=True)        # EUP reciprocal, (H,TQ,1)
        ctx = acc_scr[...] * inv_l                                  # (H, TQ, hd) f32
        # Lane-concatenate the per-head context once per q tile -> single full-depth (K=D)
        # MXU matmul against the original (D, D) output projection.
        ctx_qd = jnp.concatenate([ctx[h] for h in range(ctx.shape[0])], axis=-1)  # (TQ, D)
        attn = jnp.dot(ctx_qd.astype(jnp.bfloat16), wo_ref[...],
                       preferred_element_type=jnp.float32) + bo_ref[...]          # (TQ, D)

        # Residual adds onto the LayerNorm1 output (matches the PyTorch module, where `x`
        # has already been overwritten by layernorm1(x)).
        x1 = attn + xn_ref[...].astype(jnp.float32)

        x2 = _layernorm(x1, ln2_g_ref[...], ln2_b_ref[...])
        h1 = jnp.dot(x2.astype(jnp.bfloat16), w1_ref[...],
                     preferred_element_type=jnp.float32) + b1_ref[...]
        # tanh GELU (EUP-friendly); PyTorch F.gelu default is exact erf -> flip
        # approximate=False for bit-closer parity.
        h1 = jax.nn.gelu(h1, approximate=True)
        ffn = jnp.dot(h1.astype(jnp.bfloat16), w2_ref[...],
                      preferred_element_type=jnp.float32) + b2_ref[...]
        out_ref[...] = (ffn + x1).astype(out_ref.dtype)


# ------------------------------------ wrapper -------------------------------------
def _pick_tile(dim, target):
    if dim <= target:
        return dim
    for t in range(target, 7, -1):
        if dim % t == 0 and t % 8 == 0:
            return t
    return dim


def _nbytes(shape, dtype):
    return int(np.prod(shape)) * np.dtype(dtype).itemsize


def transformer_block(x, params, n_heads, sliding_window=None,
                      seq_tile=256, q_tile=256, kv_tile=256):
    """Forward (training / prefill) pass of TransformerBlock as two Pallas kernels."""
    B, S, E = x.shape
    D = params["wq"].shape[1]
    assert D % n_heads == 0
    hd = D // n_heads
    assert E == D, "residual add requires embed_dim == d_model (as in the PyTorch module)"

    BS = B * S
    ts = _pick_tile(BS, seq_tile)       # kernel-1 tile over batch-flattened tokens
    tq = _pick_tile(S, q_tile)
    tk = _pick_tile(S, kv_tile)
    nq, nkb = S // tq, S // tk
    f32, bf16 = jnp.float32, jnp.bfloat16

    # Fused QKV weights (bf16 for the MXU); biases / LN params stay f32.
    wqkv = jnp.concatenate([params["wq"], params["wk"], params["wv"]], axis=1).astype(bf16)
    bqkv = jnp.concatenate([params["bq"], params["bk"], params["bv"]], axis=1).astype(f32)
    x_flat = x.reshape(BS, E).astype(f32)                 # free reshape (no transpose)

    # ---------------- kernel 1: LayerNorm1 + QKV projection ----------------
    qkv_vmem = 2 * (_nbytes((ts, E), f32) + _nbytes((ts, E), bf16)
                    + 3 * _nbytes((n_heads, ts, hd), bf16)
                    + _nbytes((E, 3 * D), bf16) + _nbytes((1, 3 * D), f32)
                    + 2 * _nbytes((1, E), f32))
    qkv_cost = pl.CostEstimate(
        flops=int(2 * BS * E * 3 * D + 10 * BS * E),
        transcendentals=int(BS),
        bytes_accessed=int(_nbytes((BS, E), f32) + _nbytes((BS, E), bf16)
                           + 3 * _nbytes((BS, D), bf16) + _nbytes((E, 3 * D), bf16)))
    qkv_fn = pl.pallas_call(
        functools.partial(qkv_kernel, n_heads=n_heads, head_dim=hd,
                          qk_scale=1.0 / math.sqrt(hd)),
        out_shape=(
            jax.ShapeDtypeStruct((BS, E), bf16),            # xn (bf16 residual carrier)
            jax.ShapeDtypeStruct((n_heads, BS, hd), bf16),  # q (pre-scaled, heads-major)
            jax.ShapeDtypeStruct((n_heads, BS, hd), bf16),  # k
            jax.ShapeDtypeStruct((n_heads, BS, hd), bf16),  # v
        ),
        grid_spec=pltpu.PrefetchScalarGridSpec(
            num_scalar_prefetch=0,
            grid=(BS // ts,),
            in_specs=[
                pl.BlockSpec((ts, E), lambda s: (s, 0)),
                pl.BlockSpec((1, E), lambda s: (0, 0)),
                pl.BlockSpec((1, E), lambda s: (0, 0)),
                pl.BlockSpec((E, 3 * D), lambda s: (0, 0)),
                pl.BlockSpec((1, 3 * D), lambda s: (0, 0)),
            ],
            out_specs=(
                pl.BlockSpec((ts, E), lambda s: (s, 0)),
                pl.BlockSpec((n_heads, ts, hd), lambda s: (0, s, 0)),
                pl.BlockSpec((n_heads, ts, hd), lambda s: (0, s, 0)),
                pl.BlockSpec((n_heads, ts, hd), lambda s: (0, s, 0)),
            ),
        ),
        compiler_params=pltpu.CompilerParams(
            dimension_semantics=("parallel",),
            vmem_limit_bytes=int(min(max(1.5 * qkv_vmem, 32 << 20), 100 << 20))),
        cost_estimate=qkv_cost,
    )
    xn, q, k, v = qkv_fn(x_flat,
                         params["ln1_g"].astype(f32), params["ln1_b"].astype(f32),
                         wqkv, bqkv)

    # ---------------- kernel 2: flash attention + out-proj + residual + LN2 + FFN ----------------
    wo = params["wo"].astype(bf16)
    w1 = params["w1"].astype(bf16)
    w2 = params["w2"].astype(bf16)
    # TODO(synk): for large d_model on v7x (64 MiB VMEM), stream K-slices of w1/w2 from HBM
    # (memory_space=pl.ANY + pltpu.emit_pipeline over the 4D hidden dim) or single-buffer the
    # constant-index weight BlockSpecs instead of keeping them fully resident / double-buffered.

    def q_index(b, i, j):
        return (0, b * nq + i, 0)

    def kv_index(b, i, j):
        # Clamp the kv block into the causally / window-needed range of this q tile so DMAs of
        # skipped kv tiles collapse onto an already-resident block (compute is gated by pl.when).
        hi = ((i + 1) * tq - 1) // tk
        if sliding_window is None:
            lo = 0
        else:
            lo = jnp.maximum((i * tq - sliding_window) // tk, 0)
        return (0, b * nkb + jnp.clip(j, lo, hi), 0)

    def row_index(b, i, j):
        return (b * nq + i, 0)

    attn_vmem = (2 * (_nbytes((n_heads, tq, hd), bf16) + 2 * _nbytes((n_heads, tk, hd), bf16)
                      + _nbytes((tq, E), bf16) + _nbytes((tq, D), f32)
                      + _nbytes((D, D), bf16) + _nbytes((D, 4 * D), bf16)
                      + _nbytes((4 * D, D), bf16)
                      + 4 * _nbytes((1, D), f32) + _nbytes((1, 4 * D), f32))
                 + 2 * _nbytes((n_heads, tq, 128), f32) + _nbytes((n_heads, tq, hd), f32)
                 + 3 * _nbytes((tq, 4 * D), f32))     # headroom for finalize temporaries
    attn_cost = pl.CostEstimate(
        flops=int(2 * B * S * S * D          # QK^T (causal-averaged)
                  + 2 * B * S * S * D        # PV
                  + 2 * B * S * D * D        # output projection
                  + 16 * B * S * D * D),     # FFN
        transcendentals=int(B * n_heads * S * S + B * S * 4 * D + B * S),
        bytes_accessed=int(_nbytes((n_heads, BS, hd), bf16)
                           + 2 * _nbytes((n_heads, BS, hd), bf16) * max(1, (nq + 1) // 2)
                           + _nbytes((BS, E), bf16) + _nbytes((BS, D), f32)
                           + _nbytes((D, D), bf16) + _nbytes((D, 4 * D), bf16)
                           + _nbytes((4 * D, D), bf16)))
    attn_fn = pl.pallas_call(
        functools.partial(attn_ffn_kernel, tq=tq, tk=tk, sliding_window=sliding_window),
        out_shape=jax.ShapeDtypeStruct((BS, D), f32),
        grid_spec=pltpu.PrefetchScalarGridSpec(
            num_scalar_prefetch=0,
            # Keep B * (S // tq) >= 2 (ideally even) so v7x's two TensorCores stay balanced.
            grid=(B, nq, nkb),
            in_specs=[
                pl.BlockSpec((n_heads, tq, hd), q_index),
                pl.BlockSpec((n_heads, tk, hd), kv_index),
                pl.BlockSpec((n_heads, tk, hd), kv_index),
                pl.BlockSpec((tq, E), row_index),
                pl.BlockSpec((D, D), lambda b, i, j: (0, 0)),
                pl.BlockSpec((1, D), lambda b, i, j: (0, 0)),
                pl.BlockSpec((1, D), lambda b, i, j: (0, 0)),
                pl.BlockSpec((1, D), lambda b, i, j: (0, 0)),
                pl.BlockSpec((D, 4 * D), lambda b, i, j: (0, 0)),
                pl.BlockSpec((1, 4 * D), lambda b, i, j: (0, 0)),
                pl.BlockSpec((4 * D, D), lambda b, i, j: (0, 0)),
                pl.BlockSpec((1, D), lambda b, i, j: (0, 0)),
            ],
            out_specs=pl.BlockSpec((tq, D), row_index),
            scratch_shapes=[
                pltpu.VMEM((n_heads, tq, 128), f32),   # running max (lane-replicated)
                pltpu.VMEM((n_heads, tq, 128), f32),   # running denom (lane-replicated)
                pltpu.VMEM((n_heads, tq, hd), f32),    # running numerator
            ],
        ),
        compiler_params=pltpu.CompilerParams(
            dimension_semantics=("parallel", "parallel", "arbitrary"),
            vmem_limit_bytes=int(min(max(1.5 * attn_vmem, 32 << 20), 100 << 20))),
        cost_estimate=attn_cost,
    )
    out = attn_fn(q, k, v, xn,
                  wo, params["bo"].astype(f32),
                  params["ln2_g"].astype(f32), params["ln2_b"].astype(f32),
                  w1, params["b1"].astype(f32),
                  w2, params["b2"].astype(f32))
    return out.reshape(B, S, D)


# ---------------- pure-JAX f32 reference (PyTorch semantics, erf GELU) ----------------
def reference_block(x, params, n_heads, sliding_window=None):
    def ln(v, g, b):
        m = jnp.mean(v, axis=-1, keepdims=True)
        var = jnp.mean((v - m) ** 2, axis=-1, keepdims=True)
        return (v - m) / jnp.sqrt(var + EPS) * g + b

    B, S, E = x.shape
    xn = ln(x, params["ln1_g"][0], params["ln1_b"][0])
    q = xn @ params["wq"] + params["bq"][0]
    k = xn @ params["wk"] + params["bk"][0]
    v = xn @ params["wv"] + params["bv"][0]
    D = q.shape[-1]
    hd = D // n_heads
    qh = q.reshape(B, S, n_heads, hd).transpose(0, 2, 1, 3)
    kh = k.reshape(B, S, n_heads, hd).transpose(0, 2, 1, 3)
    vh = v.reshape(B, S, n_heads, hd).transpose(0, 2, 1, 3)
    logits = jnp.einsum("bhqd,bhkd->bhqk", qh, kh) / math.sqrt(hd)
    row = jnp.arange(S)[:, None]
    col = jnp.arange(S)[None, :]
    masked = col > row
    if sliding_window is not None:
        masked = masked | ((row - col) > sliding_window)
    logits = jnp.where(masked[None, None], -jnp.inf, logits)
    p = jax.nn.softmax(logits, axis=-1)
    attn = jnp.einsum("bhqk,bhkd->bhqd", p, vh)
    attn = attn.transpose(0, 2, 1, 3).reshape(B, S, D)
    attn = attn @ params["wo"] + params["bo"][0]
    x1 = attn + xn
    x2 = ln(x1, params["ln2_g"][0], params["ln2_b"][0])
    h1 = jax.nn.gelu(x2 @ params["w1"] + params["b1"][0], approximate=False)
    return h1 @ params["w2"] + params["b2"][0] + x1


def init_params(key, embed_dim, d_model):
    ks = jax.random.split(key, 8)
    scale = 0.05
    return {
        "ln1_g": jnp.ones((1, embed_dim), jnp.float32),
        "ln1_b": jnp.zeros((1, embed_dim), jnp.float32),
        "wq": scale * jax.random.normal(ks[0], (embed_dim, d_model), jnp.float32),
        "bq": scale * jax.random.normal(ks[1], (1, d_model), jnp.float32),
        "wk": scale * jax.random.normal(ks[2], (embed_dim, d_model), jnp.float32),
        "bk": jnp.zeros((1, d_model), jnp.float32),
        "wv": scale * jax.random.normal(ks[3], (embed_dim, d_model), jnp.float32),
        "bv": jnp.zeros((1, d_model), jnp.float32),
        "wo": scale * jax.random.normal(ks[4], (d_model, d_model), jnp.float32),
        "bo": jnp.zeros((1, d_model), jnp.float32),
        "ln2_g": jnp.ones((1, d_model), jnp.float32),
        "ln2_b": jnp.zeros((1, d_model), jnp.float32),
        "w1": scale * jax.random.normal(ks[5], (d_model, 4 * d_model), jnp.float32),
        "b1": scale * jax.random.normal(ks[6], (1, 4 * d_model), jnp.float32),
        "w2": scale * jax.random.normal(ks[7], (4 * d_model, d_model), jnp.float32),
        "b2": jnp.zeros((1, d_model), jnp.float32),
    }


if __name__ == "__main__":
    B, S, E = 2, 512, 128        # batch, seq, embed_dim (lane-aligned model dim)
    D, H = 128, 4                # d_model (== embed_dim for the residual), n_heads

    key = jax.random.PRNGKey(0)
    kx, kp = jax.random.split(key)
    x = jax.random.normal(kx, (B, S, E), jnp.float32)
    params = init_params(kp, E, D)

    # Config 1: full causal, default 256-wide tiles (single-kv-tile fast/masked paths).
    # Config 2: sliding window + 128-wide tiles (multi-kv-tile accumulation, DMA-clamp skip).
    configs = [
        dict(sliding_window=None),
        dict(sliding_window=192, seq_tile=256, q_tile=128, kv_tile=128),
    ]
    for cfg in configs:
        out = transformer_block(x, params, n_heads=H, **cfg)
        out = jax.block_until_ready(out)
        ref = reference_block(x, params, n_heads=H,
                              sliding_window=cfg.get("sliding_window"))
        np.testing.assert_allclose(np.asarray(out), np.asarray(ref),
                                   rtol=2e-2, atol=3e-2)

    print("KERNEL_OK")
</pallas_src>

<mosaic_0001>
module attributes {stable_mosaic.version = 11 : i64} {
  func.func @qkv_kernel(%arg0: i32, %arg1: memref<256x128xf32, #tpu.memory_space<vmem>>, %arg2: memref<1x128xf32, #tpu.memory_space<vmem>>, %arg3: memref<1x128xf32, #tpu.memory_space<vmem>>, %arg4: memref<128x384xbf16, #tpu.memory_space<vmem>>, %arg5: memref<1x384xf32, #tpu.memory_space<vmem>>, %arg6: memref<256x128xbf16, #tpu.memory_space<vmem>>, %arg7: memref<4x256x32xbf16, #tpu.memory_space<vmem>>, %arg8: memref<4x256x32xbf16, #tpu.memory_space<vmem>>, %arg9: memref<4x256x32xbf16, #tpu.memory_space<vmem>>) attributes {dimension_semantics = [#tpu.dimension_semantics<parallel>], iteration_bounds = array<i64: 4>, scalar_prefetch = 0 : i64, scratch_operands = 0 : i64, tpu.core_type = #tpu.core_type<tc>, window_params = [{transform_indices = @transform_0, window_bounds = array<i64: 256, 128>}, {pipeline_mode = #tpu.pipeline_mode<synchronous>, transform_indices = @transform_1, window_bounds = array<i64: 1, 128>}, {pipeline_mode = #tpu.pipeline_mode<synchronous>, transform_indices = @transform_2, window_bounds = array<i64: 1, 128>}, {pipeline_mode = #tpu.pipeline_mode<synchronous>, transform_indices = @transform_3, window_bounds = array<i64: 128, 384>}, {pipeline_mode = #tpu.pipeline_mode<synchronous>, transform_indices = @transform_4, window_bounds = array<i64: 1, 384>}, {transform_indices = @transform_5, window_bounds = array<i64: 256, 128>}, {transform_indices = @transform_6, window_bounds = array<i64: 4, 256, 32>}, {transform_indices = @transform_7, window_bounds = array<i64: 4, 256, 32>}, {transform_indices = @transform_8, window_bounds = array<i64: 4, 256, 32>}]} {
    %c0 = arith.constant 0 : index
    %c0_0 = arith.constant 0 : index
    %0 = vector.load %arg1[%c0, %c0_0] : memref<256x128xf32, #tpu.memory_space<vmem>>, vector<256x128xf32>
    %c0_1 = arith.constant 0 : index
    %c0_2 = arith.constant 0 : index
    %1 = vector.load %arg2[%c0_1, %c0_2] : memref<1x128xf32, #tpu.memory_space<vmem>>, vector<1x128xf32>
    %c0_3 = arith.constant 0 : index
    %c0_4 = arith.constant 0 : index
    %2 = vector.load %arg3[%c0_3, %c0_4] : memref<1x128xf32, #tpu.memory_space<vmem>>, vector<1x128xf32>
    %cst = arith.constant dense<0.000000e+00> : vector<256xf32>
    %3 = vector.multi_reduction <add>, %0, %cst [1] : vector<256x128xf32> to vector<256xf32>
    %4 = vector.shape_cast %3 : vector<256xf32> to vector<256x1xf32>
    %cst_5 = arith.constant 1.280000e+02 : f32
    %5 = vector.broadcast %cst_5 : f32 to vector<256x1xf32>
    %6 = arith.divf %4, %5 : vector<256x1xf32>
    %7 = vector.broadcast %6 : vector<256x1xf32> to vector<256x128xf32>
    %8 = arith.subf %0, %7 : vector<256x128xf32>
    %9 = arith.mulf %8, %8 : vector<256x128xf32>
    %cst_6 = arith.constant dense<0.000000e+00> : vector<256xf32>
    %10 = vector.multi_reduction <add>, %9, %cst_6 [1] : vector<256x128xf32> to vector<256xf32>
    %11 = vector.shape_cast %10 : vector<256xf32> to vector<256x1xf32>
    %cst_7 = arith.constant 1.280000e+02 : f32
    %12 = vector.broadcast %cst_7 : f32 to vector<256x1xf32>
    %13 = arith.divf %11, %12 : vector<256x1xf32>
    %14 = vector.broadcast %6 : vector<256x1xf32> to vector<256x128xf32>
    %15 = arith.subf %0, %14 : vector<256x128xf32>
    %cst_8 = arith.constant 9.99999974E-6 : f32
    %16 = vector.broadcast %cst_8 : f32 to vector<256x1xf32>
    %17 = arith.addf %13, %16 : vector<256x1xf32>
    %18 = math.rsqrt %17 : vector<256x1xf32>
    %19 = vector.broadcast %18 : vector<256x1xf32> to vector<256x128xf32>
    %20 = arith.mulf %15, %19 : vector<256x128xf32>
    %21 = vector.broadcast %1 : vector<1x128xf32> to vector<256x128xf32>
    %22 = arith.mulf %20, %21 : vector<256x128xf32>
    %23 = vector.broadcast %2 : vector<1x128xf32> to vector<256x128xf32>
    %24 = arith.addf %22, %23 : vector<256x128xf32>
    %25 = arith.truncf %24 : vector<256x128xf32> to vector<256x128xbf16>
    %c0_9 = arith.constant 0 : index
    %c0_10 = arith.constant 0 : index
    %26 = vector.load %arg6[%c0_9, %c0_10] : memref<256x128xbf16, #tpu.memory_space<vmem>>, vector<256x128xbf16>
    tpu.vector_store %arg6[%c0_9, %c0_10], %25 {strides = array<i32>} : memref<256x128xbf16, #tpu.memory_space<vmem>>, vector<256x128xbf16>,
    %27 = arith.truncf %24 : vector<256x128xf32> to vector<256x128xbf16>
    %c0_11 = arith.constant 0 : index
    %c0_12 = arith.constant 0 : index
    %28 = vector.load %arg4[%c0_11, %c0_12] : memref<128x384xbf16, #tpu.memory_space<vmem>>, vector<128x384xbf16>
    %cst_13 = arith.constant dense<0.000000e+00> : vector<256x384xf32>
    %29 = tpu.matmul %27, %28, %cst_13 {dimension_numbers = #tpu.dot_dimension_numbers<[1], [0], [0], [1], [0, 0, 1, 1], [], []>} : vector<256x128xbf16>, vector<128x384xbf16>, vector<256x384xf32> -> vector<256x384xf32>
    %c0_14 = arith.constant 0 : index
    %c0_15 = arith.constant 0 : index
    %30 = vector.load %arg5[%c0_14, %c0_15] : memref<1x384xf32, #tpu.memory_space<vmem>>, vector<1x384xf32>
    %31 = vector.broadcast %30 : vector<1x384xf32> to vector<256x384xf32>
    %32 = arith.addf %29, %31 : vector<256x384xf32>
    %33 = vector.extract_strided_slice %32 {offsets = [0, 0], sizes = [256, 32], strides = [1, 1]} : vector<256x384xf32> to vector<256x32xf32>
    %cst_16 = arith.constant 0.176776692 : f32
    %34 = vector.broadcast %cst_16 : f32 to vector<256x32xf32>
    %35 = arith.mulf %33, %34 : vector<256x32xf32>
    %36 = arith.truncf %35 : vector<256x32xf32> to vector<256x32xbf16>
    %c0_17 = arith.constant 0 : index
    %c0_18 = arith.constant 0 : index
    %c0_19 = arith.constant 0 : index
    %37 = vector.load %arg7[%c0_17, %c0_18, %c0_19] : memref<4x256x32xbf16, #tpu.memory_space<vmem>>, vector<1x256x32xbf16>
    %38 = vector.shape_cast %37 : vector<1x256x32xbf16> to vector<256x32xbf16>
    %39 = vector.shape_cast %36 : vector<256x32xbf16> to vector<1x256x32xbf16>
    tpu.vector_store %arg7[%c0_17, %c0_18, %c0_19], %39 {strides = array<i32>} : memref<4x256x32xbf16, #tpu.memory_space<vmem>>, vector<1x256x32xbf16>,
    %40 = vector.extract_strided_slice %32 {offsets = [0, 128], sizes = [256, 32], strides = [1, 1]} : vector<256x384xf32> to vector<256x32xf32>
    %41 = arith.truncf %40 : vector<256x32xf32> to vector<256x32xbf16>
    %c0_20 = arith.constant 0 : index
    %c0_21 = arith.constant 0 : index
    %c0_22 = arith.constant 0 : index
    %42 = vector.load %arg8[%c0_20, %c0_21, %c0_22] : memref<4x256x32xbf16, #tpu.memory_space<vmem>>, vector<1x256x32xbf16>
    %43 = vector.shape_cast %42 : vector<1x256x32xbf16> to vector<256x32xbf16>
    %44 = vector.shape_cast %41 : vector<256x32xbf16> to vector<1x256x32xbf16>
    tpu.vector_store %arg8[%c0_20, %c0_21, %c0_22], %44 {strides = array<i32>} : memref<4x256x32xbf16, #tpu.memory_space<vmem>>, vector<1x256x32xbf16>,
    %45 = vector.extract_strided_slice %32 {offsets = [0, 256], sizes = [256, 32], strides = [1, 1]} : vector<256x384xf32> to vector<256x32xf32>
    %46 = arith.truncf %45 : vector<256x32xf32> to vector<256x32xbf16>
    %c0_23 = arith.constant 0 : index
    %c0_24 = arith.constant 0 : index
    %c0_25 = arith.constant 0 : index
    %47 = vector.load %arg9[%c0_23, %c0_24, %c0_25] : memref<4x256x32xbf16, #tpu.memory_space<vmem>>, vector<1x256x32xbf16>
    %48 = vector.shape_cast %47 : vector<1x256x32xbf16> to vector<256x32xbf16>
    %49 = vector.shape_cast %46 : vector<256x32xbf16> to vector<1x256x32xbf16>
    tpu.vector_store %arg9[%c0_23, %c0_24, %c0_25], %49 {strides = array<i32>} : memref<4x256x32xbf16, #tpu.memory_space<vmem>>, vector<1x256x32xbf16>,
    %50 = vector.extract_strided_slice %32 {offsets = [0, 32], sizes = [256, 32], strides = [1, 1]} : vector<256x384xf32> to vector<256x32xf32>
    %cst_26 = arith.constant 0.176776692 : f32
    %51 = vector.broadcast %cst_26 : f32 to vector<256x32xf32>
    %52 = arith.mulf %50, %51 : vector<256x32xf32>
    %53 = arith.truncf %52 : vector<256x32xf32> to vector<256x32xbf16>
    %c1 = arith.constant 1 : index
    %c0_27 = arith.constant 0 : index
    %c0_28 = arith.constant 0 : index
    %54 = vector.load %arg7[%c1, %c0_27, %c0_28] : memref<4x256x32xbf16, #tpu.memory_space<vmem>>, vector<1x256x32xbf16>
    %55 = vector.shape_cast %54 : vector<1x256x32xbf16> to vector<256x32xbf16>
    %56 = vector.shape_cast %53 : vector<256x32xbf16> to vector<1x256x32xbf16>
    tpu.vector_store %arg7[%c1, %c0_27, %c0_28], %56 {strides = array<i32>} : memref<4x256x32xbf16, #tpu.memory_space<vmem>>, vector<1x256x32xbf16>,
    %57 = vector.extract_strided_slice %32 {offsets = [0, 160], sizes = [256, 32], strides = [1, 1]} : vector<256x384xf32> to vector<256x32xf32>
    %58 = arith.truncf %57 : vector<256x32xf32> to vector<256x32xbf16>
    %c1_29 = arith.constant 1 : index
    %c0_30 = arith.constant 0 : index
    %c0_31 = arith.constant 0 : index
    %59 = vector.load %arg8[%c1_29, %c0_30, %c0_31] : memref<4x256x32xbf16, #tpu.memory_space<vmem>>, vector<1x256x32xbf16>
    %60 = vector.shape_cast %59 : vector<1x256x32xbf16> to vector<256x32xbf16>
    %61 = vector.shape_cast %58 : vector<256x32xbf16> to vector<1x256x32xbf16>
    tpu.vector_store %arg8[%c1_29, %c0_30, %c0_31], %61 {strides = array<i32>} : memref<4x256x32xbf16, #tpu.memory_space<vmem>>, vector<1x256x32xbf16>,
    %62 = vector.extract_strided_slice %32 {offsets = [0, 288], sizes = [256, 32], strides = [1, 1]} : vector<256x384xf32> to vector<256x32xf32>
    %63 = arith.truncf %62 : vector<256x32xf32> to vector<256x32xbf16>
    %c1_32 = arith.constant 1 : index
    %c0_33 = arith.constant 0 : index
    %c0_34 = arith.constant 0 : index
    %64 = vector.load %arg9[%c1_32, %c0_33, %c0_34] : memref<4x256x32xbf16, #tpu.memory_space<vmem>>, vector<1x256x32xbf16>
    %65 = vector.shape_cast %64 : vector<1x256x32xbf16> to vector<256x32xbf16>
    %66 = vector.shape_cast %63 : vector<256x32xbf16> to vector<1x256x32xbf16>
    tpu.vector_store %arg9[%c1_32, %c0_33, %c0_34], %66 {strides = array<i32>} : memref<4x256x32xbf16, #tpu.memory_space<vmem>>, vector<1x256x32xbf16>,
    %67 = vector.extract_strided_slice %32 {offsets = [0, 64], sizes = [256, 32], strides = [1, 1]} : vector<256x384xf32> to vector<256x32xf32>
    %cst_35 = arith.constant 0.176776692 : f32
    %68 = vector.broadcast %cst_35 : f32 to vector<256x32xf32>
    %69 = arith.mulf %67, %68 : vector<256x32xf32>
    %70 = arith.truncf %69 : vector<256x32xf32> to vector<256x32xbf16>
    %c2 = arith.constant 2 : index
    %c0_36 = arith.constant 0 : index
    %c0_37 = arith.constant 0 : index
    %71 = vector.load %arg7[%c2, %c0_36, %c0_37] : memref<4x256x32xbf16, #tpu.memory_space<vmem>>, vector<1x256x32xbf16>
    %72 = vector.shape_cast %71 : vector<1x256x32xbf16> to vector<256x32xbf16>
    %73 = vector.shape_cast %70 : vector<256x32xbf16> to vector<1x256x32xbf16>
    tpu.vector_store %arg7[%c2, %c0_36, %c0_37], %73 {strides = array<i32>} : memref<4x256x32xbf16, #tpu.memory_space<vmem>>, vector<1x256x32xbf16>,
    %74 = vector.extract_strided_slice %32 {offsets = [0, 192], sizes = [256, 32], strides = [1, 1]} : vector<256x384xf32> to vector<256x32xf32>
    %75 = arith.truncf %74 : vector<256x32xf32> to vector<256x32xbf16>
    %c2_38 = arith.constant 2 : index
    %c0_39 = arith.constant 0 : index
    %c0_40 = arith.constant 0 : index
    %76 = vector.load %arg8[%c2_38, %c0_39, %c0_40] : memref<4x256x32xbf16, #tpu.memory_space<vmem>>, vector<1x256x32xbf16>
    %77 = vector.shape_cast %76 : vector<1x256x32xbf16> to vector<256x32xbf16>
    %78 = vector.shape_cast %75 : vector<256x32xbf16> to vector<1x256x32xbf16>
    tpu.vector_store %arg8[%c2_38, %c0_39, %c0_40], %78 {strides = array<i32>} : memref<4x256x32xbf16, #tpu.memory_space<vmem>>, vector<1x256x32xbf16>,
    %79 = vector.extract_strided_slice %32 {offsets = [0, 320], sizes = [256, 32], strides = [1, 1]} : vector<256x384xf32> to vector<256x32xf32>
    %80 = arith.truncf %79 : vector<256x32xf32> to vector<256x32xbf16>
    %c2_41 = arith.constant 2 : index
    %c0_42 = arith.constant 0 : index
    %c0_43 = arith.constant 0 : index
    %81 = vector.load %arg9[%c2_41, %c0_42, %c0_43] : memref<4x256x32xbf16, #tpu.memory_space<vmem>>, vector<1x256x32xbf16>
    %82 = vector.shape_cast %81 : vector<1x256x32xbf16> to vector<256x32xbf16>
    %83 = vector.shape_cast %80 : vector<256x32xbf16> to vector<1x256x32xbf16>
    tpu.vector_store %arg9[%c2_41, %c0_42, %c0_43], %83 {strides = array<i32>} : memref<4x256x32xbf16, #tpu.memory_space<vmem>>, vector<1x256x32xbf16>,
    %84 = vector.extract_strided_slice %32 {offsets = [0, 96], sizes = [256, 32], strides = [1, 1]} : vector<256x384xf32> to vector<256x32xf32>
    %cst_44 = arith.constant 0.176776692 : f32
    %85 = vector.broadcast %cst_44 : f32 to vector<256x32xf32>
    %86 = arith.mulf %84, %85 : vector<256x32xf32>
    %87 = arith.truncf %86 : vector<256x32xf32> to vector<256x32xbf16>
    %c3 = arith.constant 3 : index
    %c0_45 = arith.constant 0 : index
    %c0_46 = arith.constant 0 : index
    %88 = vector.load %arg7[%c3, %c0_45, %c0_46] : memref<4x256x32xbf16, #tpu.memory_space<vmem>>, vector<1x256x32xbf16>
    %89 = vector.shape_cast %88 : vector<1x256x32xbf16> to vector<256x32xbf16>
    %90 = vector.shape_cast %87 : vector<256x32xbf16> to vector<1x256x32xbf16>
    tpu.vector_store %arg7[%c3, %c0_45, %c0_46], %90 {strides = array<i32>} : memref<4x256x32xbf16, #tpu.memory_space<vmem>>, vector<1x256x32xbf16>,
    %91 = vector.extract_strided_slice %32 {offsets = [0, 224], sizes = [256, 32], strides = [1, 1]} : vector<256x384xf32> to vector<256x32xf32>
    %92 = arith.truncf %91 : vector<256x32xf32> to vector<256x32xbf16>
    %c3_47 = arith.constant 3 : index
    %c0_48 = arith.constant 0 : index
    %c0_49 = arith.constant 0 : index
    %93 = vector.load %arg8[%c3_47, %c0_48, %c0_49] : memref<4x256x32xbf16, #tpu.memory_space<vmem>>, vector<1x256x32xbf16>
    %94 = vector.shape_cast %93 : vector<1x256x32xbf16> to vector<256x32xbf16>
    %95 = vector.shape_cast %92 : vector<256x32xbf16> to vector<1x256x32xbf16>
    tpu.vector_store %arg8[%c3_47, %c0_48, %c0_49], %95 {strides = array<i32>} : memref<4x256x32xbf16, #tpu.memory_space<vmem>>, vector<1x256x32xbf16>,
    %96 = vector.extract_strided_slice %32 {offsets = [0, 352], sizes = [256, 32], strides = [1, 1]} : vector<256x384xf32> to vector<256x32xf32>
    %97 = arith.truncf %96 : vector<256x32xf32> to vector<256x32xbf16>
    %c3_50 = arith.constant 3 : index
    %c0_51 = arith.constant 0 : index
    %c0_52 = arith.constant 0 : index
    %98 = vector.load %arg9[%c3_50, %c0_51, %c0_52] : memref<4x256x32xbf16, #tpu.memory_space<vmem>>, vector<1x256x32xbf16>
    %99 = vector.shape_cast %98 : vector<1x256x32xbf16> to vector<256x32xbf16>
    %100 = vector.shape_cast %97 : vector<256x32xbf16> to vector<1x256x32xbf16>
    tpu.vector_store %arg9[%c3_50, %c0_51, %c0_52], %100 {strides = array<i32>} : memref<4x256x32xbf16, #tpu.memory_space<vmem>>, vector<1x256x32xbf16>,
    return
  }
  func.func @transform_0(%arg0: i32) -> (i32, i32) {
    %c0_i32 = arith.constant 0 : i32
    %c0_i32_0 = arith.constant 0 : i32
    return %arg0, %c0_i32 : i32, i32
  }
  func.func @transform_1(%arg0: i32) -> (i32, i32) {
    %c0_i32 = arith.constant 0 : i32
    %c0_i32_0 = arith.constant 0 : i32
    %c0_i32_1 = arith.constant 0 : i32
    return %c0_i32, %c0_i32_0 : i32, i32
  }
  func.func @transform_2(%arg0: i32) -> (i32, i32) {
    %c0_i32 = arith.constant 0 : i32
    %c0_i32_0 = arith.constant 0 : i32
    %c0_i32_1 = arith.constant 0 : i32
    return %c0_i32, %c0_i32_0 : i32, i32
  }
  func.func @transform_3(%arg0: i32) -> (i32, i32) {
    %c0_i32 = arith.constant 0 : i32
    %c0_i32_0 = arith.constant 0 : i32
    %c0_i32_1 = arith.constant 0 : i32
    return %c0_i32, %c0_i32_0 : i32, i32
  }
  func.func @transform_4(%arg0: i32) -> (i32, i32) {
    %c0_i32 = arith.constant 0 : i32
    %c0_i32_0 = arith.constant 0 : i32
    %c0_i32_1 = arith.constant 0 : i32
    return %c0_i32, %c0_i32_0 : i32, i32
  }
  func.func @transform_5(%arg0: i32) -> (i32, i32) {
    %c0_i32 = arith.constant 0 : i32
    %c0_i32_0 = arith.constant 0 : i32
    return %arg0, %c0_i32 : i32, i32
  }
  func.func @transform_6(%arg0: i32) -> (i32, i32, i32) {
    %c0_i32 = arith.constant 0 : i32
    %c0_i32_0 = arith.constant 0 : i32
    %c0_i32_1 = arith.constant 0 : i32
    return %c0_i32, %arg0, %c0_i32_0 : i32, i32, i32
  }
  func.func @transform_7(%arg0: i32) -> (i32, i32, i32) {
    %c0_i32 = arith.constant 0 : i32
    %c0_i32_0 = arith.constant 0 : i32
    %c0_i32_1 = arith.constant 0 : i32
    return %c0_i32, %arg0, %c0_i32_0 : i32, i32, i32
  }
  func.func @transform_8(%arg0: i32) -> (i32, i32, i32) {
    %c0_i32 = arith.constant 0 : i32
    %c0_i32_0 = arith.constant 0 : i32
    %c0_i32_1 = arith.constant 0 : i32
    return %c0_i32, %arg0, %c0_i32_0 : i32, i32, i32
  }
}

</mosaic_0001>

<llo_original>
// kernel: tpu_custom_call.1
$region0: #{tpu_custom_call.1}
  #allocation0 [shape = 'u32[]', space=smem, size = 0x4, offset = 0x4, fixed_abs, tag = 'smem constant byte address 0x4 - core index']
  #allocation1 [shape = 'u32[144,128]{1,0:T(1,128)}', space=vmem, size = 0x12000, scoped, tag = 'internal scratch']
  %s0 = inlined_call_operand.hbm [shape: f32[1024,128], index: 0, kind: input, shape index: {}]
  %s1 = inlined_call_operand.vmem [shape: f32[1,128], index: 1, kind: input, shape index: {}]
  %s2 = inlined_call_operand.vmem [shape: f32[1,128], index: 2, kind: input, shape index: {}]
  %s3 = inlined_call_operand.hbm [shape: bf16[128,384], index: 3, kind: input, shape index: {}]
  %s4 = inlined_call_operand.vmem [shape: f32[1,384], index: 4, kind: input, shape index: {}]
  %s5 = inlined_call_operand.hbm [shape: bf16[1024,128], index: 5, kind: output, shape index: {0}]
  %s6 = inlined_call_operand.vmem [shape: bf16[4,1024,32], index: 6, kind: output, shape index: {1}]
  %s7 = inlined_call_operand.vmem [shape: bf16[4,1024,32], index: 7, kind: output, shape index: {2}]
  %s8 = inlined_call_operand.vmem [shape: bf16[4,1024,32], index: 8, kind: output, shape index: {3}]
  %9 = xla_tuple %s5, %s6, %s7, %s8
  %s10 = sld [smem:[#allocation0]]
  $region196: #{tpu_custom_call.1} parent=0
    _
  %s12 = ssub.s32 1, %s10
  %s13 = scalar_select 0, %s12, %s10
  $region1: #{tpu_custom_call.1} parent=0
    #allocation2 [shape = 'u8[262144]{0}', space=vmem, size = 0x40000, scoped, tag = 'input window, operand 0']
    #allocation3 [shape = 's32[2]{0}', space=sflag, size = 0x8, scoped, tag = 'scoped memory for tpu_custom_call.1']
    #allocation4 [shape = 's32[2]{0}', space=sflag, size = 0x8, scoped, tag = 'scoped memory for tpu_custom_call.1']
    #allocation5 [shape = 'u8[98304]{0}', space=vmem, size = 0x18000, scoped, tag = 'input window, operand 3, single buffered']
    #allocation6 [shape = 's32[1]{0}', space=sflag, size = 0x4, scoped, tag = 'scoped memory for tpu_custom_call.1']
    #allocation7 [shape = 'u8[131072]{0}', space=vmem, size = 0x20000, scoped, tag = 'output window, operand 0']
    #allocation8 [shape = 'u8[524288]{0}', space=vmem, size = 0x80000, scoped, tag = 'output window, operand 1']
    #allocation9 [shape = 'u8[524288]{0}', space=vmem, size = 0x80000, scoped, tag = 'output window, operand 2']
    #allocation10 [shape = 'u8[524288]{0}', space=vmem, size = 0x80000, scoped, tag = 'output window, operand 3']
    %14 = vsyncpa [#allocation3], 0
    %s15 = scalar_lea.sflag [#allocation3], 1
    %16 = vsyncpa %s15, 0
    %17 = vsyncpa [#allocation6], 0
    %18 = vsyncpa [#allocation4], 0
    %s19 = scalar_lea.sflag [#allocation4], 1
    %20 = vsyncpa %s19, 0
    loop: start=0, step=1, limit=6
    $region2: #{tpu_custom_call.1} parent=1 // loop_pre_header
      _
    $region3: #{tpu_custom_call.1} parent=1 // loop_header
      %s22 = sphi 0, %s26
      %p23 = scmp.ge.s32.totalorder %s22, 6
      %s32 = sphi 0, %s34
      %s35 = sphi 0, %s32
      %s36 = sphi 0, %s35
      %s52 = sphi 0, %s36
      %s56 = sphi 0, %s56
      %s58 = sphi 0, %s56
      %s59 = sphi 0, %s58
      %s73 = sphi 0, %s59
      %s77 = sphi 0, %s77
      %s79 = sphi 0, %s77
      %s80 = sphi 0, %s79
      %s94 = sphi 0, %s80
      %s98 = sphi 0, %s98
      %s100 = sphi 0, %s98
      %s101 = sphi 0, %s100
      %s115 = sphi 0, %s101
      %s119 = sphi 0, %s119
      %s121 = sphi 0, %s119
      %s122 = sphi 0, %s121
      %s136 = sphi 0, %s122
      %s142 = sphi 0, %s144
      %s145 = sphi 0, %s142
      %s146 = sphi 0, %s145
      %s162 = sphi 0, %s146
      %s168 = sphi 0, %s170
      %s171 = sphi 0, %s168
      %s172 = sphi 0, %s171
      %s188 = sphi 0, %s172
      %s194 = sphi 0, %s196
      %s197 = sphi 0, %s194
      %s198 = sphi 0, %s197
      %s214 = sphi 0, %s198
      %s220 = sphi 0, %s222
      %s223 = sphi 0, %s220
      %s224 = sphi 0, %s223
      %s240 = sphi 0, %s224
    $region4: #{tpu_custom_call.1} parent=1 // loop_header_branch
      %25 = sbr.rel (%p23) target = $region8
    $region5: #{tpu_custom_call.1} parent=1 // loop_body
      %s27 = ssub.s32 %s22, 1
      %s28 = ssub.s32 %s22, 2
      %s29 = sadd.s32 %s22, 1
      %s30 = ssub.s32 %s22, %s29
      %p31 = scmp.eq.s32.totalorder %s30, 0
      %s33 = sadd.s32 %s32, 1
      %s34 = scalar_select %p31, %s32, %s33
      %p37 = pneg %p31
      %p38 = scmp.eq.s32.totalorder %s22, 3
      %p39 = por %p37, %p38
      %p40 = scmp.ne.s32.totalorder %s32, %s35
      %p41 = scmp.eq.s32.totalorder %s22, 0
      %p42 = por %p40, %p41
      %p43 = scmp.ne.s32.totalorder %s32, %s35
      %p44 = scmp.eq.s32.totalorder %s27, 3
      %p45 = por %p43, %p44
      %p46 = scmp.ne.s32.totalorder %s35, %s36
      %p47 = scmp.eq.s32.totalorder %s27, 0
      %p48 = por %p46, %p47
      %p49 = scmp.ne.s32.totalorder %s35, %s36
      %p50 = scmp.eq.s32.totalorder %s28, 3
      %p51 = por %p49, %p50
      %p53 = scmp.ne.s32.totalorder %s36, %s52
      %p54 = scmp.eq.s32.totalorder %s28, 0
      %p55 = por %p53, %p54
      %s57 = sadd.s32 %s56, 1
      %p60 = scmp.eq.s32.totalorder %s22, 3
      %p61 = scmp.ne.s32.totalorder %s56, %s58
      %p62 = scmp.eq.s32.totalorder %s22, 0
      %p63 = por %p61, %p62
      %p64 = scmp.ne.s32.totalorder %s56, %s58
      %p65 = scmp.eq.s32.totalorder %s27, 3
      %p66 = por %p64, %p65
      %p67 = scmp.ne.s32.totalorder %s58, %s59
      %p68 = scmp.eq.s32.totalorder %s27, 0
      %p69 = por %p67, %p68
      %p70 = scmp.ne.s32.totalorder %s58, %s59
      %p71 = scmp.eq.s32.totalorder %s28, 3
      %p72 = por %p70, %p71
      %p74 = scmp.ne.s32.totalorder %s59, %s73
      %p75 = scmp.eq.s32.totalorder %s28, 0
      %p76 = por %p74, %p75
      %s78 = sadd.s32 %s77, 1
      %p81 = scmp.eq.s32.totalorder %s22, 3
      %p82 = scmp.ne.s32.totalorder %s77, %s79
      %p83 = scmp.eq.s32.totalorder %s22, 0
      %p84 = por %p82, %p83
      %p85 = scmp.ne.s32.totalorder %s77, %s79
      %p86 = scmp.eq.s32.totalorder %s27, 3
      %p87 = por %p85, %p86
      %p88 = scmp.ne.s32.totalorder %s79, %s80
      %p89 = scmp.eq.s32.totalorder %s27, 0
      %p90 = por %p88, %p89
      %p91 = scmp.ne.s32.totalorder %s79, %s80
      %p92 = scmp.eq.s32.totalorder %s28, 3
      %p93 = por %p91, %p92
      %p95 = scmp.ne.s32.totalorder %s80, %s94
      %p96 = scmp.eq.s32.totalorder %s28, 0
      %p97 = por %p95, %p96
      %s99 = sadd.s32 %s98, 1
      %p102 = scmp.eq.s32.totalorder %s22, 3
      %p103 = scmp.ne.s32.totalorder %s98, %s100
      %p104 = scmp.eq.s32.totalorder %s22, 0
      %p105 = por %p103, %p104
      %p106 = scmp.ne.s32.totalorder %s98, %s100
      %p107 = scmp.eq.s32.totalorder %s27, 3
      %p108 = por %p106, %p107
      %p109 = scmp.ne.s32.totalorder %s100, %s101
      %p110 = scmp.eq.s32.totalorder %s27, 0
      %p111 = por %p109, %p110
      %p112 = scmp.ne.s32.totalorder %s100, %s101
      %p113 = scmp.eq.s32.totalorder %s28, 3
      %p114 = por %p112, %p113
      %p116 = scmp.ne.s32.totalorder %s101, %s115
      %p117 = scmp.eq.s32.totalorder %s28, 0
      %p118 = por %p116, %p117
      %s120 = sadd.s32 %s119, 1
      %p123 = scmp.eq.s32.totalorder %s22, 3
      %p124 = scmp.ne.s32.totalorder %s119, %s121
      %p125 = scmp.eq.s32.totalorder %s22, 0
      %p126 = por %p124, %p125
      %p127 = scmp.ne.s32.totalorder %s119, %s121
      %p128 = scmp.eq.s32.totalorder %s27, 3
      %p129 = por %p127, %p128
      %p130 = scmp.ne.s32.totalorder %s121, %s122
      %p131 = scmp.eq.s32.totalorder %s27, 0
      %p132 = por %p130, %p131
      %p133 = scmp.ne.s32.totalorder %s121, %s122
      %p134 = scmp.eq.s32.totalorder %s28, 3
      %p135 = por %p133, %p134
      %p137 = scmp.ne.s32.totalorder %s122, %s136
      %p138 = scmp.eq.s32.totalorder %s28, 0
      %p139 = por %p137, %p138
      %s140 = ssub.s32 %s22, %s29
      %p141 = scmp.eq.s32.totalorder %s140, 0
      %s143 = sadd.s32 %s142, 1
      %s144 = scalar_select %p141, %s142, %s143
      %p147 = pneg %p141
      %p148 = scmp.eq.s32.totalorder %s22, 3
      %p149 = por %p147, %p148
      %p150 = scmp.ne.s32.totalorder %s142, %s145
      %p151 = scmp.eq.s32.totalorder %s22, 0
      %p152 = por %p150, %p151
      %p153 = scmp.ne.s32.totalorder %s142, %s145
      %p154 = scmp.eq.s32.totalorder %s27, 3
      %p155 = por %p153, %p154
      %p156 = scmp.ne.s32.totalorder %s145, %s146
      %p157 = scmp.eq.s32.totalorder %s27, 0
      %p158 = por %p156, %p157
      %p159 = scmp.ne.s32.totalorder %s145, %s146
      %p160 = scmp.eq.s32.totalorder %s28, 3
      %p161 = por %p159, %p160
      %p163 = scmp.ne.s32.totalorder %s146, %s162
      %p164 = scmp.eq.s32.totalorder %s28, 0
      %p165 = por %p163, %p164
      %s166 = ssub.s32 %s22, %s29
      %p167 = scmp.eq.s32.totalorder %s166, 0
      %s169 = sadd.s32 %s168, 1
      %s170 = scalar_select %p167, %s168, %s169
      %p173 = pneg %p167
      %p174 = scmp.eq.s32.totalorder %s22, 3
      %p175 = por %p173, %p174
      %p176 = scmp.ne.s32.totalorder %s168, %s171
      %p177 = scmp.eq.s32.totalorder %s22, 0
      %p178 = por %p176, %p177
      %p179 = scmp.ne.s32.totalorder %s168, %s171
      %p180 = scmp.eq.s32.totalorder %s27, 3
      %p181 = por %p179, %p180
      %p182 = scmp.ne.s32.totalorder %s171, %s172
      %p183 = scmp.eq.s32.totalorder %s27, 0
      %p184 = por %p182, %p183
      %p185 = scmp.ne.s32.totalorder %s171, %s172
      %p186 = scmp.eq.s32.totalorder %s28, 3
      %p187 = por %p185, %p186
      %p189 = scmp.ne.s32.totalorder %s172, %s188
      %p190 = scmp.eq.s32.totalorder %s28, 0
      %p191 = por %p189, %p190
      %s192 = ssub.s32 %s22, %s29
      %p193 = scmp.eq.s32.totalorder %s192, 0
      %s195 = sadd.s32 %s194, 1
      %s196 = scalar_select %p193, %s194, %s195
      %p199 = pneg %p193
      %p200 = scmp.eq.s32.totalorder %s22, 3
      %p201 = por %p199, %p200
      %p202 = scmp.ne.s32.totalorder %s194, %s197
      %p203 = scmp.eq.s32.totalorder %s22, 0
      %p204 = por %p202, %p203
      %p205 = scmp.ne.s32.totalorder %s194, %s197
      %p206 = scmp.eq.s32.totalorder %s27, 3
      %p207 = por %p205, %p206
      %p208 = scmp.ne.s32.totalorder %s197, %s198
      %p209 = scmp.eq.s32.totalorder %s27, 0
      %p210 = por %p208, %p209
      %p211 = scmp.ne.s32.totalorder %s197, %s198
      %p212 = scmp.eq.s32.totalorder %s28, 3
      %p213 = por %p211, %p212
      %p215 = scmp.ne.s32.totalorder %s198, %s214
      %p216 = scmp.eq.s32.totalorder %s28, 0
      %p217 = por %p215, %p216
      %s218 = ssub.s32 %s22, %s29
      %p219 = scmp.eq.s32.totalorder %s218, 0
      %s221 = sadd.s32 %s220, 1
      %s222 = scalar_select %p219, %s220, %s221
      %p225 = pneg %p219
      %p226 = scmp.eq.s32.totalorder %s22, 3
      %p227 = por %p225, %p226
      %p228 = scmp.ne.s32.totalorder %s220, %s223
      %p229 = scmp.eq.s32.totalorder %s22, 0
      %p230 = por %p228, %p229
      %p231 = scmp.ne.s32.totalorder %s220, %s223
      %p232 = scmp.eq.s32.totalorder %s27, 3
      %p233 = por %p231, %p232
      %p234 = scmp.ne.s32.totalorder %s223, %s224
      %p235 = scmp.eq.s32.totalorder %s27, 0
      %p236 = por %p234, %p235
      %p237 = scmp.ne.s32.totalorder %s223, %s224
      %p238 = scmp.eq.s32.totalorder %s28, 3
      %p239 = por %p237, %p238
      %p241 = scmp.ne.s32.totalorder %s224, %s240
      %p242 = scmp.eq.s32.totalorder %s28, 0
      %p243 = por %p241, %p242
      %p244 = scmp.le.s32.totalorder 1, %s22
      %p245 = scmp.lt.s32.totalorder %s22, 5
      %p246 = pnand %p244, %p245
      %p247 = pneg %p246
      // Predicated region
      $region9: #{tpu_custom_call.1} parent=5 // pred_check
        _
      $region10: #{tpu_custom_call.1} parent=5 // pred_check_branch
        %249 = sbr.rel (%p246) target = $region12
      $region11: #{tpu_custom_call.1} parent=5 // pred_region
        %s250 = ssub.s32 %s22, 1
        // Predicated region
        $region13: #{tpu_custom_call.1} parent=11 // pred_check
          %p251 = pneg %p69
        $region14: #{tpu_custom_call.1} parent=11 // pred_check_branch
          %253 = sbr.rel (%p251) target = $region16
        $region15: #{tpu_custom_call.1} parent=11 // pred_region
          _
        $region16: #{tpu_custom_call.1} parent=11 // pred_fallthru
          _
        // Predicated region
        $region17: #{tpu_custom_call.1} parent=11 // pred_check
          %p254 = pneg %p90
        $region18: #{tpu_custom_call.1} parent=11 // pred_check_branch
          %256 = sbr.rel (%p254) target = $region20
        $region19: #{tpu_custom_call.1} parent=11 // pred_region
          _
        $region20: #{tpu_custom_call.1} parent=11 // pred_fallthru
          _
        // Predicated region
        $region21: #{tpu_custom_call.1} parent=11 // pred_check
          %p257 = pneg %p111
        $region22: #{tpu_custom_call.1} parent=11 // pred_check_branch
          %259 = sbr.rel (%p257) target = $region24
        $region23: #{tpu_custom_call.1} parent=11 // pred_region
          %s261 = ssub.s32 3072, 3072
          %262 = vsyncadd [#allocation6], %s261
          %s263 = sshll.u32 [#allocation5], 4
          %s264 = int_to_ptr.vmem [resolvable:$true] %s263
          %269 = dma.hbm_to_vmem [thread:$0]  %s3, 3072, %s264, [#allocation6], 192, 192, 12
        $region24: #{tpu_custom_call.1} parent=11 // pred_fallthru
          _
        // Predicated region
        $region25: #{tpu_custom_call.1} parent=11 // pred_check
          %p270 = pneg %p132
        $region26: #{tpu_custom_call.1} parent=11 // pred_check_branch
          %272 = sbr.rel (%p270) target = $region28
        $region27: #{tpu_custom_call.1} parent=11 // pred_region
          _
        $region28: #{tpu_custom_call.1} parent=11 // pred_fallthru
          _
      $region12: #{tpu_custom_call.1} parent=5 // pred_fallthru
        _
      %p273 = scmp.lt.s32.totalorder %s22, 4
      // Predicated region
      $region29: #{tpu_custom_call.1} parent=5 // pred_check
        %p274 = pneg %p273
      $region30: #{tpu_custom_call.1} parent=5 // pred_check_branch
        %276 = sbr.rel (%p274) target = $region32
      $region31: #{tpu_custom_call.1} parent=5 // pred_region
        // Predicated region
        $region33: #{tpu_custom_call.1} parent=31 // pred_check
          %p277 = pneg %p42
        $region34: #{tpu_custom_call.1} parent=31 // pred_check_branch
          %279 = sbr.rel (%p277) target = $region36
        $region35: #{tpu_custom_call.1} parent=31 // pred_region
          %s280 = sand.u32 %s32, 1
          %s281 = scalar_lea.sflag [#allocation3], %s280
          %s282 = sand.u32 %s32, 1
          %s283 = smul.addr %s282, 256
          %s284 = scalar_lea.vmem [#allocation2], %s283
          %s285 = smul.u32 32, %s22
          %s287 = ssub.s32 4096, 4096
          %288 = vsyncadd %s281, %s287
          %s289 = smul.addr %s285, 128
          %s290 = scalar_lea.hbm %s0, %s289
          %s291 = sshll.u32 %s284, 4
          %s292 = int_to_ptr.vmem [resolvable:$true] %s291
          %297 = dma.hbm_to_vmem [thread:$0]  %s290, 4096, %s292, %s281, 128, 128, 8
        $region36: #{tpu_custom_call.1} parent=31 // pred_fallthru
          _
      $region32: #{tpu_custom_call.1} parent=5 // pred_fallthru
        _
      %p298 = scmp.le.s32.totalorder 1, %s22
      %p299 = scmp.lt.s32.totalorder %s22, 5
      %p300 = pnand %p298, %p299
      %p301 = pneg %p300
      // Predicated region
      $region37: #{tpu_custom_call.1} parent=5 // pred_check
        _
      $region38: #{tpu_custom_call.1} parent=5 // pred_check_branch
        %303 = sbr.rel (%p300) target = $region40
      $region39: #{tpu_custom_call.1} parent=5 // pred_region
        %s304 = ssub.s32 %s22, 1
        %s305 = sand.u32 %s35, 1
        %s306 = scalar_lea.sflag [#allocation3], %s305
        %s307 = sand.u32 %s35, 1
        %s308 = smul.addr %s307, 256
        %s309 = scalar_lea.vmem [#allocation2], %s308
        // Predicated region
        $region41: #{tpu_custom_call.1} parent=39 // pred_check
          %p310 = pneg %p48
        $region42: #{tpu_custom_call.1} parent=39 // pred_check_branch
          %312 = sbr.rel (%p310) target = $region44
        $region43: #{tpu_custom_call.1} parent=39 // pred_region
          %313 = dma.done %s306, 4096
        $region44: #{tpu_custom_call.1} parent=39 // pred_fallthru
          _
        // Predicated region
        $region45: #{tpu_custom_call.1} parent=39 // pred_check
          %p314 = pneg %p111
        $region46: #{tpu_custom_call.1} parent=39 // pred_check_branch
          %316 = sbr.rel (%p314) target = $region48
        $region47: #{tpu_custom_call.1} parent=39 // pred_region
          %317 = dma.done [#allocation6], 3072
        $region48: #{tpu_custom_call.1} parent=39 // pred_fallthru
          _
        %s318 = sand.u32 %s35, 1
        %s319 = scalar_lea.sflag [#allocation3], %s318
        %s320 = sand.u32 %s35, 1
        %s321 = smul.addr %s320, 256
        %s322 = scalar_lea.vmem [#allocation2], %s321
        %p323 = pneg %p48
        %p324 = pneg %p45
        %p325 = pneg %p69
        %p326 = pneg %p66
        %p327 = pneg %p90
        %p328 = pneg %p87
        %p329 = pneg %p111
        %p330 = pneg %p108
        %p331 = pneg %p132
        %p332 = pneg %p129
        %p333 = pneg %p158
        %p334 = pneg %p155
        %s335 = sand.u32 %s145, 1
        %s336 = scalar_lea.sflag [#allocation4], %s335
        %s337 = sand.u32 %s145, 1
        %s338 = smul.addr %s337, 128
        %s339 = scalar_lea.vmem [#allocation7], %s338
        %p340 = pneg %p184
        %p341 = pneg %p181
        %s342 = sand.u32 %s171, 1
        %s343 = sand.u32 %s171, 1
        %s344 = smul.addr %s343, 512
        %s345 = scalar_lea.vmem [#allocation8], %s344
        %p346 = pneg %p210
        %p347 = pneg %p207
        %s348 = sand.u32 %s197, 1
        %s349 = sand.u32 %s197, 1
        %s350 = smul.addr %s349, 512
        %s351 = scalar_lea.vmem [#allocation9], %s350
        %p352 = pneg %p236
        %p353 = pneg %p233
        %s354 = sand.u32 %s223, 1
        %s355 = sand.u32 %s223, 1
        %s356 = smul.addr %s355, 512
        %s357 = scalar_lea.vmem [#allocation10], %s356
        %s358 = smul.u32 32, %s27
        %s359 = smul.u32 32, %s27
        %s360 = smul.u32 32, %s27
        %s361 = smul.u32 32, %s27
        %s362 = smul.u32 32, %s27
        %v364 = vld [vmem:[%s309] sm:$0xff]
        %v365 = vld [vmem:[%s309 + $0x8] sm:$0xff]
        %v366 = vld [vmem:[%s309 + $0x10] sm:$0xff]
        %v367 = vld [vmem:[%s309 + $0x18] sm:$0xff]
        %v368 = vld [vmem:[%s309 + $0x20] sm:$0xff]
        %v369 = vld [vmem:[%s309 + $0x28] sm:$0xff]
        %v370 = vld [vmem:[%s309 + $0x30] sm:$0xff]
        %v371 = vld [vmem:[%s309 + $0x38] sm:$0xff]
        %v372 = vld [vmem:[%s309 + $0x40] sm:$0xff]
        %v373 = vld [vmem:[%s309 + $0x48] sm:$0xff]
        %v374 = vld [vmem:[%s309 + $0x50] sm:$0xff]
        %v375 = vld [vmem:[%s309 + $0x58] sm:$0xff]
        %v376 = vld [vmem:[%s309 + $0x60] sm:$0xff]
        %v377 = vld [vmem:[%s309 + $0x68] sm:$0xff]
        %v378 = vld [vmem:[%s309 + $0x70] sm:$0xff]
        %v379 = vld [vmem:[%s309 + $0x78] sm:$0xff]
        %v380 = vld [vmem:[%s309 + $0x80] sm:$0xff]
        %v381 = vld [vmem:[%s309 + $0x88] sm:$0xff]
        %v382 = vld [vmem:[%s309 + $0x90] sm:$0xff]
        %v383 = vld [vmem:[%s309 + $0x98] sm:$0xff]
        %v384 = vld [vmem:[%s309 + $0xa0] sm:$0xff]
        %v385 = vld [vmem:[%s309 + $0xa8] sm:$0xff]
        %v386 = vld [vmem:[%s309 + $0xb0] sm:$0xff]
        %v387 = vld [vmem:[%s309 + $0xb8] sm:$0xff]
        %v388 = vld [vmem:[%s309 + $0xc0] sm:$0xff]
        %v389 = vld [vmem:[%s309 + $0xc8] sm:$0xff]
        %v390 = vld [vmem:[%s309 + $0xd0] sm:$0xff]
        %v391 = vld [vmem:[%s309 + $0xd8] sm:$0xff]
        %v392 = vld [vmem:[%s309 + $0xe0] sm:$0xff]
        %v393 = vld [vmem:[%s309 + $0xe8] sm:$0xff]
        %v394 = vld [vmem:[%s309 + $0xf0] sm:$0xff]
        %v395 = vld [vmem:[%s309 + $0xf8] sm:$0xff]
        %v396 = vld [vmem:[%s1] sm:$0x1]
        %v397 = vld [vmem:[%s2] sm:$0x1]
        %398 = vadd.xlane.f32.xlu0 %v364
        %v399 = vpop.xlane.xlu0 %398
        %400 = vadd.xlane.f32.xlu0 %v365
        %v401 = vpop.xlane.xlu0 %400
        %402 = vadd.xlane.f32.xlu0 %v366
        %v403 = vpop.xlane.xlu0 %402
        %404 = vadd.xlane.f32.xlu0 %v367
        %v405 = vpop.xlane.xlu0 %404
        %406 = vadd.xlane.f32.xlu0 %v368
        %v407 = vpop.xlane.xlu0 %406
        %408 = vadd.xlane.f32.xlu0 %v369
        %v409 = vpop.xlane.xlu0 %408
        %410 = vadd.xlane.f32.xlu0 %v370
        %v411 = vpop.xlane.xlu0 %410
        %412 = vadd.xlane.f32.xlu0 %v371
        %v413 = vpop.xlane.xlu0 %412
        %414 = vadd.xlane.f32.xlu0 %v372
        %v415 = vpop.xlane.xlu0 %414
        %416 = vadd.xlane.f32.xlu0 %v373
        %v417 = vpop.xlane.xlu0 %416
        %418 = vadd.xlane.f32.xlu0 %v374
        %v419 = vpop.xlane.xlu0 %418
        %420 = vadd.xlane.f32.xlu0 %v375
        %v421 = vpop.xlane.xlu0 %420
        %422 = vadd.xlane.f32.xlu0 %v376
        %v423 = vpop.xlane.xlu0 %422
        %424 = vadd.xlane.f32.xlu0 %v377
        %v425 = vpop.xlane.xlu0 %424
        %426 = vadd.xlane.f32.xlu0 %v378
        %v427 = vpop.xlane.xlu0 %426
        %428 = vadd.xlane.f32.xlu0 %v379
        %v429 = vpop.xlane.xlu0 %428
        %430 = vadd.xlane.f32.xlu0 %v380
        %v431 = vpop.xlane.xlu0 %430
        %432 = vadd.xlane.f32.xlu0 %v381
        %v433 = vpop.xlane.xlu0 %432
        %434 = vadd.xlane.f32.xlu0 %v382
        %v435 = vpop.xlane.xlu0 %434
        %436 = vadd.xlane.f32.xlu0 %v383
        %v437 = vpop.xlane.xlu0 %436
        %438 = vadd.xlane.f32.xlu0 %v384
        %v439 = vpop.xlane.xlu0 %438
        %440 = vadd.xlane.f32.xlu0 %v385
        %v441 = vpop.xlane.xlu0 %440
        %442 = vadd.xlane.f32.xlu0 %v386
        %v443 = vpop.xlane.xlu0 %442
        %444 = vadd.xlane.f32.xlu0 %v387
        %v445 = vpop.xlane.xlu0 %444
        %446 = vadd.xlane.f32.xlu0 %v388
        %v447 = vpop.xlane.xlu0 %446
        %448 = vadd.xlane.f32.xlu0 %v389
        %v449 = vpop.xlane.xlu0 %448
        %450 = vadd.xlane.f32.xlu0 %v390
        %v451 = vpop.xlane.xlu0 %450
        %452 = vadd.xlane.f32.xlu0 %v391
        %v453 = vpop.xlane.xlu0 %452
        %454 = vadd.xlane.f32.xlu0 %v392
        %v455 = vpop.xlane.xlu0 %454
        %456 = vadd.xlane.f32.xlu0 %v393
        %v457 = vpop.xlane.xlu0 %456
        %458 = vadd.xlane.f32.xlu0 %v394
        %v459 = vpop.xlane.xlu0 %458
        %460 = vadd.xlane.f32.xlu0 %v395
        %v461 = vpop.xlane.xlu0 %460
        %v462 = vrcp.pop 128.0
        %v463 = vmul.f32 %v399, %v462
        %v464 = vmul.f32 %v401, %v462
        %v465 = vmul.f32 %v403, %v462
        %v466 = vmul.f32 %v405, %v462
        %v467 = vmul.f32 %v407, %v462
        %v468 = vmul.f32 %v409, %v462
        %v469 = vmul.f32 %v411, %v462
        %v470 = vmul.f32 %v413, %v462
        %v471 = vmul.f32 %v415, %v462
        %v472 = vmul.f32 %v417, %v462
        %v473 = vmul.f32 %v419, %v462
        %v474 = vmul.f32 %v421, %v462
        %v475 = vmul.f32 %v423, %v462
        %v476 = vmul.f32 %v425, %v462
        %v477 = vmul.f32 %v427, %v462
        %v478 = vmul.f32 %v429, %v462
        %v479 = vmul.f32 %v431, %v462
        %v480 = vmul.f32 %v433, %v462
        %v481 = vmul.f32 %v435, %v462
        %v482 = vmul.f32 %v437, %v462
        %v483 = vmul.f32 %v439, %v462
        %v484 = vmul.f32 %v441, %v462
        %v485 = vmul.f32 %v443, %v462
        %v486 = vmul.f32 %v445, %v462
        %v487 = vmul.f32 %v447, %v462
        %v488 = vmul.f32 %v449, %v462
        %v489 = vmul.f32 %v451, %v462
        %v490 = vmul.f32 %v453, %v462
        %v491 = vmul.f32 %v455, %v462
        %v492 = vmul.f32 %v457, %v462
        %v493 = vmul.f32 %v459, %v462
        %v494 = vmul.f32 %v461, %v462
        %v495 = vsub.f32 %v364, %v463
        %v496 = vsub.f32 %v365, %v464
        %v497 = vsub.f32 %v366, %v465
        %v498 = vsub.f32 %v367, %v466
        %v499 = vsub.f32 %v368, %v467
        %v500 = vsub.f32 %v369, %v468
        %v501 = vsub.f32 %v370, %v469
        %v502 = vsub.f32 %v371, %v470
        %v503 = vsub.f32 %v372, %v471
        %v504 = vsub.f32 %v373, %v472
        %v505 = vsub.f32 %v374, %v473
        %v506 = vsub.f32 %v375, %v474
        %v507 = vsub.f32 %v376, %v475
        %v508 = vsub.f32 %v377, %v476
        %v509 = vsub.f32 %v378, %v477
        %v510 = vsub.f32 %v379, %v478
        %v511 = vsub.f32 %v380, %v479
        %v512 = vsub.f32 %v381, %v480
        %v513 = vsub.f32 %v382, %v481
        %v514 = vsub.f32 %v383, %v482
        %v515 = vsub.f32 %v384, %v483
        %v516 = vsub.f32 %v385, %v484
        %v517 = vsub.f32 %v386, %v485
        %v518 = vsub.f32 %v387, %v486
        %v519 = vsub.f32 %v388, %v487
        %v520 = vsub.f32 %v389, %v488
        %v521 = vsub.f32 %v390, %v489
        %v522 = vsub.f32 %v391, %v490
        %v523 = vsub.f32 %v392, %v491
        %v524 = vsub.f32 %v393, %v492
        %v525 = vsub.f32 %v394, %v493
        %v526 = vsub.f32 %v395, %v494
        %v527 = vmul.f32 %v495, %v495
        %v528 = vmul.f32 %v496, %v496
        %v529 = vmul.f32 %v497, %v497
        %v530 = vmul.f32 %v498, %v498
        %v531 = vmul.f32 %v499, %v499
        %v532 = vmul.f32 %v500, %v500
        %v533 = vmul.f32 %v501, %v501
        %v534 = vmul.f32 %v502, %v502
        %v535 = vmul.f32 %v503, %v503
        %v536 = vmul.f32 %v504, %v504
        %v537 = vmul.f32 %v505, %v505
        %v538 = vmul.f32 %v506, %v506
        %v539 = vmul.f32 %v507, %v507
        %v540 = vmul.f32 %v508, %v508
        %v541 = vmul.f32 %v509, %v509
        %v542 = vmul.f32 %v510, %v510
        %v543 = vmul.f32 %v511, %v511
        %v544 = vmul.f32 %v512, %v512
        %v545 = vmul.f32 %v513, %v513
        %v546 = vmul.f32 %v514, %v514
        %v547 = vmul.f32 %v515, %v515
        %v548 = vmul.f32 %v516, %v516
        %v549 = vmul.f32 %v517, %v517
        %v550 = vmul.f32 %v518, %v518
        %v551 = vmul.f32 %v519, %v519
        %v552 = vmul.f32 %v520, %v520
        %v553 = vmul.f32 %v521, %v521
        %v554 = vmul.f32 %v522, %v522
        %v555 = vmul.f32 %v523, %v523
        %v556 = vmul.f32 %v524, %v524
        %v557 = vmul.f32 %v525, %v525
        %v558 = vmul.f32 %v526, %v526
        %559 = vadd.xlane.f32.xlu0 %v527
        %v560 = vpop.xlane.xlu0 %559
        %561 = vadd.xlane.f32.xlu0 %v528
        %v562 = vpop.xlane.xlu0 %561
        %563 = vadd.xlane.f32.xlu0 %v529
        %v564 = vpop.xlane.xlu0 %563
        %565 = vadd.xlane.f32.xlu0 %v530
        %v566 = vpop.xlane.xlu0 %565
        %567 = vadd.xlane.f32.xlu0 %v531
        %v568 = vpop.xlane.xlu0 %567
        %569 = vadd.xlane.f32.xlu0 %v532
        %v570 = vpop.xlane.xlu0 %569
        %571 = vadd.xlane.f32.xlu0 %v533
        %v572 = vpop.xlane.xlu0 %571
        %573 = vadd.xlane.f32.xlu0 %v534
        %v574 = vpop.xlane.xlu0 %573
        %575 = vadd.xlane.f32.xlu0 %v535
        %v576 = vpop.xlane.xlu0 %575
        %577 = vadd.xlane.f32.xlu0 %v536
        %v578 = vpop.xlane.xlu0 %577
        %579 = vadd.xlane.f32.xlu0 %v537
        %v580 = vpop.xlane.xlu0 %579
        %581 = vadd.xlane.f32.xlu0 %v538
        %v582 = vpop.xlane.xlu0 %581
        %583 = vadd.xlane.f32.xlu0 %v539
        %v584 = vpop.xlane.xlu0 %583
        %585 = vadd.xlane.f32.xlu0 %v540
        %v586 = vpop.xlane.xlu0 %585
        %587 = vadd.xlane.f32.xlu0 %v541
        %v588 = vpop.xlane.xlu0 %587
        %589 = vadd.xlane.f32.xlu0 %v542
        %v590 = vpop.xlane.xlu0 %589
        %591 = vadd.xlane.f32.xlu0 %v543
        %v592 = vpop.xlane.xlu0 %591
        %593 = vadd.xlane.f32.xlu0 %v544
        %v594 = vpop.xlane.xlu0 %593
        %595 = vadd.xlane.f32.xlu0 %v545
        %v596 = vpop.xlane.xlu0 %595
        %597 = vadd.xlane.f32.xlu0 %v546
        %v598 = vpop.xlane.xlu0 %597
        %599 = vadd.xlane.f32.xlu0 %v547
        %v600 = vpop.xlane.xlu0 %599
        %601 = vadd.xlane.f32.xlu0 %v548
        %v602 = vpop.xlane.xlu0 %601
        %603 = vadd.xlane.f32.xlu0 %v549
        %v604 = vpop.xlane.xlu0 %603
        %605 = vadd.xlane.f32.xlu0 %v550
        %v606 = vpop.xlane.xlu0 %605
        %607 = vadd.xlane.f32.xlu0 %v551
        %v608 = vpop.xlane.xlu0 %607
        %609 = vadd.xlane.f32.xlu0 %v552
        %v610 = vpop.xlane.xlu0 %609
        %611 = vadd.xlane.f32.xlu0 %v553
        %v612 = vpop.xlane.xlu0 %611
        %613 = vadd.xlane.f32.xlu0 %v554
        %v614 = vpop.xlane.xlu0 %613
        %615 = vadd.xlane.f32.xlu0 %v555
        %v616 = vpop.xlane.xlu0 %615
        %617 = vadd.xlane.f32.xlu0 %v556
        %v618 = vpop.xlane.xlu0 %617
        %619 = vadd.xlane.f32.xlu0 %v557
        %v620 = vpop.xlane.xlu0 %619
        %621 = vadd.xlane.f32.xlu0 %v558
        %v622 = vpop.xlane.xlu0 %621
        %v623 = vmul.f32 %v560, %v462
        %v624 = vmul.f32 %v562, %v462
        %v625 = vmul.f32 %v564, %v462
        %v626 = vmul.f32 %v566, %v462
        %v627 = vmul.f32 %v568, %v462
        %v628 = vmul.f32 %v570, %v462
        %v629 = vmul.f32 %v572, %v462
        %v630 = vmul.f32 %v574, %v462
        %v631 = vmul.f32 %v576, %v462
        %v632 = vmul.f32 %v578, %v462
        %v633 = vmul.f32 %v580, %v462
        %v634 = vmul.f32 %v582, %v462
        %v635 = vmul.f32 %v584, %v462
        %v636 = vmul.f32 %v586, %v462
        %v637 = vmul.f32 %v588, %v462
        %v638 = vmul.f32 %v590, %v462
        %v639 = vmul.f32 %v592, %v462
        %v640 = vmul.f32 %v594, %v462
        %v641 = vmul.f32 %v596, %v462
        %v642 = vmul.f32 %v598, %v462
        %v643 = vmul.f32 %v600, %v462
        %v644 = vmul.f32 %v602, %v462
        %v645 = vmul.f32 %v604, %v462
        %v646 = vmul.f32 %v606, %v462
        %v647 = vmul.f32 %v608, %v462
        %v648 = vmul.f32 %v610, %v462
        %v649 = vmul.f32 %v612, %v462
        %v650 = vmul.f32 %v614, %v462
        %v651 = vmul.f32 %v616, %v462
        %v652 = vmul.f32 %v618, %v462
        %v653 = vmul.f32 %v620, %v462
        %v654 = vmul.f32 %v622, %v462
        %v655 = vadd.f32 %v623, 1e-05
        %v656 = vadd.f32 %v624, 1e-05
        %v657 = vadd.f32 %v625, 1e-05
        %v658 = vadd.f32 %v626, 1e-05
        %v659 = vadd.f32 %v627, 1e-05
        %v660 = vadd.f32 %v628, 1e-05
        %v661 = vadd.f32 %v629, 1e-05
        %v662 = vadd.f32 %v630, 1e-05
        %v663 = vadd.f32 %v631, 1e-05
        %v664 = vadd.f32 %v632, 1e-05
        %v665 = vadd.f32 %v633, 1e-05
        %v666 = vadd.f32 %v634, 1e-05
        %v667 = vadd.f32 %v635, 1e-05
        %v668 = vadd.f32 %v636, 1e-05
        %v669 = vadd.f32 %v637, 1e-05
        %v670 = vadd.f32 %v638, 1e-05
        %v671 = vadd.f32 %v639, 1e-05
        %v672 = vadd.f32 %v640, 1e-05
        %v673 = vadd.f32 %v641, 1e-05
        %v674 = vadd.f32 %v642, 1e-05
        %v675 = vadd.f32 %v643, 1e-05
        %v676 = vadd.f32 %v644, 1e-05
        %v677 = vadd.f32 %v645, 1e-05
        %v678 = vadd.f32 %v646, 1e-05
        %v679 = vadd.f32 %v647, 1e-05
        %v680 = vadd.f32 %v648, 1e-05
        %v681 = vadd.f32 %v649, 1e-05
        %v682 = vadd.f32 %v650, 1e-05
        %v683 = vadd.f32 %v651, 1e-05
        %v684 = vadd.f32 %v652, 1e-05
        %v685 = vadd.f32 %v653, 1e-05
        %v686 = vadd.f32 %v654, 1e-05
        %v687 = vrsqrt.pop %v655
        %v688 = vrsqrt.pop %v656
        %v689 = vrsqrt.pop %v657
        %v690 = vrsqrt.pop %v658
        %v691 = vrsqrt.pop %v659
        %v692 = vrsqrt.pop %v660
        %v693 = vrsqrt.pop %v661
        %v694 = vrsqrt.pop %v662
        %v695 = vrsqrt.pop %v663
        %v696 = vrsqrt.pop %v664
        %v697 = vrsqrt.pop %v665
        %v698 = vrsqrt.pop %v666
        %v699 = vrsqrt.pop %v667
        %v700 = vrsqrt.pop %v668
        %v701 = vrsqrt.pop %v669
        %v702 = vrsqrt.pop %v670
        %v703 = vrsqrt.pop %v671
        %v704 = vrsqrt.pop %v672
        %v705 = vrsqrt.pop %v673
        %v706 = vrsqrt.pop %v674
        %v707 = vrsqrt.pop %v675
        %v708 = vrsqrt.pop %v676
        %v709 = vrsqrt.pop %v677
        %v710 = vrsqrt.pop %v678
        %v711 = vrsqrt.pop %v679
        %v712 = vrsqrt.pop %v680
        %v713 = vrsqrt.pop %v681
        %v714 = vrsqrt.pop %v682
        %v715 = vrsqrt.pop %v683
        %v716 = vrsqrt.pop %v684
        %v717 = vrsqrt.pop %v685
        %v718 = vrsqrt.pop %v686
        %v719 = vmul.f32 %v495, %v687
        %v720 = vmul.f32 %v496, %v688
        %v721 = vmul.f32 %v497, %v689
        %v722 = vmul.f32 %v498, %v690
        %v723 = vmul.f32 %v499, %v691
        %v724 = vmul.f32 %v500, %v692
        %v725 = vmul.f32 %v501, %v693
        %v726 = vmul.f32 %v502, %v694
        %v727 = vmul.f32 %v503, %v695
        %v728 = vmul.f32 %v504, %v696
        %v729 = vmul.f32 %v505, %v697
        %v730 = vmul.f32 %v506, %v698
        %v731 = vmul.f32 %v507, %v699
        %v732 = vmul.f32 %v508, %v700
        %v733 = vmul.f32 %v509, %v701
        %v734 = vmul.f32 %v510, %v702
        %v735 = vmul.f32 %v511, %v703
        %v736 = vmul.f32 %v512, %v704
        %v737 = vmul.f32 %v513, %v705
        %v738 = vmul.f32 %v514, %v706
        %v739 = vmul.f32 %v515, %v707
        %v740 = vmul.f32 %v516, %v708
        %v741 = vmul.f32 %v517, %v709
        %v742 = vmul.f32 %v518, %v710
        %v743 = vmul.f32 %v519, %v711
        %v744 = vmul.f32 %v520, %v712
        %v745 = vmul.f32 %v521, %v713
        %v746 = vmul.f32 %v522, %v714
        %v747 = vmul.f32 %v523, %v715
        %v748 = vmul.f32 %v524, %v716
        %v749 = vmul.f32 %v525, %v717
        %v750 = vmul.f32 %v526, %v718
        %v752 = vlaneseq
        %v753 = vshrl.u32 %v752, 7
        %v754 = vsub.s32 0, %v753
        %v755 = vrot.slane %v396, %v754
        %v757 = vmul.f32 %v719, %v755
        %v758 = vmul.f32 %v720, %v755
        %v759 = vmul.f32 %v721, %v755
        %v760 = vmul.f32 %v722, %v755
        %v761 = vmul.f32 %v723, %v755
        %v762 = vmul.f32 %v724, %v755
        %v763 = vmul.f32 %v725, %v755
        %v764 = vmul.f32 %v726, %v755
        %v765 = vmul.f32 %v727, %v755
        %v766 = vmul.f32 %v728, %v755
        %v767 = vmul.f32 %v729, %v755
        %v768 = vmul.f32 %v730, %v755
        %v769 = vmul.f32 %v731, %v755
        %v770 = vmul.f32 %v732, %v755
        %v771 = vmul.f32 %v733, %v755
        %v772 = vmul.f32 %v734, %v755
        %v773 = vmul.f32 %v735, %v755
        %v774 = vmul.f32 %v736, %v755
        %v775 = vmul.f32 %v737, %v755
        %v776 = vmul.f32 %v738, %v755
        %v777 = vmul.f32 %v739, %v755
        %v778 = vmul.f32 %v740, %v755
        %v779 = vmul.f32 %v741, %v755
        %v780 = vmul.f32 %v742, %v755
        %v781 = vmul.f32 %v743, %v755
        %v782 = vmul.f32 %v744, %v755
        %v783 = vmul.f32 %v745, %v755
        %v784 = vmul.f32 %v746, %v755
        %v785 = vmul.f32 %v747, %v755
        %v786 = vmul.f32 %v748, %v755
        %v787 = vmul.f32 %v749, %v755
        %v788 = vmul.f32 %v750, %v755
        %v790 = vlaneseq
        %v791 = vshrl.u32 %v790, 7
        %v792 = vsub.s32 0, %v791
        %v793 = vrot.slane %v397, %v792
        %v795 = vadd.f32 %v757, %v793
        %v796 = vadd.f32 %v758, %v793
        %v797 = vadd.f32 %v759, %v793
        %v798 = vadd.f32 %v760, %v793
        %v799 = vadd.f32 %v761, %v793
        %v800 = vadd.f32 %v762, %v793
        %v801 = vadd.f32 %v763, %v793
        %v802 = vadd.f32 %v764, %v793
        %v803 = vadd.f32 %v765, %v793
        %v804 = vadd.f32 %v766, %v793
        %v805 = vadd.f32 %v767, %v793
        %v806 = vadd.f32 %v768, %v793
        %v807 = vadd.f32 %v769, %v793
        %v808 = vadd.f32 %v770, %v793
        %v809 = vadd.f32 %v771, %v793
        %v810 = vadd.f32 %v772, %v793
        %v811 = vadd.f32 %v773, %v793
        %v812 = vadd.f32 %v774, %v793
        %v813 = vadd.f32 %v775, %v793
        %v814 = vadd.f32 %v776, %v793
        %v815 = vadd.f32 %v777, %v793
        %v816 = vadd.f32 %v778, %v793
        %v817 = vadd.f32 %v779, %v793
        %v818 = vadd.f32 %v780, %v793
        %v819 = vadd.f32 %v781, %v793
        %v820 = vadd.f32 %v782, %v793
        %v821 = vadd.f32 %v783, %v793
        %v822 = vadd.f32 %v784, %v793
        %v823 = vadd.f32 %v785, %v793
        %v824 = vadd.f32 %v786, %v793
        %v825 = vadd.f32 %v787, %v793
        %v826 = vadd.f32 %v788, %v793
        %v827 = vpack.c.bf16 %v796, %v795
        %v828 = vpack.c.bf16 %v798, %v797
        %v829 = vpack.c.bf16 %v800, %v799
        %v830 = vpack.c.bf16 %v802, %v801
        %v831 = vpack.c.bf16 %v804, %v803
        %v832 = vpack.c.bf16 %v806, %v805
        %v833 = vpack.c.bf16 %v808, %v807
        %v834 = vpack.c.bf16 %v810, %v809
        %v835 = vpack.c.bf16 %v812, %v811
        %v836 = vpack.c.bf16 %v814, %v813
        %v837 = vpack.c.bf16 %v816, %v815
        %v838 = vpack.c.bf16 %v818, %v817
        %v839 = vpack.c.bf16 %v820, %v819
        %v840 = vpack.c.bf16 %v822, %v821
        %v841 = vpack.c.bf16 %v824, %v823
        %v842 = vpack.c.bf16 %v826, %v825
        %v859 = vunpack.c.l.b16 %v827
        %v860 = vunpack.c.h.b16 %v827
        %v861 = vunpack.c.l.b16 %v828
        %v862 = vunpack.c.h.b16 %v828
        %v863 = vunpack.c.l.b16 %v829
        %v864 = vunpack.c.h.b16 %v829
        %v865 = vunpack.c.l.b16 %v830
        %v866 = vunpack.c.h.b16 %v830
        %v867 = vunpack.c.l.b16 %v831
        %v868 = vunpack.c.h.b16 %v831
        %v869 = vunpack.c.l.b16 %v832
        %v870 = vunpack.c.h.b16 %v832
        %v871 = vunpack.c.l.b16 %v833
        %v872 = vunpack.c.h.b16 %v833
        %v873 = vunpack.c.l.b16 %v834
        %v874 = vunpack.c.h.b16 %v834
        %v875 = vunpack.c.l.b16 %v835
        %v876 = vunpack.c.h.b16 %v835
        %v877 = vunpack.c.l.b16 %v836
        %v878 = vunpack.c.h.b16 %v836
        %v879 = vunpack.c.l.b16 %v837
        %v880 = vunpack.c.h.b16 %v837
        %v881 = vunpack.c.l.b16 %v838
        %v882 = vunpack.c.h.b16 %v838
        %v883 = vunpack.c.l.b16 %v839
        %v884 = vunpack.c.h.b16 %v839
        %v885 = vunpack.c.l.b16 %v840
        %v886 = vunpack.c.h.b16 %v840
        %v887 = vunpack.c.l.b16 %v841
        %v888 = vunpack.c.h.b16 %v841
        %v889 = vunpack.c.l.b16 %v842
        %v890 = vunpack.c.h.b16 %v842
        %v891 = vpack.c.b16 %v859, %v859
        %v892 = vpack.c.b16 %v860, %v860
        %v893 = vpack.c.b16 %v861, %v861
        %v894 = vpack.c.b16 %v862, %v862
        %v895 = vpack.c.b16 %v863, %v863
        %v896 = vpack.c.b16 %v864, %v864
        %v897 = vpack.c.b16 %v865, %v865
        %v898 = vpack.c.b16 %v866, %v866
        %v899 = vpack.c.b16 %v867, %v867
        %v900 = vpack.c.b16 %v868, %v868
        %v901 = vpack.c.b16 %v869, %v869
        %v902 = vpack.c.b16 %v870, %v870
        %v903 = vpack.c.b16 %v871, %v871
        %v904 = vpack.c.b16 %v872, %v872
        %v905 = vpack.c.b16 %v873, %v873
        %v906 = vpack.c.b16 %v874, %v874
        %v907 = vpack.c.b16 %v875, %v875
        %v908 = vpack.c.b16 %v876, %v876
        %v909 = vpack.c.b16 %v877, %v877
        %v910 = vpack.c.b16 %v878, %v878
        %v911 = vpack.c.b16 %v879, %v879
        %v912 = vpack.c.b16 %v880, %v880
        %v913 = vpack.c.b16 %v881, %v881
        %v914 = vpack.c.b16 %v882, %v882
        %v915 = vpack.c.b16 %v883, %v883
        %v916 = vpack.c.b16 %v884, %v884
        %v917 = vpack.c.b16 %v885, %v885
        %v918 = vpack.c.b16 %v886, %v886
        %v919 = vpack.c.b16 %v887, %v887
        %v920 = vpack.c.b16 %v888, %v888
        %v921 = vpack.c.b16 %v889, %v889
        %v922 = vpack.c.b16 %v890, %v890
        %955 = vst [vmem:[%s339] sm:$0xf] %v891
        %956 = vst [vmem:[%s339 + $0x4] sm:$0xf] %v892
        %957 = vst [vmem:[%s339 + $0x8] sm:$0xf] %v893
        %958 = vst [vmem:[%s339 + $0xc] sm:$0xf] %v894
        %959 = vst [vmem:[%s339 + $0x10] sm:$0xf] %v895
        %960 = vst [vmem:[%s339 + $0x14] sm:$0xf] %v896
        %961 = vst [vmem:[%s339 + $0x18] sm:$0xf] %v897
        %962 = vst [vmem:[%s339 + $0x1c] sm:$0xf] %v898
        %963 = vst [vmem:[%s339 + $0x20] sm:$0xf] %v899
        %964 = vst [vmem:[%s339 + $0x24] sm:$0xf] %v900
        %965 = vst [vmem:[%s339 + $0x28] sm:$0xf] %v901
        %966 = vst [vmem:[%s339 + $0x2c] sm:$0xf] %v902
        %967 = vst [vmem:[%s339 + $0x30] sm:$0xf] %v903
        %968 = vst [vmem:[%s339 + $0x34] sm:$0xf] %v904
        %969 = vst [vmem:[%s339 + $0x38] sm:$0xf] %v905
        %970 = vst [vmem:[%s339 + $0x3c] sm:$0xf] %v906
        %971 = vst [vmem:[%s339 + $0x40] sm:$0xf] %v907
        %972 = vst [vmem:[%s339 + $0x44] sm:$0xf] %v908
        %973 = vst [vmem:[%s339 + $0x48] sm:$0xf] %v909
        %974 = vst [vmem:[%s339 + $0x4c] sm:$0xf] %v910
        %975 = vst [vmem:[%s339 + $0x50] sm:$0xf] %v911
        %976 = vst [vmem:[%s339 + $0x54] sm:$0xf] %v912
        %977 = vst [vmem:[%s339 + $0x58] sm:$0xf] %v913
        %978 = vst [vmem:[%s339 + $0x5c] sm:$0xf] %v914
        %979 = vst [vmem:[%s339 + $0x60] sm:$0xf] %v915
        %980 = vst [vmem:[%s339 + $0x64] sm:$0xf] %v916
        %981 = vst [vmem:[%s339 + $0x68] sm:$0xf] %v917
        %982 = vst [vmem:[%s339 + $0x6c] sm:$0xf] %v918
        %983 = vst [vmem:[%s339 + $0x70] sm:$0xf] %v919
        %984 = vst [vmem:[%s339 + $0x74] sm:$0xf] %v920
        %985 = vst [vmem:[%s339 + $0x78] sm:$0xf] %v921
        %986 = vst [vmem:[%s339 + $0x7c] sm:$0xf] %v922
        %v987 = vld [vmem:[#allocation5] sm:$0xff]
        %v988 = vld [vmem:[#allocation5 + $0x8] sm:$0xf]
        %v989 = vld [vmem:[#allocation5 + $0xc] sm:$0xff]
        %v990 = vld [vmem:[#allocation5 + $0x14] sm:$0xf]
        %v991 = vld [vmem:[#allocation5 + $0x18] sm:$0xff]
        %v992 = vld [vmem:[#allocation5 + $0x20] sm:$0xf]
        %v993 = vld [vmem:[#allocation5 + $0x24] sm:$0xff]
        %v994 = vld [vmem:[#allocation5 + $0x2c] sm:$0xf]
        %v995 = vld [vmem:[#allocation5 + $0x30] sm:$0xff]
        %v996 = vld [vmem:[#allocation5 + $0x38] sm:$0xf]
        %v997 = vld [vmem:[#allocation5 + $0x3c] sm:$0xff]
        %v998 = vld [vmem:[#allocation5 + $0x44] sm:$0xf]
        %v999 = vld [vmem:[#allocation5 + $0x48] sm:$0xff]
        %v1000 = vld [vmem:[#allocation5 + $0x50] sm:$0xf]
        %v1001 = vld [vmem:[#allocation5 + $0x54] sm:$0xff]
        %v1002 = vld [vmem:[#allocation5 + $0x5c] sm:$0xf]
        %v1003 = vld [vmem:[#allocation5 + $0x60] sm:$0xff]
        %v1004 = vld [vmem:[#allocation5 + $0x68] sm:$0xf]
        %v1005 = vld [vmem:[#allocation5 + $0x6c] sm:$0xff]
        %v1006 = vld [vmem:[#allocation5 + $0x74] sm:$0xf]
        %v1007 = vld [vmem:[#allocation5 + $0x78] sm:$0xff]
        %v1008 = vld [vmem:[#allocation5 + $0x80] sm:$0xf]
        %v1009 = vld [vmem:[#allocation5 + $0x84] sm:$0xff]
        %v1010 = vld [vmem:[#allocation5 + $0x8c] sm:$0xf]
        %v1011 = vld [vmem:[#allocation5 + $0x90] sm:$0xff]
        %v1012 = vld [vmem:[#allocation5 + $0x98] sm:$0xf]
        %v1013 = vld [vmem:[#allocation5 + $0x9c] sm:$0xff]
        %v1014 = vld [vmem:[#allocation5 + $0xa4] sm:$0xf]
        %v1015 = vld [vmem:[#allocation5 + $0xa8] sm:$0xff]
        %v1016 = vld [vmem:[#allocation5 + $0xb0] sm:$0xf]
        %v1017 = vld [vmem:[#allocation5 + $0xb4] sm:$0xff]
        %v1018 = vld [vmem:[#allocation5 + $0xbc] sm:$0xf]
        %v1019 = vld [vmem:[%s4] sm:$0x7]
        %v1021 = vlaneseq
        %v1022 = vshrl.u32 %v1021, 7
        %v1023 = vsub.s32 0, %v1022
        %v1024 = vrot.slane %v1019, %v1023
        %v1025 = vlaneseq
        %v1026 = vshrl.u32 %v1025, 7
        %v1027 = vsub.s32 1, %v1026
        %v1028 = vrot.slane %v1019, %v1027
        %v1029 = vlaneseq
        %v1030 = vshrl.u32 %v1029, 7
        %v1031 = vsub.s32 2, %v1030
        %v1032 = vrot.slane %v1019, %v1031
        %v1068 = vunpack.c.l.b16 %v987
        %v1069 = vunpack.c.h.b16 %v987
        %v1070 = vunpack.c.l.b16 %v988
        %v1071 = vunpack.c.l.b16 %v989
        %v1072 = vunpack.c.h.b16 %v989
        %v1073 = vunpack.c.l.b16 %v990
        %v1074 = vunpack.c.l.b16 %v991
        %v1075 = vunpack.c.h.b16 %v991
        %v1076 = vunpack.c.l.b16 %v992
        %v1077 = vunpack.c.l.b16 %v993
        %v1078 = vunpack.c.h.b16 %v993
        %v1079 = vunpack.c.l.b16 %v994
        %v1080 = vunpack.c.l.b16 %v995
        %v1081 = vunpack.c.h.b16 %v995
        %v1082 = vunpack.c.l.b16 %v996
        %v1083 = vunpack.c.l.b16 %v997
        %v1084 = vunpack.c.h.b16 %v997
        %v1085 = vunpack.c.l.b16 %v998
        %v1086 = vunpack.c.l.b16 %v999
        %v1087 = vunpack.c.h.b16 %v999
        %v1088 = vunpack.c.l.b16 %v1000
        %v1089 = vunpack.c.l.b16 %v1001
        %v1090 = vunpack.c.h.b16 %v1001
        %v1091 = vunpack.c.l.b16 %v1002
        %v1092 = vunpack.c.l.b16 %v1003
        %v1093 = vunpack.c.h.b16 %v1003
        %v1094 = vunpack.c.l.b16 %v1004
        %v1095 = vunpack.c.l.b16 %v1005
        %v1096 = vunpack.c.h.b16 %v1005
        %v1097 = vunpack.c.l.b16 %v1006
        %v1098 = vunpack.c.l.b16 %v1007
        %v1099 = vunpack.c.h.b16 %v1007
        %v1100 = vunpack.c.l.b16 %v1008
        %v1101 = vunpack.c.l.b16 %v1009
        %v1102 = vunpack.c.h.b16 %v1009
        %v1103 = vunpack.c.l.b16 %v1010
        %v1104 = vunpack.c.l.b16 %v1011
        %v1105 = vunpack.c.h.b16 %v1011
        %v1106 = vunpack.c.l.b16 %v1012
        %v1107 = vunpack.c.l.b16 %v1013
        %v1108 = vunpack.c.h.b16 %v1013
        %v1109 = vunpack.c.l.b16 %v1014
        %v1110 = vunpack.c.l.b16 %v1015
        %v1111 = vunpack.c.h.b16 %v1015
        %v1112 = vunpack.c.l.b16 %v1016
        %v1113 = vunpack.c.l.b16 %v1017
        %v1114 = vunpack.c.h.b16 %v1017
        %v1115 = vunpack.c.l.b16 %v1018
        %v1116 = vpack.c.b16 %v1071, %v1068
        %v1117 = vpack.c.b16 %v1072, %v1069
        %v1118 = vpack.c.b16 %v1073, %v1070
        %v1119 = vpack.c.b16 %v1077, %v1074
        %v1120 = vpack.c.b16 %v1078, %v1075
        %v1121 = vpack.c.b16 %v1079, %v1076
        %v1122 = vpack.c.b16 %v1083, %v1080
        %v1123 = vpack.c.b16 %v1084, %v1081
        %v1124 = vpack.c.b16 %v1085, %v1082
        %v1125 = vpack.c.b16 %v1089, %v1086
        %v1126 = vpack.c.b16 %v1090, %v1087
        %v1127 = vpack.c.b16 %v1091, %v1088
        %v1128 = vpack.c.b16 %v1095, %v1092
        %v1129 = vpack.c.b16 %v1096, %v1093
        %v1130 = vpack.c.b16 %v1097, %v1094
        %v1131 = vpack.c.b16 %v1101, %v1098
        %v1132 = vpack.c.b16 %v1102, %v1099
        %v1133 = vpack.c.b16 %v1103, %v1100
        %v1134 = vpack.c.b16 %v1107, %v1104
        %v1135 = vpack.c.b16 %v1108, %v1105
        %v1136 = vpack.c.b16 %v1109, %v1106
        %v1137 = vpack.c.b16 %v1113, %v1110
        %v1138 = vpack.c.b16 %v1114, %v1111
        %v1139 = vpack.c.b16 %v1115, %v1112
        %1164 = vmatprep.subr.bf16.mxu0 %v1138
        %1165 = vmatpush1.bf16.msra.mxu0 %v1137
        %1166 = vmatprep.subr.bf16.mxu0 %v1135
        %1167 = vmatpush1.bf16.msra.mxu0 %v1134
        %1168 = vmatprep.subr.bf16.mxu0 %v1132
        %1169 = vmatpush1.bf16.msra.mxu0 %v1131
        %1170 = vmatprep.subr.bf16.mxu0 %v1129
        %1171 = vmatpush1.bf16.msra.mxu0 %v1128
        %1172 = vmatprep.subr.bf16.mxu0 %v1126
        %1173 = vmatpush1.bf16.msra.mxu0 %v1125
        %1174 = vmatprep.subr.bf16.mxu0 %v1123
        %1175 = vmatpush1.bf16.msra.mxu0 %v1122
        %1176 = vmatprep.subr.bf16.mxu0 %v1120
        %1177 = vmatpush1.bf16.msra.mxu0 %v1119
        %1178 = vmatprep.subr.bf16.mxu0 %v1117
        %1179 = vmatpush1.bf16.msra.mxu0 %v1116
        %1180 = vmatprep.subr.bf16.mxu0 0
        %1181 = vmatpush2.bf16.msra.mxu0 0
        %1182 = vmatprep.subr.bf16.mxu0 0
        %1183 = vmatpush2.bf16.msra.mxu0 0
        %1184 = vmatprep.subr.bf16.mxu0 0
        %1185 = vmatpush2.bf16.msra.mxu0 0
        %1186 = vmatprep.subr.bf16.mxu0 0
        %1187 = vmatpush2.bf16.msra.mxu0 0
        %1188 = vmatprep.subr.bf16.mxu0 0
        %1189 = vmatpush2.bf16.msra.mxu0 0
        %1190 = vmatprep.subr.bf16.mxu0 0
        %1191 = vmatpush2.bf16.msra.mxu0 0
        %1192 = vmatprep.subr.bf16.mxu0 0
        %1193 = vmatpush2.bf16.msra.mxu0 0
        %1194 = vmatprep.subr.bf16.mxu0 0
        %1195 = vmatpush2.bf16.msra.mxu0 0
        %1196 = vmatprep.mubr.bf16.mxu0 0
        %1197 = vmatmul.mubr.bf16.gmra.mxu0 %v827
        %v1198 = vpop.f32.mrf.mxu0
        %v1199 = vadd.f32 %v1024, %v1198
        %v1200 = vpop.f32.mrf.mxu0
        %v1201 = vadd.f32 %v1028, %v1200
        %v1202 = vpop.f32.mrf.mxu0
        %v1203 = vadd.f32 %v1024, %v1202
        %v1204 = vpop.f32.mrf.mxu0
        %v1205 = vadd.f32 %v1028, %v1204
        %1206 = vmatprep.mubr.bf16.mxu0 0
        %1207 = vmatmul.mubr.bf16.gmra.mxu0 %v828
        %v1208 = vpop.f32.mrf.mxu0
        %v1209 = vadd.f32 %v1024, %v1208
        %v1210 = vpop.f32.mrf.mxu0
        %v1211 = vadd.f32 %v1028, %v1210
        %v1212 = vpop.f32.mrf.mxu0
        %v1213 = vadd.f32 %v1024, %v1212
        %v1214 = vpop.f32.mrf.mxu0
        %v1215 = vadd.f32 %v1028, %v1214
        %1216 = vmatprep.mubr.bf16.mxu0 0
        %1217 = vmatmul.mubr.bf16.gmra.mxu0 %v829
        %v1218 = vpop.f32.mrf.mxu0
        %v1219 = vadd.f32 %v1024, %v1218
        %v1220 = vpop.f32.mrf.mxu0
        %v1221 = vadd.f32 %v1028, %v1220
        %v1222 = vpop.f32.mrf.mxu0
        %v1223 = vadd.f32 %v1024, %v1222
        %v1224 = vpop.f32.mrf.mxu0
        %v1225 = vadd.f32 %v1028, %v1224
        %1226 = vmatprep.mubr.bf16.mxu0 0
        %1227 = vmatmul.mubr.bf16.gmra.mxu0 %v830
        %v1228 = vpop.f32.mrf.mxu0
        %v1229 = vadd.f32 %v1024, %v1228
        %v1230 = vpop.f32.mrf.mxu0
        %v1231 = vadd.f32 %v1028, %v1230
        %v1232 = vpop.f32.mrf.mxu0
        %v1233 = vadd.f32 %v1024, %v1232
        %v1234 = vpop.f32.mrf.mxu0
        %v1235 = vadd.f32 %v1028, %v1234
        %1236 = vmatprep.mubr.bf16.mxu0 0
        %1237 = vmatmul.mubr.bf16.gmra.mxu0 %v831
        %v1238 = vpop.f32.mrf.mxu0
        %v1239 = vadd.f32 %v1024, %v1238
        %v1240 = vpop.f32.mrf.mxu0
        %v1241 = vadd.f32 %v1028, %v1240
        %v1242 = vpop.f32.mrf.mxu0
        %v1243 = vadd.f32 %v1024, %v1242
        %v1244 = vpop.f32.mrf.mxu0
        %v1245 = vadd.f32 %v1028, %v1244
        %1246 = vmatprep.mubr.bf16.mxu0 0
        %1247 = vmatmul.mubr.bf16.gmra.mxu0 %v832
        %v1248 = vpop.f32.mrf.mxu0
        %v1249 = vadd.f32 %v1024, %v1248
        %v1250 = vpop.f32.mrf.mxu0
        %v1251 = vadd.f32 %v1028, %v1250
        %v1252 = vpop.f32.mrf.mxu0
        %v1253 = vadd.f32 %v1024, %v1252
        %v1254 = vpop.f32.mrf.mxu0
        %v1255 = vadd.f32 %v1028, %v1254
        %1256 = vmatprep.mubr.bf16.mxu0 0
        %1257 = vmatmul.mubr.bf16.gmra.mxu0 %v833
        %v1258 = vpop.f32.mrf.mxu0
        %v1259 = vadd.f32 %v1024, %v1258
        %v1260 = vpop.f32.mrf.mxu0
        %v1261 = vadd.f32 %v1028, %v1260
        %v1262 = vpop.f32.mrf.mxu0
        %v1263 = vadd.f32 %v1024, %v1262
        %v1264 = vpop.f32.mrf.mxu0
        %v1265 = vadd.f32 %v1028, %v1264
        %1266 = vmatprep.mubr.bf16.mxu0 0
        %1267 = vmatmul.mubr.bf16.gmra.mxu0 %v834
        %v1268 = vpop.f32.mrf.mxu0
        %v1269 = vadd.f32 %v1024, %v1268
        %v1270 = vpop.f32.mrf.mxu0
        %v1271 = vadd.f32 %v1028, %v1270
        %v1272 = vpop.f32.mrf.mxu0
        %v1273 = vadd.f32 %v1024, %v1272
        %v1274 = vpop.f32.mrf.mxu0
        %v1275 = vadd.f32 %v1028, %v1274
        %1276 = vmatprep.mubr.bf16.mxu0 0
        %1277 = vmatmul.mubr.bf16.gmra.mxu0 %v835
        %v1278 = vpop.f32.mrf.mxu0
        %v1279 = vadd.f32 %v1024, %v1278
        %v1280 = vpop.f32.mrf.mxu0
        %v1281 = vadd.f32 %v1028, %v1280
        %v1282 = vpop.f32.mrf.mxu0
        %v1283 = vadd.f32 %v1024, %v1282
        %v1284 = vpop.f32.mrf.mxu0
        %v1285 = vadd.f32 %v1028, %v1284
        %1286 = vmatprep.mubr.bf16.mxu0 0
        %1287 = vmatmul.mubr.bf16.gmra.mxu0 %v836
        %v1288 = vpop.f32.mrf.mxu0
        %v1289 = vadd.f32 %v1024, %v1288
        %v1290 = vpop.f32.mrf.mxu0
        %v1291 = vadd.f32 %v1028, %v1290
        %v1292 = vpop.f32.mrf.mxu0
        %v1293 = vadd.f32 %v1024, %v1292
        %v1294 = vpop.f32.mrf.mxu0
        %v1295 = vadd.f32 %v1028, %v1294
        %1296 = vmatprep.mubr.bf16.mxu0 0
        %1297 = vmatmul.mubr.bf16.gmra.mxu0 %v837
        %v1298 = vpop.f32.mrf.mxu0
        %v1299 = vadd.f32 %v1024, %v1298
        %v1300 = vpop.f32.mrf.mxu0
        %v1301 = vadd.f32 %v1028, %v1300
        %v1302 = vpop.f32.mrf.mxu0
        %v1303 = vadd.f32 %v1024, %v1302
        %v1304 = vpop.f32.mrf.mxu0
        %v1305 = vadd.f32 %v1028, %v1304
        %1306 = vmatprep.mubr.bf16.mxu0 0
        %1307 = vmatmul.mubr.bf16.gmra.mxu0 %v838
        %v1308 = vpop.f32.mrf.mxu0
        %v1309 = vadd.f32 %v1024, %v1308
        %v1310 = vpop.f32.mrf.mxu0
        %v1311 = vadd.f32 %v1028, %v1310
        %v1312 = vpop.f32.mrf.mxu0
        %v1313 = vadd.f32 %v1024, %v1312
        %v1314 = vpop.f32.mrf.mxu0
        %v1315 = vadd.f32 %v1028, %v1314
        %1316 = vmatprep.mubr.bf16.mxu0 0
        %1317 = vmatmul.mubr.bf16.gmra.mxu0 %v839
        %v1318 = vpop.f32.mrf.mxu0
        %v1319 = vadd.f32 %v1024, %v1318
        %v1320 = vpop.f32.mrf.mxu0
        %v1321 = vadd.f32 %v1028, %v1320
        %v1322 = vpop.f32.mrf.mxu0
        %v1323 = vadd.f32 %v1024, %v1322
        %v1324 = vpop.f32.mrf.mxu0
        %v1325 = vadd.f32 %v1028, %v1324
        %1326 = vmatprep.mubr.bf16.mxu0 0
        %1327 = vmatmul.mubr.bf16.gmra.mxu0 %v840
        %v1328 = vpop.f32.mrf.mxu0
        %v1329 = vadd.f32 %v1024, %v1328
        %v1330 = vpop.f32.mrf.mxu0
        %v1331 = vadd.f32 %v1028, %v1330
        %v1332 = vpop.f32.mrf.mxu0
        %v1333 = vadd.f32 %v1024, %v1332
        %v1334 = vpop.f32.mrf.mxu0
        %v1335 = vadd.f32 %v1028, %v1334
        %1336 = vmatprep.mubr.bf16.mxu0 0
        %1337 = vmatmul.mubr.bf16.gmra.mxu0 %v841
        %v1338 = vpop.f32.mrf.mxu0
        %v1339 = vadd.f32 %v1024, %v1338
        %v1340 = vpop.f32.mrf.mxu0
        %v1341 = vadd.f32 %v1028, %v1340
        %v1342 = vpop.f32.mrf.mxu0
        %v1343 = vadd.f32 %v1024, %v1342
        %v1344 = vpop.f32.mrf.mxu0
        %v1345 = vadd.f32 %v1028, %v1344
        %1346 = vmatprep.mubr.bf16.mxu0 0
        %1347 = vmatmul.mubr.bf16.gmra.mxu0 %v842
        %v1348 = vpop.f32.mrf.mxu0
        %v1349 = vadd.f32 %v1024, %v1348
        %v1350 = vpop.f32.mrf.mxu0
        %v1351 = vadd.f32 %v1028, %v1350
        %v1352 = vpop.f32.mrf.mxu0
        %v1353 = vadd.f32 %v1024, %v1352
        %v1354 = vpop.f32.mrf.mxu0
        %v1355 = vadd.f32 %v1028, %v1354
        %1356 = vdwg.mxu0
        %1357 = vmatprep.subr.bf16.mxu0 0
        %1358 = vmatpush1.bf16.msra.mxu0 %v1139
        %1359 = vmatprep.subr.bf16.mxu0 0
        %1360 = vmatpush1.bf16.msra.mxu0 %v1136
        %1361 = vmatprep.subr.bf16.mxu0 0
        %1362 = vmatpush1.bf16.msra.mxu0 %v1133
        %1363 = vmatprep.subr.bf16.mxu0 0
        %1364 = vmatpush1.bf16.msra.mxu0 %v1130
        %1365 = vmatprep.subr.bf16.mxu0 0
        %1366 = vmatpush1.bf16.msra.mxu0 %v1127
        %1367 = vmatprep.subr.bf16.mxu0 0
        %1368 = vmatpush1.bf16.msra.mxu0 %v1124
        %1369 = vmatprep.subr.bf16.mxu0 0
        %1370 = vmatpush1.bf16.msra.mxu0 %v1121
        %1371 = vmatprep.subr.bf16.mxu0 0
        %1372 = vmatpush1.bf16.msra.mxu0 %v1118
        %1373 = vmatprep.subr.bf16.mxu0 0
        %1374 = vmatpush2.bf16.msra.mxu0 0
        %1375 = vmatprep.subr.bf16.mxu0 0
        %1376 = vmatpush2.bf16.msra.mxu0 0
        %1377 = vmatprep.subr.bf16.mxu0 0
        %1378 = vmatpush2.bf16.msra.mxu0 0
        %1379 = vmatprep.subr.bf16.mxu0 0
        %1380 = vmatpush2.bf16.msra.mxu0 0
        %1381 = vmatprep.subr.bf16.mxu0 0
        %1382 = vmatpush2.bf16.msra.mxu0 0
        %1383 = vmatprep.subr.bf16.mxu0 0
        %1384 = vmatpush2.bf16.msra.mxu0 0
        %1385 = vmatprep.subr.bf16.mxu0 0
        %1386 = vmatpush2.bf16.msra.mxu0 0
        %1387 = vmatprep.subr.bf16.mxu0 0
        %1388 = vmatpush2.bf16.msra.mxu0 0
        %1389 = vmatprep.mubr.bf16.mxu0 0
        %1390 = vmatmul.mubr.bf16.gmra.mxu0 %v827
        %v1391 = vpop.f32.mrf.mxu0
        %v1392 = vadd.f32 %v1032, %v1391
        %v1393 = vpop.f32.mrf.mxu0
        %v1394 = vpop.f32.mrf.mxu0
        %v1395 = vadd.f32 %v1032, %v1394
        %v1396 = vpop.f32.mrf.mxu0
        %1397 = vmatprep.mubr.bf16.mxu0 0
        %1398 = vmatmul.mubr.bf16.gmra.mxu0 %v828
        %v1399 = vpop.f32.mrf.mxu0
        %v1400 = vadd.f32 %v1032, %v1399
        %v1401 = vpop.f32.mrf.mxu0
        %v1402 = vpop.f32.mrf.mxu0
        %v1403 = vadd.f32 %v1032, %v1402
        %v1404 = vpop.f32.mrf.mxu0
        %1405 = vmatprep.mubr.bf16.mxu0 0
        %1406 = vmatmul.mubr.bf16.gmra.mxu0 %v829
        %v1407 = vpop.f32.mrf.mxu0
        %v1408 = vadd.f32 %v1032, %v1407
        %v1409 = vpop.f32.mrf.mxu0
        %v1410 = vpop.f32.mrf.mxu0
        %v1411 = vadd.f32 %v1032, %v1410
        %v1412 = vpop.f32.mrf.mxu0
        %1413 = vmatprep.mubr.bf16.mxu0 0
        %1414 = vmatmul.mubr.bf16.gmra.mxu0 %v830
        %v1415 = vpop.f32.mrf.mxu0
        %v1416 = vadd.f32 %v1032, %v1415
        %v1417 = vpop.f32.mrf.mxu0
        %v1418 = vpop.f32.mrf.mxu0
        %v1419 = vadd.f32 %v1032, %v1418
        %v1420 = vpop.f32.mrf.mxu0
        %1421 = vmatprep.mubr.bf16.mxu0 0
        %1422 = vmatmul.mubr.bf16.gmra.mxu0 %v831
        %v1423 = vpop.f32.mrf.mxu0
        %v1424 = vadd.f32 %v1032, %v1423
        %v1425 = vpop.f32.mrf.mxu0
        %v1426 = vpop.f32.mrf.mxu0
        %v1427 = vadd.f32 %v1032, %v1426
        %v1428 = vpop.f32.mrf.mxu0
        %1429 = vmatprep.mubr.bf16.mxu0 0
        %1430 = vmatmul.mubr.bf16.gmra.mxu0 %v832
        %v1431 = vpop.f32.mrf.mxu0
        %v1432 = vadd.f32 %v1032, %v1431
        %v1433 = vpop.f32.mrf.mxu0
        %v1434 = vpop.f32.mrf.mxu0
        %v1435 = vadd.f32 %v1032, %v1434
        %v1436 = vpop.f32.mrf.mxu0
        %1437 = vmatprep.mubr.bf16.mxu0 0
        %1438 = vmatmul.mubr.bf16.gmra.mxu0 %v833
        %v1439 = vpop.f32.mrf.mxu0
        %v1440 = vadd.f32 %v1032, %v1439
        %v1441 = vpop.f32.mrf.mxu0
        %v1442 = vpop.f32.mrf.mxu0
        %v1443 = vadd.f32 %v1032, %v1442
        %v1444 = vpop.f32.mrf.mxu0
        %1445 = vmatprep.mubr.bf16.mxu0 0
        %1446 = vmatmul.mubr.bf16.gmra.mxu0 %v834
        %v1447 = vpop.f32.mrf.mxu0
        %v1448 = vadd.f32 %v1032, %v1447
        %v1449 = vpop.f32.mrf.mxu0
        %v1450 = vpop.f32.mrf.mxu0
        %v1451 = vadd.f32 %v1032, %v1450
        %v1452 = vpop.f32.mrf.mxu0
        %1453 = vmatprep.mubr.bf16.mxu0 0
        %1454 = vmatmul.mubr.bf16.gmra.mxu0 %v835
        %v1455 = vpop.f32.mrf.mxu0
        %v1456 = vadd.f32 %v1032, %v1455
        %v1457 = vpop.f32.mrf.mxu0
        %v1458 = vpop.f32.mrf.mxu0
        %v1459 = vadd.f32 %v1032, %v1458
        %v1460 = vpop.f32.mrf.mxu0
        %1461 = vmatprep.mubr.bf16.mxu0 0
        %1462 = vmatmul.mubr.bf16.gmra.mxu0 %v836
        %v1463 = vpop.f32.mrf.mxu0
        %v1464 = vadd.f32 %v1032, %v1463
        %v1465 = vpop.f32.mrf.mxu0
        %v1466 = vpop.f32.mrf.mxu0
        %v1467 = vadd.f32 %v1032, %v1466
        %v1468 = vpop.f32.mrf.mxu0
        %1469 = vmatprep.mubr.bf16.mxu0 0
        %1470 = vmatmul.mubr.bf16.gmra.mxu0 %v837
        %v1471 = vpop.f32.mrf.mxu0
        %v1472 = vadd.f32 %v1032, %v1471
        %v1473 = vpop.f32.mrf.mxu0
        %v1474 = vpop.f32.mrf.mxu0
        %v1475 = vadd.f32 %v1032, %v1474
        %v1476 = vpop.f32.mrf.mxu0
        %1477 = vmatprep.mubr.bf16.mxu0 0
        %1478 = vmatmul.mubr.bf16.gmra.mxu0 %v838
        %v1479 = vpop.f32.mrf.mxu0
        %v1480 = vadd.f32 %v1032, %v1479
        %v1481 = vpop.f32.mrf.mxu0
        %v1482 = vpop.f32.mrf.mxu0
        %v1483 = vadd.f32 %v1032, %v1482
        %v1484 = vpop.f32.mrf.mxu0
        %1485 = vmatprep.mubr.bf16.mxu0 0
        %1486 = vmatmul.mubr.bf16.gmra.mxu0 %v839
        %v1487 = vpop.f32.mrf.mxu0
        %v1488 = vadd.f32 %v1032, %v1487
        %v1489 = vpop.f32.mrf.mxu0
        %v1490 = vpop.f32.mrf.mxu0
        %v1491 = vadd.f32 %v1032, %v1490
        %v1492 = vpop.f32.mrf.mxu0
        %1493 = vmatprep.mubr.bf16.mxu0 0
        %1494 = vmatmul.mubr.bf16.gmra.mxu0 %v840
        %v1495 = vpop.f32.mrf.mxu0
        %v1496 = vadd.f32 %v1032, %v1495
        %v1497 = vpop.f32.mrf.mxu0
        %v1498 = vpop.f32.mrf.mxu0
        %v1499 = vadd.f32 %v1032, %v1498
        %v1500 = vpop.f32.mrf.mxu0
        %1501 = vmatprep.mubr.bf16.mxu0 0
        %1502 = vmatmul.mubr.bf16.gmra.mxu0 %v841
        %v1503 = vpop.f32.mrf.mxu0
        %v1504 = vadd.f32 %v1032, %v1503
        %v1505 = vpop.f32.mrf.mxu0
        %v1506 = vpop.f32.mrf.mxu0
        %v1507 = vadd.f32 %v1032, %v1506
        %v1508 = vpop.f32.mrf.mxu0
        %1509 = vmatprep.mubr.bf16.mxu0 0
        %1510 = vmatmul.mubr.bf16.gmra.mxu0 %v842
        %v1511 = vpop.f32.mrf.mxu0
        %v1512 = vadd.f32 %v1032, %v1511
        %v1513 = vpop.f32.mrf.mxu0
        %v1514 = vpop.f32.mrf.mxu0
        %v1515 = vadd.f32 %v1032, %v1514
        %v1516 = vpop.f32.mrf.mxu0
        %1517 = vdwg.mxu0
        %v1518 = vmul.f32 %v1199, 0.17677669
        %v1519 = vmul.f32 %v1203, 0.17677669
        %v1520 = vmul.f32 %v1209, 0.17677669
        %v1521 = vmul.f32 %v1213, 0.17677669
        %v1522 = vmul.f32 %v1219, 0.17677669
        %v1523 = vmul.f32 %v1223, 0.17677669
        %v1524 = vmul.f32 %v1229, 0.17677669
        %v1525 = vmul.f32 %v1233, 0.17677669
        %v1526 = vmul.f32 %v1239, 0.17677669
        %v1527 = vmul.f32 %v1243, 0.17677669
        %v1528 = vmul.f32 %v1249, 0.17677669
        %v1529 = vmul.f32 %v1253, 0.17677669
        %v1530 = vmul.f32 %v1259, 0.17677669
        %v1531 = vmul.f32 %v1263, 0.17677669
        %v1532 = vmul.f32 %v1269, 0.17677669
        %v1533 = vmul.f32 %v1273, 0.17677669
        %v1534 = vmul.f32 %v1279, 0.17677669
        %v1535 = vmul.f32 %v1283, 0.17677669
        %v1536 = vmul.f32 %v1289, 0.17677669
        %v1537 = vmul.f32 %v1293, 0.17677669
        %v1538 = vmul.f32 %v1299, 0.17677669
        %v1539 = vmul.f32 %v1303, 0.17677669
        %v1540 = vmul.f32 %v1309, 0.17677669
        %v1541 = vmul.f32 %v1313, 0.17677669
        %v1542 = vmul.f32 %v1319, 0.17677669
        %v1543 = vmul.f32 %v1323, 0.17677669
        %v1544 = vmul.f32 %v1329, 0.17677669
        %v1545 = vmul.f32 %v1333, 0.17677669
        %v1546 = vmul.f32 %v1339, 0.17677669
        %v1547 = vmul.f32 %v1343, 0.17677669
        %v1548 = vmul.f32 %v1349, 0.17677669
        %v1549 = vmul.f32 %v1353, 0.17677669
        %v1550 = vpack.c.bf16 %v1519, %v1518
        %v1551 = vpack.c.bf16 %v1521, %v1520
        %v1552 = vpack.c.bf16 %v1523, %v1522
        %v1553 = vpack.c.bf16 %v1525, %v1524
        %v1554 = vpack.c.bf16 %v1527, %v1526
        %v1555 = vpack.c.bf16 %v1529, %v1528
        %v1556 = vpack.c.bf16 %v1531, %v1530
        %v1557 = vpack.c.bf16 %v1533, %v1532
        %v1558 = vpack.c.bf16 %v1535, %v1534
        %v1559 = vpack.c.bf16 %v1537, %v1536
        %v1560 = vpack.c.bf16 %v1539, %v1538
        %v1561 = vpack.c.bf16 %v1541, %v1540
        %v1562 = vpack.c.bf16 %v1543, %v1542
        %v1563 = vpack.c.bf16 %v1545, %v1544
        %v1564 = vpack.c.bf16 %v1547, %v1546
        %v1565 = vpack.c.bf16 %v1549, %v1548
        %v1582 = vunpack.c.l.b16 %v1550
        %v1583 = vunpack.c.h.b16 %v1550
        %v1584 = vunpack.c.l.b16 %v1551
        %v1585 = vunpack.c.h.b16 %v1551
        %v1586 = vunpack.c.l.b16 %v1552
        %v1587 = vunpack.c.h.b16 %v1552
        %v1588 = vunpack.c.l.b16 %v1553
        %v1589 = vunpack.c.h.b16 %v1553
        %v1590 = vunpack.c.l.b16 %v1554
        %v1591 = vunpack.c.h.b16 %v1554
        %v1592 = vunpack.c.l.b16 %v1555
        %v1593 = vunpack.c.h.b16 %v1555
        %v1594 = vunpack.c.l.b16 %v1556
        %v1595 = vunpack.c.h.b16 %v1556
        %v1596 = vunpack.c.l.b16 %v1557
        %v1597 = vunpack.c.h.b16 %v1557
        %v1598 = vunpack.c.l.b16 %v1558
        %v1599 = vunpack.c.h.b16 %v1558
        %v1600 = vunpack.c.l.b16 %v1559
        %v1601 = vunpack.c.h.b16 %v1559
        %v1602 = vunpack.c.l.b16 %v1560
        %v1603 = vunpack.c.h.b16 %v1560
        %v1604 = vunpack.c.l.b16 %v1561
        %v1605 = vunpack.c.h.b16 %v1561
        %v1606 = vunpack.c.l.b16 %v1562
        %v1607 = vunpack.c.h.b16 %v1562
        %v1608 = vunpack.c.l.b16 %v1563
        %v1609 = vunpack.c.h.b16 %v1563
        %v1610 = vunpack.c.l.b16 %v1564
        %v1611 = vunpack.c.h.b16 %v1564
        %v1612 = vunpack.c.l.b16 %v1565
        %v1613 = vunpack.c.h.b16 %v1565
        %v1614 = vpack.c.b16 %v1582, %v1582
        %v1615 = vpack.c.b16 %v1583, %v1583
        %v1616 = vpack.c.b16 %v1584, %v1584
        %v1617 = vpack.c.b16 %v1585, %v1585
        %v1618 = vpack.c.b16 %v1586, %v1586
        %v1619 = vpack.c.b16 %v1587, %v1587
        %v1620 = vpack.c.b16 %v1588, %v1588
        %v1621 = vpack.c.b16 %v1589, %v1589
        %v1622 = vpack.c.b16 %v1590, %v1590
        %v1623 = vpack.c.b16 %v1591, %v1591
        %v1624 = vpack.c.b16 %v1592, %v1592
        %v1625 = vpack.c.b16 %v1593, %v1593
        %v1626 = vpack.c.b16 %v1594, %v1594
        %v1627 = vpack.c.b16 %v1595, %v1595
        %v1628 = vpack.c.b16 %v1596, %v1596
        %v1629 = vpack.c.b16 %v1597, %v1597
        %v1630 = vpack.c.b16 %v1598, %v1598
        %v1631 = vpack.c.b16 %v1599, %v1599
        %v1632 = vpack.c.b16 %v1600, %v1600
        %v1633 = vpack.c.b16 %v1601, %v1601
        %v1634 = vpack.c.b16 %v1602, %v1602
        %v1635 = vpack.c.b16 %v1603, %v1603
        %v1636 = vpack.c.b16 %v1604, %v1604
        %v1637 = vpack.c.b16 %v1605, %v1605
        %v1638 = vpack.c.b16 %v1606, %v1606
        %v1639 = vpack.c.b16 %v1607, %v1607
        %v1640 = vpack.c.b16 %v1608, %v1608
        %v1641 = vpack.c.b16 %v1609, %v1609
        %v1642 = vpack.c.b16 %v1610, %v1610
        %v1643 = vpack.c.b16 %v1611, %v1611
        %v1644 = vpack.c.b16 %v1612, %v1612
        %v1645 = vpack.c.b16 %v1613, %v1613
        %vm1678 = vcmask 257024
        %1679 = vst.msk [vmem:[%s345] sm:$0xf] %vm1678, %v1614
        %1680 = vst.msk [vmem:[%s345 + $0x4] sm:$0xf] %vm1678, %v1615
        %1681 = vst.msk [vmem:[%s345 + $0x8] sm:$0xf] %vm1678, %v1616
        %1682 = vst.msk [vmem:[%s345 + $0xc] sm:$0xf] %vm1678, %v1617
        %1683 = vst.msk [vmem:[%s345 + $0x10] sm:$0xf] %vm1678, %v1618
        %1684 = vst.msk [vmem:[%s345 + $0x14] sm:$0xf] %vm1678, %v1619
        %1685 = vst.msk [vmem:[%s345 + $0x18] sm:$0xf] %vm1678, %v1620
        %1686 = vst.msk [vmem:[%s345 + $0x1c] sm:$0xf] %vm1678, %v1621
        %1687 = vst.msk [vmem:[%s345 + $0x20] sm:$0xf] %vm1678, %v1622
        %1688 = vst.msk [vmem:[%s345 + $0x24] sm:$0xf] %vm1678, %v1623
        %1689 = vst.msk [vmem:[%s345 + $0x28] sm:$0xf] %vm1678, %v1624
        %1690 = vst.msk [vmem:[%s345 + $0x2c] sm:$0xf] %vm1678, %v1625
        %1691 = vst.msk [vmem:[%s345 + $0x30] sm:$0xf] %vm1678, %v1626
        %1692 = vst.msk [vmem:[%s345 + $0x34] sm:$0xf] %vm1678, %v1627
        %1693 = vst.msk [vmem:[%s345 + $0x38] sm:$0xf] %vm1678, %v1628
        %1694 = vst.msk [vmem:[%s345 + $0x3c] sm:$0xf] %vm1678, %v1629
        %1695 = vst.msk [vmem:[%s345 + $0x40] sm:$0xf] %vm1678, %v1630
        %1696 = vst.msk [vmem:[%s345 + $0x44] sm:$0xf] %vm1678, %v1631
        %1697 = vst.msk [vmem:[%s345 + $0x48] sm:$0xf] %vm1678, %v1632
        %1698 = vst.msk [vmem:[%s345 + $0x4c] sm:$0xf] %vm1678, %v1633
        %1699 = vst.msk [vmem:[%s345 + $0x50] sm:$0xf] %vm1678, %v1634
        %1700 = vst.msk [vmem:[%s345 + $0x54] sm:$0xf] %vm1678, %v1635
        %1701 = vst.msk [vmem:[%s345 + $0x58] sm:$0xf] %vm1678, %v1636
        %1702 = vst.msk [vmem:[%s345 + $0x5c] sm:$0xf] %vm1678, %v1637
        %1703 = vst.msk [vmem:[%s345 + $0x60] sm:$0xf] %vm1678, %v1638
        %1704 = vst.msk [vmem:[%s345 + $0x64] sm:$0xf] %vm1678, %v1639
        %1705 = vst.msk [vmem:[%s345 + $0x68] sm:$0xf] %vm1678, %v1640
        %1706 = vst.msk [vmem:[%s345 + $0x6c] sm:$0xf] %vm1678, %v1641
        %1707 = vst.msk [vmem:[%s345 + $0x70] sm:$0xf] %vm1678, %v1642
        %1708 = vst.msk [vmem:[%s345 + $0x74] sm:$0xf] %vm1678, %v1643
        %1709 = vst.msk [vmem:[%s345 + $0x78] sm:$0xf] %vm1678, %v1644
        %1710 = vst.msk [vmem:[%s345 + $0x7c] sm:$0xf] %vm1678, %v1645
        %v1711 = vpack.c.bf16 %v1205, %v1201
        %v1712 = vpack.c.bf16 %v1215, %v1211
        %v1713 = vpack.c.bf16 %v1225, %v1221
        %v1714 = vpack.c.bf16 %v1235, %v1231
        %v1715 = vpack.c.bf16 %v1245, %v1241
        %v1716 = vpack.c.bf16 %v1255, %v1251
        %v1717 = vpack.c.bf16 %v1265, %v1261
        %v1718 = vpack.c.bf16 %v1275, %v1271
        %v1719 = vpack.c.bf16 %v1285, %v1281
        %v1720 = vpack.c.bf16 %v1295, %v1291
        %v1721 = vpack.c.bf16 %v1305, %v1301
        %v1722 = vpack.c.bf16 %v1315, %v1311
        %v1723 = vpack.c.bf16 %v1325, %v1321
        %v1724 = vpack.c.bf16 %v1335, %v1331
        %v1725 = vpack.c.bf16 %v1345, %v1341
        %v1726 = vpack.c.bf16 %v1355, %v1351
        %v1743 = vunpack.c.l.b16 %v1711
        %v1744 = vunpack.c.h.b16 %v1711
        %v1745 = vunpack.c.l.b16 %v1712
        %v1746 = vunpack.c.h.b16 %v1712
        %v1747 = vunpack.c.l.b16 %v1713
        %v1748 = vunpack.c.h.b16 %v1713
        %v1749 = vunpack.c.l.b16 %v1714
        %v1750 = vunpack.c.h.b16 %v1714
        %v1751 = vunpack.c.l.b16 %v1715
        %v1752 = vunpack.c.h.b16 %v1715
        %v1753 = vunpack.c.l.b16 %v1716
        %v1754 = vunpack.c.h.b16 %v1716
        %v1755 = vunpack.c.l.b16 %v1717
        %v1756 = vunpack.c.h.b16 %v1717
        %v1757 = vunpack.c.l.b16 %v1718
        %v1758 = vunpack.c.h.b16 %v1718
        %v1759 = vunpack.c.l.b16 %v1719
        %v1760 = vunpack.c.h.b16 %v1719
        %v1761 = vunpack.c.l.b16 %v1720
        %v1762 = vunpack.c.h.b16 %v1720
        %v1763 = vunpack.c.l.b16 %v1721
        %v1764 = vunpack.c.h.b16 %v1721
        %v1765 = vunpack.c.l.b16 %v1722
        %v1766 = vunpack.c.h.b16 %v1722
        %v1767 = vunpack.c.l.b16 %v1723
        %v1768 = vunpack.c.h.b16 %v1723
        %v1769 = vunpack.c.l.b16 %v1724
        %v1770 = vunpack.c.h.b16 %v1724
        %v1771 = vunpack.c.l.b16 %v1725
        %v1772 = vunpack.c.h.b16 %v1725
        %v1773 = vunpack.c.l.b16 %v1726
        %v1774 = vunpack.c.h.b16 %v1726
        %v1775 = vpack.c.b16 %v1743, %v1743
        %v1776 = vpack.c.b16 %v1744, %v1744
        %v1777 = vpack.c.b16 %v1745, %v1745
        %v1778 = vpack.c.b16 %v1746, %v1746
        %v1779 = vpack.c.b16 %v1747, %v1747
        %v1780 = vpack.c.b16 %v1748, %v1748
        %v1781 = vpack.c.b16 %v1749, %v1749
        %v1782 = vpack.c.b16 %v1750, %v1750
        %v1783 = vpack.c.b16 %v1751, %v1751
        %v1784 = vpack.c.b16 %v1752, %v1752
        %v1785 = vpack.c.b16 %v1753, %v1753
        %v1786 = vpack.c.b16 %v1754, %v1754
        %v1787 = vpack.c.b16 %v1755, %v1755
        %v1788 = vpack.c.b16 %v1756, %v1756
        %v1789 = vpack.c.b16 %v1757, %v1757
        %v1790 = vpack.c.b16 %v1758, %v1758
        %v1791 = vpack.c.b16 %v1759, %v1759
        %v1792 = vpack.c.b16 %v1760, %v1760
        %v1793 = vpack.c.b16 %v1761, %v1761
        %v1794 = vpack.c.b16 %v1762, %v1762
        %v1795 = vpack.c.b16 %v1763, %v1763
        %v1796 = vpack.c.b16 %v1764, %v1764
        %v1797 = vpack.c.b16 %v1765, %v1765
        %v1798 = vpack.c.b16 %v1766, %v1766
        %v1799 = vpack.c.b16 %v1767, %v1767
        %v1800 = vpack.c.b16 %v1768, %v1768
        %v1801 = vpack.c.b16 %v1769, %v1769
        %v1802 = vpack.c.b16 %v1770, %v1770
        %v1803 = vpack.c.b16 %v1771, %v1771
        %v1804 = vpack.c.b16 %v1772, %v1772
        %v1805 = vpack.c.b16 %v1773, %v1773
        %v1806 = vpack.c.b16 %v1774, %v1774
        %1839 = vst.msk [vmem:[%s351] sm:$0xf] %vm1678, %v1775
        %1840 = vst.msk [vmem:[%s351 + $0x4] sm:$0xf] %vm1678, %v1776
        %1841 = vst.msk [vmem:[%s351 + $0x8] sm:$0xf] %vm1678, %v1777
        %1842 = vst.msk [vmem:[%s351 + $0xc] sm:$0xf] %vm1678, %v1778
        %1843 = vst.msk [vmem:[%s351 + $0x10] sm:$0xf] %vm1678, %v1779
        %1844 = vst.msk [vmem:[%s351 + $0x14] sm:$0xf] %vm1678, %v1780
        %1845 = vst.msk [vmem:[%s351 + $0x18] sm:$0xf] %vm1678, %v1781
        %1846 = vst.msk [vmem:[%s351 + $0x1c] sm:$0xf] %vm1678, %v1782
        %1847 = vst.msk [vmem:[%s351 + $0x20] sm:$0xf] %vm1678, %v1783
        %1848 = vst.msk [vmem:[%s351 + $0x24] sm:$0xf] %vm1678, %v1784
        %1849 = vst.msk [vmem:[%s351 + $0x28] sm:$0xf] %vm1678, %v1785
        %1850 = vst.msk [vmem:[%s351 + $0x2c] sm:$0xf] %vm1678, %v1786
        %1851 = vst.msk [vmem:[%s351 + $0x30] sm:$0xf] %vm1678, %v1787
        %1852 = vst.msk [vmem:[%s351 + $0x34] sm:$0xf] %vm1678, %v1788
        %1853 = vst.msk [vmem:[%s351 + $0x38] sm:$0xf] %vm1678, %v1789
        %1854 = vst.msk [vmem:[%s351 + $0x3c] sm:$0xf] %vm1678, %v1790
        %1855 = vst.msk [vmem:[%s351 + $0x40] sm:$0xf] %vm1678, %v1791
        %1856 = vst.msk [vmem:[%s351 + $0x44] sm:$0xf] %vm1678, %v1792
        %1857 = vst.msk [vmem:[%s351 + $0x48] sm:$0xf] %vm1678, %v1793
        %1858 = vst.msk [vmem:[%s351 + $0x4c] sm:$0xf] %vm1678, %v1794
        %1859 = vst.msk [vmem:[%s351 + $0x50] sm:$0xf] %vm1678, %v1795
        %1860 = vst.msk [vmem:[%s351 + $0x54] sm:$0xf] %vm1678, %v1796
        %1861 = vst.msk [vmem:[%s351 + $0x58] sm:$0xf] %vm1678, %v1797
        %1862 = vst.msk [vmem:[%s351 + $0x5c] sm:$0xf] %vm1678, %v1798
        %1863 = vst.msk [vmem:[%s351 + $0x60] sm:$0xf] %vm1678, %v1799
        %1864 = vst.msk [vmem:[%s351 + $0x64] sm:$0xf] %vm1678, %v1800
        %1865 = vst.msk [vmem:[%s351 + $0x68] sm:$0xf] %vm1678, %v1801
        %1866 = vst.msk [vmem:[%s351 + $0x6c] sm:$0xf] %vm1678, %v1802
        %1867 = vst.msk [vmem:[%s351 + $0x70] sm:$0xf] %vm1678, %v1803
        %1868 = vst.msk [vmem:[%s351 + $0x74] sm:$0xf] %vm1678, %v1804
        %1869 = vst.msk [vmem:[%s351 + $0x78] sm:$0xf] %vm1678, %v1805
        %1870 = vst.msk [vmem:[%s351 + $0x7c] sm:$0xf] %vm1678, %v1806
        %v1871 = vpack.c.bf16 %v1395, %v1392
        %v1872 = vpack.c.bf16 %v1403, %v1400
        %v1873 = vpack.c.bf16 %v1411, %v1408
        %v1874 = vpack.c.bf16 %v1419, %v1416
        %v1875 = vpack.c.bf16 %v1427, %v1424
        %v1876 = vpack.c.bf16 %v1435, %v1432
        %v1877 = vpack.c.bf16 %v1443, %v1440
        %v1878 = vpack.c.bf16 %v1451, %v1448
        %v1879 = vpack.c.bf16 %v1459, %v1456
        %v1880 = vpack.c.bf16 %v1467, %v1464
        %v1881 = vpack.c.bf16 %v1475, %v1472
        %v1882 = vpack.c.bf16 %v1483, %v1480
        %v1883 = vpack.c.bf16 %v1491, %v1488
        %v1884 = vpack.c.bf16 %v1499, %v1496
        %v1885 = vpack.c.bf16 %v1507, %v1504
        %v1886 = vpack.c.bf16 %v1515, %v1512
        %v1903 = vunpack.c.l.b16 %v1871
        %v1904 = vunpack.c.h.b16 %v1871
        %v1905 = vunpack.c.l.b16 %v1872
        %v1906 = vunpack.c.h.b16 %v1872
        %v1907 = vunpack.c.l.b16 %v1873
        %v1908 = vunpack.c.h.b16 %v1873
        %v1909 = vunpack.c.l.b16 %v1874
        %v1910 = vunpack.c.h.b16 %v1874
        %v1911 = vunpack.c.l.b16 %v1875
        %v1912 = vunpack.c.h.b16 %v1875
        %v1913 = vunpack.c.l.b16 %v1876
        %v1914 = vunpack.c.h.b16 %v1876
        %v1915 = vunpack.c.l.b16 %v1877
        %v1916 = vunpack.c.h.b16 %v1877
        %v1917 = vunpack.c.l.b16 %v1878
        %v1918 = vunpack.c.h.b16 %v1878
        %v1919 = vunpack.c.l.b16 %v1879
        %v1920 = vunpack.c.h.b16 %v1879
        %v1921 = vunpack.c.l.b16 %v1880
        %v1922 = vunpack.c.h.b16 %v1880
        %v1923 = vunpack.c.l.b16 %v1881
        %v1924 = vunpack.c.h.b16 %v1881
        %v1925 = vunpack.c.l.b16 %v1882
        %v1926 = vunpack.c.h.b16 %v1882
        %v1927 = vunpack.c.l.b16 %v1883
        %v1928 = vunpack.c.h.b16 %v1883
        %v1929 = vunpack.c.l.b16 %v1884
        %v1930 = vunpack.c.h.b16 %v1884
        %v1931 = vunpack.c.l.b16 %v1885
        %v1932 = vunpack.c.h.b16 %v1885
        %v1933 = vunpack.c.l.b16 %v1886
        %v1934 = vunpack.c.h.b16 %v1886
        %v1935 = vpack.c.b16 %v1903, %v1903
        %v1936 = vpack.c.b16 %v1904, %v1904
        %v1937 = vpack.c.b16 %v1905, %v1905
        %v1938 = vpack.c.b16 %v1906, %v1906
        %v1939 = vpack.c.b16 %v1907, %v1907
        %v1940 = vpack.c.b16 %v1908, %v1908
        %v1941 = vpack.c.b16 %v1909, %v1909
        %v1942 = vpack.c.b16 %v1910, %v1910
        %v1943 = vpack.c.b16 %v1911, %v1911
        %v1944 = vpack.c.b16 %v1912, %v1912
        %v1945 = vpack.c.b16 %v1913, %v1913
        %v1946 = vpack.c.b16 %v1914, %v1914
        %v1947 = vpack.c.b16 %v1915, %v1915
        %v1948 = vpack.c.b16 %v1916, %v1916
        %v1949 = vpack.c.b16 %v1917, %v1917
        %v1950 = vpack.c.b16 %v1918, %v1918
        %v1951 = vpack.c.b16 %v1919, %v1919
        %v1952 = vpack.c.b16 %v1920, %v1920
        %v1953 = vpack.c.b16 %v1921, %v1921
        %v1954 = vpack.c.b16 %v1922, %v1922
        %v1955 = vpack.c.b16 %v1923, %v1923
        %v1956 = vpack.c.b16 %v1924, %v1924
        %v1957 = vpack.c.b16 %v1925, %v1925
        %v1958 = vpack.c.b16 %v1926, %v1926
        %v1959 = vpack.c.b16 %v1927, %v1927
        %v1960 = vpack.c.b16 %v1928, %v1928
        %v1961 = vpack.c.b16 %v1929, %v1929
        %v1962 = vpack.c.b16 %v1930, %v1930
        %v1963 = vpack.c.b16 %v1931, %v1931
        %v1964 = vpack.c.b16 %v1932, %v1932
        %v1965 = vpack.c.b16 %v1933, %v1933
        %v1966 = vpack.c.b16 %v1934, %v1934
        %1999 = vst.msk [vmem:[%s357] sm:$0xf] %vm1678, %v1935
        %2000 = vst.msk [vmem:[%s357 + $0x4] sm:$0xf] %vm1678, %v1936
        %2001 = vst.msk [vmem:[%s357 + $0x8] sm:$0xf] %vm1678, %v1937
        %2002 = vst.msk [vmem:[%s357 + $0xc] sm:$0xf] %vm1678, %v1938
        %2003 = vst.msk [vmem:[%s357 + $0x10] sm:$0xf] %vm1678, %v1939
        %2004 = vst.msk [vmem:[%s357 + $0x14] sm:$0xf] %vm1678, %v1940
        %2005 = vst.msk [vmem:[%s357 + $0x18] sm:$0xf] %vm1678, %v1941
        %2006 = vst.msk [vmem:[%s357 + $0x1c] sm:$0xf] %vm1678, %v1942
        %2007 = vst.msk [vmem:[%s357 + $0x20] sm:$0xf] %vm1678, %v1943
        %2008 = vst.msk [vmem:[%s357 + $0x24] sm:$0xf] %vm1678, %v1944
        %2009 = vst.msk [vmem:[%s357 + $0x28] sm:$0xf] %vm1678, %v1945
        %2010 = vst.msk [vmem:[%s357 + $0x2c] sm:$0xf] %vm1678, %v1946
        %2011 = vst.msk [vmem:[%s357 + $0x30] sm:$0xf] %vm1678, %v1947
        %2012 = vst.msk [vmem:[%s357 + $0x34] sm:$0xf] %vm1678, %v1948
        %2013 = vst.msk [vmem:[%s357 + $0x38] sm:$0xf] %vm1678, %v1949
        %2014 = vst.msk [vmem:[%s357 + $0x3c] sm:$0xf] %vm1678, %v1950
        %2015 = vst.msk [vmem:[%s357 + $0x40] sm:$0xf] %vm1678, %v1951
        %2016 = vst.msk [vmem:[%s357 + $0x44] sm:$0xf] %vm1678, %v1952
        %2017 = vst.msk [vmem:[%s357 + $0x48] sm:$0xf] %vm1678, %v1953
        %2018 = vst.msk [vmem:[%s357 + $0x4c] sm:$0xf] %vm1678, %v1954
        %2019 = vst.msk [vmem:[%s357 + $0x50] sm:$0xf] %vm1678, %v1955
        %2020 = vst.msk [vmem:[%s357 + $0x54] sm:$0xf] %vm1678, %v1956
        %2021 = vst.msk [vmem:[%s357 + $0x58] sm:$0xf] %vm1678, %v1957
        %2022 = vst.msk [vmem:[%s357 + $0x5c] sm:$0xf] %vm1678, %v1958
        %2023 = vst.msk [vmem:[%s357 + $0x60] sm:$0xf] %vm1678, %v1959
        %2024 = vst.msk [vmem:[%s357 + $0x64] sm:$0xf] %vm1678, %v1960
        %2025 = vst.msk [vmem:[%s357 + $0x68] sm:$0xf] %vm1678, %v1961
        %2026 = vst.msk [vmem:[%s357 + $0x6c] sm:$0xf] %vm1678, %v1962
        %2027 = vst.msk [vmem:[%s357 + $0x70] sm:$0xf] %vm1678, %v1963
        %2028 = vst.msk [vmem:[%s357 + $0x74] sm:$0xf] %vm1678, %v1964
        %2029 = vst.msk [vmem:[%s357 + $0x78] sm:$0xf] %vm1678, %v1965
        %2030 = vst.msk [vmem:[%s357 + $0x7c] sm:$0xf] %vm1678, %v1966
        %2031 = vrot.lane.b32.xlu0 %v1614, 96
        %v2032 = vpop.permute.xlu0 %2031
        %2033 = vrot.lane.b32.xlu0 %v1615, 96
        %v2034 = vpop.permute.xlu0 %2033
        %2035 = vrot.lane.b32.xlu0 %v1616, 96
        %v2036 = vpop.permute.xlu0 %2035
        %2037 = vrot.lane.b32.xlu0 %v1617, 96
        %v2038 = vpop.permute.xlu0 %2037
        %2039 = vrot.lane.b32.xlu0 %v1618, 96
        %v2040 = vpop.permute.xlu0 %2039
        %2041 = vrot.lane.b32.xlu0 %v1619, 96
        %v2042 = vpop.permute.xlu0 %2041
        %2043 = vrot.lane.b32.xlu0 %v1620, 96
        %v2044 = vpop.permute.xlu0 %2043
        %2045 = vrot.lane.b32.xlu0 %v1621, 96
        %v2046 = vpop.permute.xlu0 %2045
        %2047 = vrot.lane.b32.xlu0 %v1622, 96
        %v2048 = vpop.permute.xlu0 %2047
        %2049 = vrot.lane.b32.xlu0 %v1623, 96
        %v2050 = vpop.permute.xlu0 %2049
        %2051 = vrot.lane.b32.xlu0 %v1624, 96
        %v2052 = vpop.permute.xlu0 %2051
        %2053 = vrot.lane.b32.xlu0 %v1625, 96
        %v2054 = vpop.permute.xlu0 %2053
        %2055 = vrot.lane.b32.xlu0 %v1626, 96
        %v2056 = vpop.permute.xlu0 %2055
        %2057 = vrot.lane.b32.xlu0 %v1627, 96
        %v2058 = vpop.permute.xlu0 %2057
        %2059 = vrot.lane.b32.xlu0 %v1628, 96
        %v2060 = vpop.permute.xlu0 %2059
        %2061 = vrot.lane.b32.xlu0 %v1629, 96
        %v2062 = vpop.permute.xlu0 %2061
        %2063 = vrot.lane.b32.xlu0 %v1630, 96
        %v2064 = vpop.permute.xlu0 %2063
        %2065 = vrot.lane.b32.xlu0 %v1631, 96
        %v2066 = vpop.permute.xlu0 %2065
        %2067 = vrot.lane.b32.xlu0 %v1632, 96
        %v2068 = vpop.permute.xlu0 %2067
        %2069 = vrot.lane.b32.xlu0 %v1633, 96
        %v2070 = vpop.permute.xlu0 %2069
        %2071 = vrot.lane.b32.xlu0 %v1634, 96
        %v2072 = vpop.permute.xlu0 %2071
        %2073 = vrot.lane.b32.xlu0 %v1635, 96
        %v2074 = vpop.permute.xlu0 %2073
        %2075 = vrot.lane.b32.xlu0 %v1636, 96
        %v2076 = vpop.permute.xlu0 %2075
        %2077 = vrot.lane.b32.xlu0 %v1637, 96
        %v2078 = vpop.permute.xlu0 %2077
        %2079 = vrot.lane.b32.xlu0 %v1638, 96
        %v2080 = vpop.permute.xlu0 %2079
        %2081 = vrot.lane.b32.xlu0 %v1639, 96
        %v2082 = vpop.permute.xlu0 %2081
        %2083 = vrot.lane.b32.xlu0 %v1640, 96
        %v2084 = vpop.permute.xlu0 %2083
        %2085 = vrot.lane.b32.xlu0 %v1641, 96
        %v2086 = vpop.permute.xlu0 %2085
        %2087 = vrot.lane.b32.xlu0 %v1642, 96
        %v2088 = vpop.permute.xlu0 %2087
        %2089 = vrot.lane.b32.xlu0 %v1643, 96
        %v2090 = vpop.permute.xlu0 %2089
        %2091 = vrot.lane.b32.xlu0 %v1644, 96
        %v2092 = vpop.permute.xlu0 %2091
        %2093 = vrot.lane.b32.xlu0 %v1645, 96
        %v2094 = vpop.permute.xlu0 %2093
        %s2127 = scalar_lea.vmem %s345, 128 [#allocation8]
        %2128 = vst.msk [vmem:[%s2127] sm:$0xf] %vm1678, %v2032
        %2129 = vst.msk [vmem:[%s2127 + $0x4] sm:$0xf] %vm1678, %v2034
        %2130 = vst.msk [vmem:[%s2127 + $0x8] sm:$0xf] %vm1678, %v2036
        %2131 = vst.msk [vmem:[%s2127 + $0xc] sm:$0xf] %vm1678, %v2038
        %2132 = vst.msk [vmem:[%s2127 + $0x10] sm:$0xf] %vm1678, %v2040
        %2133 = vst.msk [vmem:[%s2127 + $0x14] sm:$0xf] %vm1678, %v2042
        %2134 = vst.msk [vmem:[%s2127 + $0x18] sm:$0xf] %vm1678, %v2044
        %2135 = vst.msk [vmem:[%s2127 + $0x1c] sm:$0xf] %vm1678, %v2046
        %2136 = vst.msk [vmem:[%s2127 + $0x20] sm:$0xf] %vm1678, %v2048
        %2137 = vst.msk [vmem:[%s2127 + $0x24] sm:$0xf] %vm1678, %v2050
        %2138 = vst.msk [vmem:[%s2127 + $0x28] sm:$0xf] %vm1678, %v2052
        %2139 = vst.msk [vmem:[%s2127 + $0x2c] sm:$0xf] %vm1678, %v2054
        %2140 = vst.msk [vmem:[%s2127 + $0x30] sm:$0xf] %vm1678, %v2056
        %2141 = vst.msk [vmem:[%s2127 + $0x34] sm:$0xf] %vm1678, %v2058
        %2142 = vst.msk [vmem:[%s2127 + $0x38] sm:$0xf] %vm1678, %v2060
        %2143 = vst.msk [vmem:[%s2127 + $0x3c] sm:$0xf] %vm1678, %v2062
        %2144 = vst.msk [vmem:[%s2127 + $0x40] sm:$0xf] %vm1678, %v2064
        %2145 = vst.msk [vmem:[%s2127 + $0x44] sm:$0xf] %vm1678, %v2066
        %2146 = vst.msk [vmem:[%s2127 + $0x48] sm:$0xf] %vm1678, %v2068
        %2147 = vst.msk [vmem:[%s2127 + $0x4c] sm:$0xf] %vm1678, %v2070
        %2148 = vst.msk [vmem:[%s2127 + $0x50] sm:$0xf] %vm1678, %v2072
        %2149 = vst.msk [vmem:[%s2127 + $0x54] sm:$0xf] %vm1678, %v2074
        %2150 = vst.msk [vmem:[%s2127 + $0x58] sm:$0xf] %vm1678, %v2076
        %2151 = vst.msk [vmem:[%s2127 + $0x5c] sm:$0xf] %vm1678, %v2078
        %2152 = vst.msk [vmem:[%s2127 + $0x60] sm:$0xf] %vm1678, %v2080
        %2153 = vst.msk [vmem:[%s2127 + $0x64] sm:$0xf] %vm1678, %v2082
        %2154 = vst.msk [vmem:[%s2127 + $0x68] sm:$0xf] %vm1678, %v2084
        %2155 = vst.msk [vmem:[%s2127 + $0x6c] sm:$0xf] %vm1678, %v2086
        %2156 = vst.msk [vmem:[%s2127 + $0x70] sm:$0xf] %vm1678, %v2088
        %2157 = vst.msk [vmem:[%s2127 + $0x74] sm:$0xf] %vm1678, %v2090
        %2158 = vst.msk [vmem:[%s2127 + $0x78] sm:$0xf] %vm1678, %v2092
        %2159 = vst.msk [vmem:[%s2127 + $0x7c] sm:$0xf] %vm1678, %v2094
        %2160 = vrot.lane.b32.xlu0 %v1775, 96
        %v2161 = vpop.permute.xlu0 %2160
        %2162 = vrot.lane.b32.xlu0 %v1776, 96
        %v2163 = vpop.permute.xlu0 %2162
        %2164 = vrot.lane.b32.xlu0 %v1777, 96
        %v2165 = vpop.permute.xlu0 %2164
        %2166 = vrot.lane.b32.xlu0 %v1778, 96
        %v2167 = vpop.permute.xlu0 %2166
        %2168 = vrot.lane.b32.xlu0 %v1779, 96
        %v2169 = vpop.permute.xlu0 %2168
        %2170 = vrot.lane.b32.xlu0 %v1780, 96
        %v2171 = vpop.permute.xlu0 %2170
        %2172 = vrot.lane.b32.xlu0 %v1781, 96
        %v2173 = vpop.permute.xlu0 %2172
        %2174 = vrot.lane.b32.xlu0 %v1782, 96
        %v2175 = vpop.permute.xlu0 %2174
        %2176 = vrot.lane.b32.xlu0 %v1783, 96
        %v2177 = vpop.permute.xlu0 %2176
        %2178 = vrot.lane.b32.xlu0 %v1784, 96
        %v2179 = vpop.permute.xlu0 %2178
        %2180 = vrot.lane.b32.xlu0 %v1785, 96
        %v2181 = vpop.permute.xlu0 %2180
        %2182 = vrot.lane.b32.xlu0 %v1786, 96
        %v2183 = vpop.permute.xlu0 %2182
        %2184 = vrot.lane.b32.xlu0 %v1787, 96
        %v2185 = vpop.permute.xlu0 %2184
        %2186 = vrot.lane.b32.xlu0 %v1788, 96
        %v2187 = vpop.permute.xlu0 %2186
        %2188 = vrot.lane.b32.xlu0 %v1789, 96
        %v2189 = vpop.permute.xlu0 %2188
        %2190 = vrot.lane.b32.xlu0 %v1790, 96
        %v2191 = vpop.permute.xlu0 %2190
        %2192 = vrot.lane.b32.xlu0 %v1791, 96
        %v2193 = vpop.permute.xlu0 %2192
        %2194 = vrot.lane.b32.xlu0 %v1792, 96
        %v2195 = vpop.permute.xlu0 %2194
        %2196 = vrot.lane.b32.xlu0 %v1793, 96
        %v2197 = vpop.permute.xlu0 %2196
        %2198 = vrot.lane.b32.xlu0 %v1794, 96
        %v2199 = vpop.permute.xlu0 %2198
        %2200 = vrot.lane.b32.xlu0 %v1795, 96
        %v2201 = vpop.permute.xlu0 %2200
        %2202 = vrot.lane.b32.xlu0 %v1796, 96
        %v2203 = vpop.permute.xlu0 %2202
        %2204 = vrot.lane.b32.xlu0 %v1797, 96
        %v2205 = vpop.permute.xlu0 %2204
        %2206 = vrot.lane.b32.xlu0 %v1798, 96
        %v2207 = vpop.permute.xlu0 %2206
        %2208 = vrot.lane.b32.xlu0 %v1799, 96
        %v2209 = vpop.permute.xlu0 %2208
        %2210 = vrot.lane.b32.xlu0 %v1800, 96
        %v2211 = vpop.permute.xlu0 %2210
        %2212 = vrot.lane.b32.xlu0 %v1801, 96
        %v2213 = vpop.permute.xlu0 %2212
        %2214 = vrot.lane.b32.xlu0 %v1802, 96
        %v2215 = vpop.permute.xlu0 %2214
        %2216 = vrot.lane.b32.xlu0 %v1803, 96
        %v2217 = vpop.permute.xlu0 %2216
        %2218 = vrot.lane.b32.xlu0 %v1804, 96
        %v2219 = vpop.permute.xlu0 %2218
        %2220 = vrot.lane.b32.xlu0 %v1805, 96
        %v2221 = vpop.permute.xlu0 %2220
        %2222 = vrot.lane.b32.xlu0 %v1806, 96
        %v2223 = vpop.permute.xlu0 %2222
        %s2256 = scalar_lea.vmem %s351, 128 [#allocation9]
        %2257 = vst.msk [vmem:[%s2256] sm:$0xf] %vm1678, %v2161
        %2258 = vst.msk [vmem:[%s2256 + $0x4] sm:$0xf] %vm1678, %v2163
        %2259 = vst.msk [vmem:[%s2256 + $0x8] sm:$0xf] %vm1678, %v2165
        %2260 = vst.msk [vmem:[%s2256 + $0xc] sm:$0xf] %vm1678, %v2167
        %2261 = vst.msk [vmem:[%s2256 + $0x10] sm:$0xf] %vm1678, %v2169
        %2262 = vst.msk [vmem:[%s2256 + $0x14] sm:$0xf] %vm1678, %v2171
        %2263 = vst.msk [vmem:[%s2256 + $0x18] sm:$0xf] %vm1678, %v2173
        %2264 = vst.msk [vmem:[%s2256 + $0x1c] sm:$0xf] %vm1678, %v2175
        %2265 = vst.msk [vmem:[%s2256 + $0x20] sm:$0xf] %vm1678, %v2177
        %2266 = vst.msk [vmem:[%s2256 + $0x24] sm:$0xf] %vm1678, %v2179
        %2267 = vst.msk [vmem:[%s2256 + $0x28] sm:$0xf] %vm1678, %v2181
        %2268 = vst.msk [vmem:[%s2256 + $0x2c] sm:$0xf] %vm1678, %v2183
        %2269 = vst.msk [vmem:[%s2256 + $0x30] sm:$0xf] %vm1678, %v2185
        %2270 = vst.msk [vmem:[%s2256 + $0x34] sm:$0xf] %vm1678, %v2187
        %2271 = vst.msk [vmem:[%s2256 + $0x38] sm:$0xf] %vm1678, %v2189
        %2272 = vst.msk [vmem:[%s2256 + $0x3c] sm:$0xf] %vm1678, %v2191
        %2273 = vst.msk [vmem:[%s2256 + $0x40] sm:$0xf] %vm1678, %v2193
        %2274 = vst.msk [vmem:[%s2256 + $0x44] sm:$0xf] %vm1678, %v2195
        %2275 = vst.msk [vmem:[%s2256 + $0x48] sm:$0xf] %vm1678, %v2197
        %2276 = vst.msk [vmem:[%s2256 + $0x4c] sm:$0xf] %vm1678, %v2199
        %2277 = vst.msk [vmem:[%s2256 + $0x50] sm:$0xf] %vm1678, %v2201
        %2278 = vst.msk [vmem:[%s2256 + $0x54] sm:$0xf] %vm1678, %v2203
        %2279 = vst.msk [vmem:[%s2256 + $0x58] sm:$0xf] %vm1678, %v2205
        %2280 = vst.msk [vmem:[%s2256 + $0x5c] sm:$0xf] %vm1678, %v2207
        %2281 = vst.msk [vmem:[%s2256 + $0x60] sm:$0xf] %vm1678, %v2209
        %2282 = vst.msk [vmem:[%s2256 + $0x64] sm:$0xf] %vm1678, %v2211
        %2283 = vst.msk [vmem:[%s2256 + $0x68] sm:$0xf] %vm1678, %v2213
        %2284 = vst.msk [vmem:[%s2256 + $0x6c] sm:$0xf] %vm1678, %v2215
        %2285 = vst.msk [vmem:[%s2256 + $0x70] sm:$0xf] %vm1678, %v2217
        %2286 = vst.msk [vmem:[%s2256 + $0x74] sm:$0xf] %vm1678, %v2219
        %2287 = vst.msk [vmem:[%s2256 + $0x78] sm:$0xf] %vm1678, %v2221
        %2288 = vst.msk [vmem:[%s2256 + $0x7c] sm:$0xf] %vm1678, %v2223
        %2289 = vrot.lane.b32.xlu0 %v1935, 96
        %v2290 = vpop.permute.xlu0 %2289
        %2291 = vrot.lane.b32.xlu0 %v1936, 96
        %v2292 = vpop.permute.xlu0 %2291
        %2293 = vrot.lane.b32.xlu0 %v1937, 96
        %v2294 = vpop.permute.xlu0 %2293
        %2295 = vrot.lane.b32.xlu0 %v1938, 96
        %v2296 = vpop.permute.xlu0 %2295
        %2297 = vrot.lane.b32.xlu0 %v1939, 96
        %v2298 = vpop.permute.xlu0 %2297
        %2299 = vrot.lane.b32.xlu0 %v1940, 96
        %v2300 = vpop.permute.xlu0 %2299
        %2301 = vrot.lane.b32.xlu0 %v1941, 96
        %v2302 = vpop.permute.xlu0 %2301
        %2303 = vrot.lane.b32.xlu0 %v1942, 96
        %v2304 = vpop.permute.xlu0 %2303
        %2305 = vrot.lane.b32.xlu0 %v1943, 96
        %v2306 = vpop.permute.xlu0 %2305
        %2307 = vrot.lane.b32.xlu0 %v1944, 96
        %v2308 = vpop.permute.xlu0 %2307
        %2309 = vrot.lane.b32.xlu0 %v1945, 96
        %v2310 = vpop.permute.xlu0 %2309
        %2311 = vrot.lane.b32.xlu0 %v1946, 96
        %v2312 = vpop.permute.xlu0 %2311
        %2313 = vrot.lane.b32.xlu0 %v1947, 96
        %v2314 = vpop.permute.xlu0 %2313
        %2315 = vrot.lane.b32.xlu0 %v1948, 96
        %v2316 = vpop.permute.xlu0 %2315
        %2317 = vrot.lane.b32.xlu0 %v1949, 96
        %v2318 = vpop.permute.xlu0 %2317
        %2319 = vrot.lane.b32.xlu0 %v1950, 96
        %v2320 = vpop.permute.xlu0 %2319
        %2321 = vrot.lane.b32.xlu0 %v1951, 96
        %v2322 = vpop.permute.xlu0 %2321
        %2323 = vrot.lane.b32.xlu0 %v1952, 96
        %v2324 = vpop.permute.xlu0 %2323
        %2325 = vrot.lane.b32.xlu0 %v1953, 96
        %v2326 = vpop.permute.xlu0 %2325
        %2327 = vrot.lane.b32.xlu0 %v1954, 96
        %v2328 = vpop.permute.xlu0 %2327
        %2329 = vrot.lane.b32.xlu0 %v1955, 96
        %v2330 = vpop.permute.xlu0 %2329
        %2331 = vrot.lane.b32.xlu0 %v1956, 96
        %v2332 = vpop.permute.xlu0 %2331
        %2333 = vrot.lane.b32.xlu0 %v1957, 96
        %v2334 = vpop.permute.xlu0 %2333
        %2335 = vrot.lane.b32.xlu0 %v1958, 96
        %v2336 = vpop.permute.xlu0 %2335
        %2337 = vrot.lane.b32.xlu0 %v1959, 96
        %v2338 = vpop.permute.xlu0 %2337
        %2339 = vrot.lane.b32.xlu0 %v1960, 96
        %v2340 = vpop.permute.xlu0 %2339
        %2341 = vrot.lane.b32.xlu0 %v1961, 96
        %v2342 = vpop.permute.xlu0 %2341
        %2343 = vrot.lane.b32.xlu0 %v1962, 96
        %v2344 = vpop.permute.xlu0 %2343
        %2345 = vrot.lane.b32.xlu0 %v1963, 96
        %v2346 = vpop.permute.xlu0 %2345
        %2347 = vrot.lane.b32.xlu0 %v1964, 96
        %v2348 = vpop.permute.xlu0 %2347
        %2349 = vrot.lane.b32.xlu0 %v1965, 96
        %v2350 = vpop.permute.xlu0 %2349
        %2351 = vrot.lane.b32.xlu0 %v1966, 96
        %v2352 = vpop.permute.xlu0 %2351
        %s2385 = scalar_lea.vmem %s357, 128 [#allocation10]
        %2386 = vst.msk [vmem:[%s2385] sm:$0xf] %vm1678, %v2290
        %2387 = vst.msk [vmem:[%s2385 + $0x4] sm:$0xf] %vm1678, %v2292
        %2388 = vst.msk [vmem:[%s2385 + $0x8] sm:$0xf] %vm1678, %v2294
        %2389 = vst.msk [vmem:[%s2385 + $0xc] sm:$0xf] %vm1678, %v2296
        %2390 = vst.msk [vmem:[%s2385 + $0x10] sm:$0xf] %vm1678, %v2298
        %2391 = vst.msk [vmem:[%s2385 + $0x14] sm:$0xf] %vm1678, %v2300
        %2392 = vst.msk [vmem:[%s2385 + $0x18] sm:$0xf] %vm1678, %v2302
        %2393 = vst.msk [vmem:[%s2385 + $0x1c] sm:$0xf] %vm1678, %v2304
        %2394 = vst.msk [vmem:[%s2385 + $0x20] sm:$0xf] %vm1678, %v2306
        %2395 = vst.msk [vmem:[%s2385 + $0x24] sm:$0xf] %vm1678, %v2308
        %2396 = vst.msk [vmem:[%s2385 + $0x28] sm:$0xf] %vm1678, %v2310
        %2397 = vst.msk [vmem:[%s2385 + $0x2c] sm:$0xf] %vm1678, %v2312
        %2398 = vst.msk [vmem:[%s2385 + $0x30] sm:$0xf] %vm1678, %v2314
        %2399 = vst.msk [vmem:[%s2385 + $0x34] sm:$0xf] %vm1678, %v2316
        %2400 = vst.msk [vmem:[%s2385 + $0x38] sm:$0xf] %vm1678, %v2318
        %2401 = vst.msk [vmem:[%s2385 + $0x3c] sm:$0xf] %vm1678, %v2320
        %2402 = vst.msk [vmem:[%s2385 + $0x40] sm:$0xf] %vm1678, %v2322
        %2403 = vst.msk [vmem:[%s2385 + $0x44] sm:$0xf] %vm1678, %v2324
        %2404 = vst.msk [vmem:[%s2385 + $0x48] sm:$0xf] %vm1678, %v2326
        %2405 = vst.msk [vmem:[%s2385 + $0x4c] sm:$0xf] %vm1678, %v2328
        %2406 = vst.msk [vmem:[%s2385 + $0x50] sm:$0xf] %vm1678, %v2330
        %2407 = vst.msk [vmem:[%s2385 + $0x54] sm:$0xf] %vm1678, %v2332
        %2408 = vst.msk [vmem:[%s2385 + $0x58] sm:$0xf] %vm1678, %v2334
        %2409 = vst.msk [vmem:[%s2385 + $0x5c] sm:$0xf] %vm1678, %v2336
        %2410 = vst.msk [vmem:[%s2385 + $0x60] sm:$0xf] %vm1678, %v2338
        %2411 = vst.msk [vmem:[%s2385 + $0x64] sm:$0xf] %vm1678, %v2340
        %2412 = vst.msk [vmem:[%s2385 + $0x68] sm:$0xf] %vm1678, %v2342
        %2413 = vst.msk [vmem:[%s2385 + $0x6c] sm:$0xf] %vm1678, %v2344
        %2414 = vst.msk [vmem:[%s2385 + $0x70] sm:$0xf] %vm1678, %v2346
        %2415 = vst.msk [vmem:[%s2385 + $0x74] sm:$0xf] %vm1678, %v2348
        %2416 = vst.msk [vmem:[%s2385 + $0x78] sm:$0xf] %vm1678, %v2350
        %2417 = vst.msk [vmem:[%s2385 + $0x7c] sm:$0xf] %vm1678, %v2352
        %2418 = vrot.lane.b32.xlu0 %v1614, 64
        %v2419 = vpop.permute.xlu0 %2418
        %2420 = vrot.lane.b32.xlu0 %v1615, 64
        %v2421 = vpop.permute.xlu0 %2420
        %2422 = vrot.lane.b32.xlu0 %v1616, 64
        %v2423 = vpop.permute.xlu0 %2422
        %2424 = vrot.lane.b32.xlu0 %v1617, 64
        %v2425 = vpop.permute.xlu0 %2424
        %2426 = vrot.lane.b32.xlu0 %v1618, 64
        %v2427 = vpop.permute.xlu0 %2426
        %2428 = vrot.lane.b32.xlu0 %v1619, 64
        %v2429 = vpop.permute.xlu0 %2428
        %2430 = vrot.lane.b32.xlu0 %v1620, 64
        %v2431 = vpop.permute.xlu0 %2430
        %2432 = vrot.lane.b32.xlu0 %v1621, 64
        %v2433 = vpop.permute.xlu0 %2432
        %2434 = vrot.lane.b32.xlu0 %v1622, 64
        %v2435 = vpop.permute.xlu0 %2434
        %2436 = vrot.lane.b32.xlu0 %v1623, 64
        %v2437 = vpop.permute.xlu0 %2436
        %2438 = vrot.lane.b32.xlu0 %v1624, 64
        %v2439 = vpop.permute.xlu0 %2438
        %2440 = vrot.lane.b32.xlu0 %v1625, 64
        %v2441 = vpop.permute.xlu0 %2440
        %2442 = vrot.lane.b32.xlu0 %v1626, 64
        %v2443 = vpop.permute.xlu0 %2442
        %2444 = vrot.lane.b32.xlu0 %v1627, 64
        %v2445 = vpop.permute.xlu0 %2444
        %2446 = vrot.lane.b32.xlu0 %v1628, 64
        %v2447 = vpop.permute.xlu0 %2446
        %2448 = vrot.lane.b32.xlu0 %v1629, 64
        %v2449 = vpop.permute.xlu0 %2448
        %2450 = vrot.lane.b32.xlu0 %v1630, 64
        %v2451 = vpop.permute.xlu0 %2450
        %2452 = vrot.lane.b32.xlu0 %v1631, 64
        %v2453 = vpop.permute.xlu0 %2452
        %2454 = vrot.lane.b32.xlu0 %v1632, 64
        %v2455 = vpop.permute.xlu0 %2454
        %2456 = vrot.lane.b32.xlu0 %v1633, 64
        %v2457 = vpop.permute.xlu0 %2456
        %2458 = vrot.lane.b32.xlu0 %v1634, 64
        %v2459 = vpop.permute.xlu0 %2458
        %2460 = vrot.lane.b32.xlu0 %v1635, 64
        %v2461 = vpop.permute.xlu0 %2460
        %2462 = vrot.lane.b32.xlu0 %v1636, 64
        %v2463 = vpop.permute.xlu0 %2462
        %2464 = vrot.lane.b32.xlu0 %v1637, 64
        %v2465 = vpop.permute.xlu0 %2464
        %2466 = vrot.lane.b32.xlu0 %v1638, 64
        %v2467 = vpop.permute.xlu0 %2466
        %2468 = vrot.lane.b32.xlu0 %v1639, 64
        %v2469 = vpop.permute.xlu0 %2468
        %2470 = vrot.lane.b32.xlu0 %v1640, 64
        %v2471 = vpop.permute.xlu0 %2470
        %2472 = vrot.lane.b32.xlu0 %v1641, 64
        %v2473 = vpop.permute.xlu0 %2472
        %2474 = vrot.lane.b32.xlu0 %v1642, 64
        %v2475 = vpop.permute.xlu0 %2474
        %2476 = vrot.lane.b32.xlu0 %v1643, 64
        %v2477 = vpop.permute.xlu0 %2476
        %2478 = vrot.lane.b32.xlu0 %v1644, 64
        %v2479 = vpop.permute.xlu0 %2478
        %2480 = vrot.lane.b32.xlu0 %v1645, 64
        %v2481 = vpop.permute.xlu0 %2480
        %s2514 = scalar_lea.vmem %s345, 256 [#allocation8]
        %2515 = vst.msk [vmem:[%s2514] sm:$0xf] %vm1678, %v2419
        %2516 = vst.msk [vmem:[%s2514 + $0x4] sm:$0xf] %vm1678, %v2421
        %2517 = vst.msk [vmem:[%s2514 + $0x8] sm:$0xf] %vm1678, %v2423
        %2518 = vst.msk [vmem:[%s2514 + $0xc] sm:$0xf] %vm1678, %v2425
        %2519 = vst.msk [vmem:[%s2514 + $0x10] sm:$0xf] %vm1678, %v2427
        %2520 = vst.msk [vmem:[%s2514 + $0x14] sm:$0xf] %vm1678, %v2429
        %2521 = vst.msk [vmem:[%s2514 + $0x18] sm:$0xf] %vm1678, %v2431
        %2522 = vst.msk [vmem:[%s2514 + $0x1c] sm:$0xf] %vm1678, %v2433
        %2523 = vst.msk [vmem:[%s2514 + $0x20] sm:$0xf] %vm1678, %v2435
        %2524 = vst.msk [vmem:[%s2514 + $0x24] sm:$0xf] %vm1678, %v2437
        %2525 = vst.msk [vmem:[%s2514 + $0x28] sm:$0xf] %vm1678, %v2439
        %2526 = vst.msk [vmem:[%s2514 + $0x2c] sm:$0xf] %vm1678, %v2441
        %2527 = vst.msk [vmem:[%s2514 + $0x30] sm:$0xf] %vm1678, %v2443
        %2528 = vst.msk [vmem:[%s2514 + $0x34] sm:$0xf] %vm1678, %v2445
        %2529 = vst.msk [vmem:[%s2514 + $0x38] sm:$0xf] %vm1678, %v2447
        %2530 = vst.msk [vmem:[%s2514 + $0x3c] sm:$0xf] %vm1678, %v2449
        %2531 = vst.msk [vmem:[%s2514 + $0x40] sm:$0xf] %vm1678, %v2451
        %2532 = vst.msk [vmem:[%s2514 + $0x44] sm:$0xf] %vm1678, %v2453
        %2533 = vst.msk [vmem:[%s2514 + $0x48] sm:$0xf] %vm1678, %v2455
        %2534 = vst.msk [vmem:[%s2514 + $0x4c] sm:$0xf] %vm1678, %v2457
        %2535 = vst.msk [vmem:[%s2514 + $0x50] sm:$0xf] %vm1678, %v2459
        %2536 = vst.msk [vmem:[%s2514 + $0x54] sm:$0xf] %vm1678, %v2461
        %2537 = vst.msk [vmem:[%s2514 + $0x58] sm:$0xf] %vm1678, %v2463
        %2538 = vst.msk [vmem:[%s2514 + $0x5c] sm:$0xf] %vm1678, %v2465
        %2539 = vst.msk [vmem:[%s2514 + $0x60] sm:$0xf] %vm1678, %v2467
        %2540 = vst.msk [vmem:[%s2514 + $0x64] sm:$0xf] %vm1678, %v2469
        %2541 = vst.msk [vmem:[%s2514 + $0x68] sm:$0xf] %vm1678, %v2471
        %2542 = vst.msk [vmem:[%s2514 + $0x6c] sm:$0xf] %vm1678, %v2473
        %2543 = vst.msk [vmem:[%s2514 + $0x70] sm:$0xf] %vm1678, %v2475
        %2544 = vst.msk [vmem:[%s2514 + $0x74] sm:$0xf] %vm1678, %v2477
        %2545 = vst.msk [vmem:[%s2514 + $0x78] sm:$0xf] %vm1678, %v2479
        %2546 = vst.msk [vmem:[%s2514 + $0x7c] sm:$0xf] %vm1678, %v2481
        %2547 = vrot.lane.b32.xlu0 %v1775, 64
        %v2548 = vpop.permute.xlu0 %2547
        %2549 = vrot.lane.b32.xlu0 %v1776, 64
        %v2550 = vpop.permute.xlu0 %2549
        %2551 = vrot.lane.b32.xlu0 %v1777, 64
        %v2552 = vpop.permute.xlu0 %2551
        %2553 = vrot.lane.b32.xlu0 %v1778, 64
        %v2554 = vpop.permute.xlu0 %2553
        %2555 = vrot.lane.b32.xlu0 %v1779, 64
        %v2556 = vpop.permute.xlu0 %2555
        %2557 = vrot.lane.b32.xlu0 %v1780, 64
        %v2558 = vpop.permute.xlu0 %2557
        %2559 = vrot.lane.b32.xlu0 %v1781, 64
        %v2560 = vpop.permute.xlu0 %2559
        %2561 = vrot.lane.b32.xlu0 %v1782, 64
        %v2562 = vpop.permute.xlu0 %2561
        %2563 = vrot.lane.b32.xlu0 %v1783, 64
        %v2564 = vpop.permute.xlu0 %2563
        %2565 = vrot.lane.b32.xlu0 %v1784, 64
        %v2566 = vpop.permute.xlu0 %2565
        %2567 = vrot.lane.b32.xlu0 %v1785, 64
        %v2568 = vpop.permute.xlu0 %2567
        %2569 = vrot.lane.b32.xlu0 %v1786, 64
        %v2570 = vpop.permute.xlu0 %2569
        %2571 = vrot.lane.b32.xlu0 %v1787, 64
        %v2572 = vpop.permute.xlu0 %2571
        %2573 = vrot.lane.b32.xlu0 %v1788, 64
        %v2574 = vpop.permute.xlu0 %2573
        %2575 = vrot.lane.b32.xlu0 %v1789, 64
        %v2576 = vpop.permute.xlu0 %2575
        %2577 = vrot.lane.b32.xlu0 %v1790, 64
        %v2578 = vpop.permute.xlu0 %2577
        %2579 = vrot.lane.b32.xlu0 %v1791, 64
        %v2580 = vpop.permute.xlu0 %2579
        %2581 = vrot.lane.b32.xlu0 %v1792, 64
        %v2582 = vpop.permute.xlu0 %2581
        %2583 = vrot.lane.b32.xlu0 %v1793, 64
        %v2584 = vpop.permute.xlu0 %2583
        %2585 = vrot.lane.b32.xlu0 %v1794, 64
        %v2586 = vpop.permute.xlu0 %2585
        %2587 = vrot.lane.b32.xlu0 %v1795, 64
        %v2588 = vpop.permute.xlu0 %2587
        %2589 = vrot.lane.b32.xlu0 %v1796, 64
        %v2590 = vpop.permute.xlu0 %2589
        %2591 = vrot.lane.b32.xlu0 %v1797, 64
        %v2592 = vpop.permute.xlu0 %2591
        %2593 = vrot.lane.b32.xlu0 %v1798, 64
        %v2594 = vpop.permute.xlu0 %2593
        %2595 = vrot.lane.b32.xlu0 %v1799, 64
        %v2596 = vpop.permute.xlu0 %2595
        %2597 = vrot.lane.b32.xlu0 %v1800, 64
        %v2598 = vpop.permute.xlu0 %2597
        %2599 = vrot.lane.b32.xlu0 %v1801, 64
        %v2600 = vpop.permute.xlu0 %2599
        %2601 = vrot.lane.b32.xlu0 %v1802, 64
        %v2602 = vpop.permute.xlu0 %2601
        %2603 = vrot.lane.b32.xlu0 %v1803, 64
        %v2604 = vpop.permute.xlu0 %2603
        %2605 = vrot.lane.b32.xlu0 %v1804, 64
        %v2606 = vpop.permute.xlu0 %2605
        %2607 = vrot.lane.b32.xlu0 %v1805, 64
        %v2608 = vpop.permute.xlu0 %2607
        %2609 = vrot.lane.b32.xlu0 %v1806, 64
        %v2610 = vpop.permute.xlu0 %2609
        %s2643 = scalar_lea.vmem %s351, 256 [#allocation9]
        %2644 = vst.msk [vmem:[%s2643] sm:$0xf] %vm1678, %v2548
        %2645 = vst.msk [vmem:[%s2643 + $0x4] sm:$0xf] %vm1678, %v2550
        %2646 = vst.msk [vmem:[%s2643 + $0x8] sm:$0xf] %vm1678, %v2552
        %2647 = vst.msk [vmem:[%s2643 + $0xc] sm:$0xf] %vm1678, %v2554
        %2648 = vst.msk [vmem:[%s2643 + $0x10] sm:$0xf] %vm1678, %v2556
        %2649 = vst.msk [vmem:[%s2643 + $0x14] sm:$0xf] %vm1678, %v2558
        %2650 = vst.msk [vmem:[%s2643 + $0x18] sm:$0xf] %vm1678, %v2560
        %2651 = vst.msk [vmem:[%s2643 + $0x1c] sm:$0xf] %vm1678, %v2562
        %2652 = vst.msk [vmem:[%s2643 + $0x20] sm:$0xf] %vm1678, %v2564
        %2653 = vst.msk [vmem:[%s2643 + $0x24] sm:$0xf] %vm1678, %v2566
        %2654 = vst.msk [vmem:[%s2643 + $0x28] sm:$0xf] %vm1678, %v2568
        %2655 = vst.msk [vmem:[%s2643 + $0x2c] sm:$0xf] %vm1678, %v2570
        %2656 = vst.msk [vmem:[%s2643 + $0x30] sm:$0xf] %vm1678, %v2572
        %2657 = vst.msk [vmem:[%s2643 + $0x34] sm:$0xf] %vm1678, %v2574
        %2658 = vst.msk [vmem:[%s2643 + $0x38] sm:$0xf] %vm1678, %v2576
        %2659 = vst.msk [vmem:[%s2643 + $0x3c] sm:$0xf] %vm1678, %v2578
        %2660 = vst.msk [vmem:[%s2643 + $0x40] sm:$0xf] %vm1678, %v2580
        %2661 = vst.msk [vmem:[%s2643 + $0x44] sm:$0xf] %vm1678, %v2582
        %2662 = vst.msk [vmem:[%s2643 + $0x48] sm:$0xf] %vm1678, %v2584
        %2663 = vst.msk [vmem:[%s2643 + $0x4c] sm:$0xf] %vm1678, %v2586
        %2664 = vst.msk [vmem:[%s2643 + $0x50] sm:$0xf] %vm1678, %v2588
        %2665 = vst.msk [vmem:[%s2643 + $0x54] sm:$0xf] %vm1678, %v2590
        %2666 = vst.msk [vmem:[%s2643 + $0x58] sm:$0xf] %vm1678, %v2592
        %2667 = vst.msk [vmem:[%s2643 + $0x5c] sm:$0xf] %vm1678, %v2594
        %2668 = vst.msk [vmem:[%s2643 + $0x60] sm:$0xf] %vm1678, %v2596
        %2669 = vst.msk [vmem:[%s2643 + $0x64] sm:$0xf] %vm1678, %v2598
        %2670 = vst.msk [vmem:[%s2643 + $0x68] sm:$0xf] %vm1678, %v2600
        %2671 = vst.msk [vmem:[%s2643 + $0x6c] sm:$0xf] %vm1678, %v2602
        %2672 = vst.msk [vmem:[%s2643 + $0x70] sm:$0xf] %vm1678, %v2604
        %2673 = vst.msk [vmem:[%s2643 + $0x74] sm:$0xf] %vm1678, %v2606
        %2674 = vst.msk [vmem:[%s2643 + $0x78] sm:$0xf] %vm1678, %v2608
        %2675 = vst.msk [vmem:[%s2643 + $0x7c] sm:$0xf] %vm1678, %v2610
        %2676 = vrot.lane.b32.xlu0 %v1935, 64
        %v2677 = vpop.permute.xlu0 %2676
        %2678 = vrot.lane.b32.xlu0 %v1936, 64
        %v2679 = vpop.permute.xlu0 %2678
        %2680 = vrot.lane.b32.xlu0 %v1937, 64
        %v2681 = vpop.permute.xlu0 %2680
        %2682 = vrot.lane.b32.xlu0 %v1938, 64
        %v2683 = vpop.permute.xlu0 %2682
        %2684 = vrot.lane.b32.xlu0 %v1939, 64
        %v2685 = vpop.permute.xlu0 %2684
        %2686 = vrot.lane.b32.xlu0 %v1940, 64
        %v2687 = vpop.permute.xlu0 %2686
        %2688 = vrot.lane.b32.xlu0 %v1941, 64
        %v2689 = vpop.permute.xlu0 %2688
        %2690 = vrot.lane.b32.xlu0 %v1942, 64
        %v2691 = vpop.permute.xlu0 %2690
        %2692 = vrot.lane.b32.xlu0 %v1943, 64
        %v2693 = vpop.permute.xlu0 %2692
        %2694 = vrot.lane.b32.xlu0 %v1944, 64
        %v2695 = vpop.permute.xlu0 %2694
        %2696 = vrot.lane.b32.xlu0 %v1945, 64
        %v2697 = vpop.permute.xlu0 %2696
        %2698 = vrot.lane.b32.xlu0 %v1946, 64
        %v2699 = vpop.permute.xlu0 %2698
        %2700 = vrot.lane.b32.xlu0 %v1947, 64
        %v2701 = vpop.permute.xlu0 %2700
        %2702 = vrot.lane.b32.xlu0 %v1948, 64
        %v2703 = vpop.permute.xlu0 %2702
        %2704 = vrot.lane.b32.xlu0 %v1949, 64
        %v2705 = vpop.permute.xlu0 %2704
        %2706 = vrot.lane.b32.xlu0 %v1950, 64
        %v2707 = vpop.permute.xlu0 %2706
        %2708 = vrot.lane.b32.xlu0 %v1951, 64
        %v2709 = vpop.permute.xlu0 %2708
        %2710 = vrot.lane.b32.xlu0 %v1952, 64
        %v2711 = vpop.permute.xlu0 %2710
        %2712 = vrot.lane.b32.xlu0 %v1953, 64
        %v2713 = vpop.permute.xlu0 %2712
        %2714 = vrot.lane.b32.xlu0 %v1954, 64
        %v2715 = vpop.permute.xlu0 %2714
        %2716 = vrot.lane.b32.xlu0 %v1955, 64
        %v2717 = vpop.permute.xlu0 %2716
        %2718 = vrot.lane.b32.xlu0 %v1956, 64
        %v2719 = vpop.permute.xlu0 %2718
        %2720 = vrot.lane.b32.xlu0 %v1957, 64
        %v2721 = vpop.permute.xlu0 %2720
        %2722 = vrot.lane.b32.xlu0 %v1958, 64
        %v2723 = vpop.permute.xlu0 %2722
        %2724 = vrot.lane.b32.xlu0 %v1959, 64
        %v2725 = vpop.permute.xlu0 %2724
        %2726 = vrot.lane.b32.xlu0 %v1960, 64
        %v2727 = vpop.permute.xlu0 %2726
        %2728 = vrot.lane.b32.xlu0 %v1961, 64
        %v2729 = vpop.permute.xlu0 %2728
        %2730 = vrot.lane.b32.xlu0 %v1962, 64
        %v2731 = vpop.permute.xlu0 %2730
        %2732 = vrot.lane.b32.xlu0 %v1963, 64
        %v2733 = vpop.permute.xlu0 %2732
        %2734 = vrot.lane.b32.xlu0 %v1964, 64
        %v2735 = vpop.permute.xlu0 %2734
        %2736 = vrot.lane.b32.xlu0 %v1965, 64
        %v2737 = vpop.permute.xlu0 %2736
        %2738 = vrot.lane.b32.xlu0 %v1966, 64
        %v2739 = vpop.permute.xlu0 %2738
        %s2772 = scalar_lea.vmem %s357, 256 [#allocation10]
        %2773 = vst.msk [vmem:[%s2772] sm:$0xf] %vm1678, %v2677
        %2774 = vst.msk [vmem:[%s2772 + $0x4] sm:$0xf] %vm1678, %v2679
        %2775 = vst.msk [vmem:[%s2772 + $0x8] sm:$0xf] %vm1678, %v2681
        %2776 = vst.msk [vmem:[%s2772 + $0xc] sm:$0xf] %vm1678, %v2683
        %2777 = vst.msk [vmem:[%s2772 + $0x10] sm:$0xf] %vm1678, %v2685
        %2778 = vst.msk [vmem:[%s2772 + $0x14] sm:$0xf] %vm1678, %v2687
        %2779 = vst.msk [vmem:[%s2772 + $0x18] sm:$0xf] %vm1678, %v2689
        %2780 = vst.msk [vmem:[%s2772 + $0x1c] sm:$0xf] %vm1678, %v2691
        %2781 = vst.msk [vmem:[%s2772 + $0x20] sm:$0xf] %vm1678, %v2693
        %2782 = vst.msk [vmem:[%s2772 + $0x24] sm:$0xf] %vm1678, %v2695
        %2783 = vst.msk [vmem:[%s2772 + $0x28] sm:$0xf] %vm1678, %v2697
        %2784 = vst.msk [vmem:[%s2772 + $0x2c] sm:$0xf] %vm1678, %v2699
        %2785 = vst.msk [vmem:[%s2772 + $0x30] sm:$0xf] %vm1678, %v2701
        %2786 = vst.msk [vmem:[%s2772 + $0x34] sm:$0xf] %vm1678, %v2703
        %2787 = vst.msk [vmem:[%s2772 + $0x38] sm:$0xf] %vm1678, %v2705
        %2788 = vst.msk [vmem:[%s2772 + $0x3c] sm:$0xf] %vm1678, %v2707
        %2789 = vst.msk [vmem:[%s2772 + $0x40] sm:$0xf] %vm1678, %v2709
        %2790 = vst.msk [vmem:[%s2772 + $0x44] sm:$0xf] %vm1678, %v2711
        %2791 = vst.msk [vmem:[%s2772 + $0x48] sm:$0xf] %vm1678, %v2713
        %2792 = vst.msk [vmem:[%s2772 + $0x4c] sm:$0xf] %vm1678, %v2715
        %2793 = vst.msk [vmem:[%s2772 + $0x50] sm:$0xf] %vm1678, %v2717
        %2794 = vst.msk [vmem:[%s2772 + $0x54] sm:$0xf] %vm1678, %v2719
        %2795 = vst.msk [vmem:[%s2772 + $0x58] sm:$0xf] %vm1678, %v2721
        %2796 = vst.msk [vmem:[%s2772 + $0x5c] sm:$0xf] %vm1678, %v2723
        %2797 = vst.msk [vmem:[%s2772 + $0x60] sm:$0xf] %vm1678, %v2725
        %2798 = vst.msk [vmem:[%s2772 + $0x64] sm:$0xf] %vm1678, %v2727
        %2799 = vst.msk [vmem:[%s2772 + $0x68] sm:$0xf] %vm1678, %v2729
        %2800 = vst.msk [vmem:[%s2772 + $0x6c] sm:$0xf] %vm1678, %v2731
        %2801 = vst.msk [vmem:[%s2772 + $0x70] sm:$0xf] %vm1678, %v2733
        %2802 = vst.msk [vmem:[%s2772 + $0x74] sm:$0xf] %vm1678, %v2735
        %2803 = vst.msk [vmem:[%s2772 + $0x78] sm:$0xf] %vm1678, %v2737
        %2804 = vst.msk [vmem:[%s2772 + $0x7c] sm:$0xf] %vm1678, %v2739
        %2805 = vrot.lane.b32.xlu0 %v1614, 32
        %v2806 = vpop.permute.xlu0 %2805
        %2807 = vrot.lane.b32.xlu0 %v1615, 32
        %v2808 = vpop.permute.xlu0 %2807
        %2809 = vrot.lane.b32.xlu0 %v1616, 32
        %v2810 = vpop.permute.xlu0 %2809
        %2811 = vrot.lane.b32.xlu0 %v1617, 32
        %v2812 = vpop.permute.xlu0 %2811
        %2813 = vrot.lane.b32.xlu0 %v1618, 32
        %v2814 = vpop.permute.xlu0 %2813
        %2815 = vrot.lane.b32.xlu0 %v1619, 32
        %v2816 = vpop.permute.xlu0 %2815
        %2817 = vrot.lane.b32.xlu0 %v1620, 32
        %v2818 = vpop.permute.xlu0 %2817
        %2819 = vrot.lane.b32.xlu0 %v1621, 32
        %v2820 = vpop.permute.xlu0 %2819
        %2821 = vrot.lane.b32.xlu0 %v1622, 32
        %v2822 = vpop.permute.xlu0 %2821
        %2823 = vrot.lane.b32.xlu0 %v1623, 32
        %v2824 = vpop.permute.xlu0 %2823
        %2825 = vrot.lane.b32.xlu0 %v1624, 32
        %v2826 = vpop.permute.xlu0 %2825
        %2827 = vrot.lane.b32.xlu0 %v1625, 32
        %v2828 = vpop.permute.xlu0 %2827
        %2829 = vrot.lane.b32.xlu0 %v1626, 32
        %v2830 = vpop.permute.xlu0 %2829
        %2831 = vrot.lane.b32.xlu0 %v1627, 32
        %v2832 = vpop.permute.xlu0 %2831
        %2833 = vrot.lane.b32.xlu0 %v1628, 32
        %v2834 = vpop.permute.xlu0 %2833
        %2835 = vrot.lane.b32.xlu0 %v1629, 32
        %v2836 = vpop.permute.xlu0 %2835
        %2837 = vrot.lane.b32.xlu0 %v1630, 32
        %v2838 = vpop.permute.xlu0 %2837
        %2839 = vrot.lane.b32.xlu0 %v1631, 32
        %v2840 = vpop.permute.xlu0 %2839
        %2841 = vrot.lane.b32.xlu0 %v1632, 32
        %v2842 = vpop.permute.xlu0 %2841
        %2843 = vrot.lane.b32.xlu0 %v1633, 32
        %v2844 = vpop.permute.xlu0 %2843
        %2845 = vrot.lane.b32.xlu0 %v1634, 32
        %v2846 = vpop.permute.xlu0 %2845
        %2847 = vrot.lane.b32.xlu0 %v1635, 32
        %v2848 = vpop.permute.xlu0 %2847
        %2849 = vrot.lane.b32.xlu0 %v1636, 32
        %v2850 = vpop.permute.xlu0 %2849
        %2851 = vrot.lane.b32.xlu0 %v1637, 32
        %v2852 = vpop.permute.xlu0 %2851
        %2853 = vrot.lane.b32.xlu0 %v1638, 32
        %v2854 = vpop.permute.xlu0 %2853
        %2855 = vrot.lane.b32.xlu0 %v1639, 32
        %v2856 = vpop.permute.xlu0 %2855
        %2857 = vrot.lane.b32.xlu0 %v1640, 32
        %v2858 = vpop.permute.xlu0 %2857
        %2859 = vrot.lane.b32.xlu0 %v1641, 32
        %v2860 = vpop.permute.xlu0 %2859
        %2861 = vrot.lane.b32.xlu0 %v1642, 32
        %v2862 = vpop.permute.xlu0 %2861
        %2863 = vrot.lane.b32.xlu0 %v1643, 32
        %v2864 = vpop.permute.xlu0 %2863
        %2865 = vrot.lane.b32.xlu0 %v1644, 32
        %v2866 = vpop.permute.xlu0 %2865
        %2867 = vrot.lane.b32.xlu0 %v1645, 32
        %v2868 = vpop.permute.xlu0 %2867
        %s2901 = scalar_lea.vmem %s345, 384 [#allocation8]
        %2902 = vst.msk [vmem:[%s2901] sm:$0xf] %vm1678, %v2806
        %2903 = vst.msk [vmem:[%s2901 + $0x4] sm:$0xf] %vm1678, %v2808
        %2904 = vst.msk [vmem:[%s2901 + $0x8] sm:$0xf] %vm1678, %v2810
        %2905 = vst.msk [vmem:[%s2901 + $0xc] sm:$0xf] %vm1678, %v2812
        %2906 = vst.msk [vmem:[%s2901 + $0x10] sm:$0xf] %vm1678, %v2814
        %2907 = vst.msk [vmem:[%s2901 + $0x14] sm:$0xf] %vm1678, %v2816
        %2908 = vst.msk [vmem:[%s2901 + $0x18] sm:$0xf] %vm1678, %v2818
        %2909 = vst.msk [vmem:[%s2901 + $0x1c] sm:$0xf] %vm1678, %v2820
        %2910 = vst.msk [vmem:[%s2901 + $0x20] sm:$0xf] %vm1678, %v2822
        %2911 = vst.msk [vmem:[%s2901 + $0x24] sm:$0xf] %vm1678, %v2824
        %2912 = vst.msk [vmem:[%s2901 + $0x28] sm:$0xf] %vm1678, %v2826
        %2913 = vst.msk [vmem:[%s2901 + $0x2c] sm:$0xf] %vm1678, %v2828
        %2914 = vst.msk [vmem:[%s2901 + $0x30] sm:$0xf] %vm1678, %v2830
        %2915 = vst.msk [vmem:[%s2901 + $0x34] sm:$0xf] %vm1678, %v2832
        %2916 = vst.msk [vmem:[%s2901 + $0x38] sm:$0xf] %vm1678, %v2834
        %2917 = vst.msk [vmem:[%s2901 + $0x3c] sm:$0xf] %vm1678, %v2836
        %2918 = vst.msk [vmem:[%s2901 + $0x40] sm:$0xf] %vm1678, %v2838
        %2919 = vst.msk [vmem:[%s2901 + $0x44] sm:$0xf] %vm1678, %v2840
        %2920 = vst.msk [vmem:[%s2901 + $0x48] sm:$0xf] %vm1678, %v2842
        %2921 = vst.msk [vmem:[%s2901 + $0x4c] sm:$0xf] %vm1678, %v2844
        %2922 = vst.msk [vmem:[%s2901 + $0x50] sm:$0xf] %vm1678, %v2846
        %2923 = vst.msk [vmem:[%s2901 + $0x54] sm:$0xf] %vm1678, %v2848
        %2924 = vst.msk [vmem:[%s2901 + $0x58] sm:$0xf] %vm1678, %v2850
        %2925 = vst.msk [vmem:[%s2901 + $0x5c] sm:$0xf] %vm1678, %v2852
        %2926 = vst.msk [vmem:[%s2901 + $0x60] sm:$0xf] %vm1678, %v2854
        %2927 = vst.msk [vmem:[%s2901 + $0x64] sm:$0xf] %vm1678, %v2856
        %2928 = vst.msk [vmem:[%s2901 + $0x68] sm:$0xf] %vm1678, %v2858
        %2929 = vst.msk [vmem:[%s2901 + $0x6c] sm:$0xf] %vm1678, %v2860
        %2930 = vst.msk [vmem:[%s2901 + $0x70] sm:$0xf] %vm1678, %v2862
        %2931 = vst.msk [vmem:[%s2901 + $0x74] sm:$0xf] %vm1678, %v2864
        %2932 = vst.msk [vmem:[%s2901 + $0x78] sm:$0xf] %vm1678, %v2866
        %2933 = vst.msk [vmem:[%s2901 + $0x7c] sm:$0xf] %vm1678, %v2868
        %2934 = vrot.lane.b32.xlu0 %v1775, 32
        %v2935 = vpop.permute.xlu0 %2934
        %2936 = vrot.lane.b32.xlu0 %v1776, 32
        %v2937 = vpop.permute.xlu0 %2936
        %2938 = vrot.lane.b32.xlu0 %v1777, 32
        %v2939 = vpop.permute.xlu0 %2938
        %2940 = vrot.lane.b32.xlu0 %v1778, 32
        %v2941 = vpop.permute.xlu0 %2940
        %2942 = vrot.lane.b32.xlu0 %v1779, 32
        %v2943 = vpop.permute.xlu0 %2942
        %2944 = vrot.lane.b32.xlu0 %v1780, 32
        %v2945 = vpop.permute.xlu0 %2944
        %2946 = vrot.lane.b32.xlu0 %v1781, 32
        %v2947 = vpop.permute.xlu0 %2946
        %2948 = vrot.lane.b32.xlu0 %v1782, 32
        %v2949 = vpop.permute.xlu0 %2948
        %2950 = vrot.lane.b32.xlu0 %v1783, 32
        %v2951 = vpop.permute.xlu0 %2950
        %2952 = vrot.lane.b32.xlu0 %v1784, 32
        %v2953 = vpop.permute.xlu0 %2952
        %2954 = vrot.lane.b32.xlu0 %v1785, 32
        %v2955 = vpop.permute.xlu0 %2954
        %2956 = vrot.lane.b32.xlu0 %v1786, 32
        %v2957 = vpop.permute.xlu0 %2956
        %2958 = vrot.lane.b32.xlu0 %v1787, 32
        %v2959 = vpop.permute.xlu0 %2958
        %2960 = vrot.lane.b32.xlu0 %v1788, 32
        %v2961 = vpop.permute.xlu0 %2960
        %2962 = vrot.lane.b32.xlu0 %v1789, 32
        %v2963 = vpop.permute.xlu0 %2962
        %2964 = vrot.lane.b32.xlu0 %v1790, 32
        %v2965 = vpop.permute.xlu0 %2964
        %2966 = vrot.lane.b32.xlu0 %v1791, 32
        %v2967 = vpop.permute.xlu0 %2966
        %2968 = vrot.lane.b32.xlu0 %v1792, 32
        %v2969 = vpop.permute.xlu0 %2968
        %2970 = vrot.lane.b32.xlu0 %v1793, 32
        %v2971 = vpop.permute.xlu0 %2970
        %2972 = vrot.lane.b32.xlu0 %v1794, 32
        %v2973 = vpop.permute.xlu0 %2972
        %2974 = vrot.lane.b32.xlu0 %v1795, 32
        %v2975 = vpop.permute.xlu0 %2974
        %2976 = vrot.lane.b32.xlu0 %v1796, 32
        %v2977 = vpop.permute.xlu0 %2976
        %2978 = vrot.lane.b32.xlu0 %v1797, 32
        %v2979 = vpop.permute.xlu0 %2978
        %2980 = vrot.lane.b32.xlu0 %v1798, 32
        %v2981 = vpop.permute.xlu0 %2980
        %2982 = vrot.lane.b32.xlu0 %v1799, 32
        %v2983 = vpop.permute.xlu0 %2982
        %2984 = vrot.lane.b32.xlu0 %v1800, 32
        %v2985 = vpop.permute.xlu0 %2984
        %2986 = vrot.lane.b32.xlu0 %v1801, 32
        %v2987 = vpop.permute.xlu0 %2986
        %2988 = vrot.lane.b32.xlu0 %v1802, 32
        %v2989 = vpop.permute.xlu0 %2988
        %2990 = vrot.lane.b32.xlu0 %v1803, 32
        %v2991 = vpop.permute.xlu0 %2990
        %2992 = vrot.lane.b32.xlu0 %v1804, 32
        %v2993 = vpop.permute.xlu0 %2992
        %2994 = vrot.lane.b32.xlu0 %v1805, 32
        %v2995 = vpop.permute.xlu0 %2994
        %2996 = vrot.lane.b32.xlu0 %v1806, 32
        %v2997 = vpop.permute.xlu0 %2996
        %s3030 = scalar_lea.vmem %s351, 384 [#allocation9]
        %3031 = vst.msk [vmem:[%s3030] sm:$0xf] %vm1678, %v2935
        %3032 = vst.msk [vmem:[%s3030 + $0x4] sm:$0xf] %vm1678, %v2937
        %3033 = vst.msk [vmem:[%s3030 + $0x8] sm:$0xf] %vm1678, %v2939
        %3034 = vst.msk [vmem:[%s3030 + $0xc] sm:$0xf] %vm1678, %v2941
        %3035 = vst.msk [vmem:[%s3030 + $0x10] sm:$0xf] %vm1678, %v2943
        %3036 = vst.msk [vmem:[%s3030 + $0x14] sm:$0xf] %vm1678, %v2945
        %3037 = vst.msk [vmem:[%s3030 + $0x18] sm:$0xf] %vm1678, %v2947
        %3038 = vst.msk [vmem:[%s3030 + $0x1c] sm:$0xf] %vm1678, %v2949
        %3039 = vst.msk [vmem:[%s3030 + $0x20] sm:$0xf] %vm1678, %v2951
        %3040 = vst.msk [vmem:[%s3030 + $0x24] sm:$0xf] %vm1678, %v2953
        %3041 = vst.msk [vmem:[%s3030 + $0x28] sm:$0xf] %vm1678, %v2955
        %3042 = vst.msk [vmem:[%s3030 + $0x2c] sm:$0xf] %vm1678, %v2957
        %3043 = vst.msk [vmem:[%s3030 + $0x30] sm:$0xf] %vm1678, %v2959
        %3044 = vst.msk [vmem:[%s3030 + $0x34] sm:$0xf] %vm1678, %v2961
        %3045 = vst.msk [vmem:[%s3030 + $0x38] sm:$0xf] %vm1678, %v2963
        %3046 = vst.msk [vmem:[%s3030 + $0x3c] sm:$0xf] %vm1678, %v2965
        %3047 = vst.msk [vmem:[%s3030 + $0x40] sm:$0xf] %vm1678, %v2967
        %3048 = vst.msk [vmem:[%s3030 + $0x44] sm:$0xf] %vm1678, %v2969
        %3049 = vst.msk [vmem:[%s3030 + $0x48] sm:$0xf] %vm1678, %v2971
        %3050 = vst.msk [vmem:[%s3030 + $0x4c] sm:$0xf] %vm1678, %v2973
        %3051 = vst.msk [vmem:[%s3030 + $0x50] sm:$0xf] %vm1678, %v2975
        %3052 = vst.msk [vmem:[%s3030 + $0x54] sm:$0xf] %vm1678, %v2977
        %3053 = vst.msk [vmem:[%s3030 + $0x58] sm:$0xf] %vm1678, %v2979
        %3054 = vst.msk [vmem:[%s3030 + $0x5c] sm:$0xf] %vm1678, %v2981
        %3055 = vst.msk [vmem:[%s3030 + $0x60] sm:$0xf] %vm1678, %v2983
        %3056 = vst.msk [vmem:[%s3030 + $0x64] sm:$0xf] %vm1678, %v2985
        %3057 = vst.msk [vmem:[%s3030 + $0x68] sm:$0xf] %vm1678, %v2987
        %3058 = vst.msk [vmem:[%s3030 + $0x6c] sm:$0xf] %vm1678, %v2989
        %3059 = vst.msk [vmem:[%s3030 + $0x70] sm:$0xf] %vm1678, %v2991
        %3060 = vst.msk [vmem:[%s3030 + $0x74] sm:$0xf] %vm1678, %v2993
        %3061 = vst.msk [vmem:[%s3030 + $0x78] sm:$0xf] %vm1678, %v2995
        %3062 = vst.msk [vmem:[%s3030 + $0x7c] sm:$0xf] %vm1678, %v2997
        %3063 = vrot.lane.b32.xlu0 %v1935, 32
        %v3064 = vpop.permute.xlu0 %3063
        %3065 = vrot.lane.b32.xlu0 %v1936, 32
        %v3066 = vpop.permute.xlu0 %3065
        %3067 = vrot.lane.b32.xlu0 %v1937, 32
        %v3068 = vpop.permute.xlu0 %3067
        %3069 = vrot.lane.b32.xlu0 %v1938, 32
        %v3070 = vpop.permute.xlu0 %3069
        %3071 = vrot.lane.b32.xlu0 %v1939, 32
        %v3072 = vpop.permute.xlu0 %3071
        %3073 = vrot.lane.b32.xlu0 %v1940, 32
        %v3074 = vpop.permute.xlu0 %3073
        %3075 = vrot.lane.b32.xlu0 %v1941, 32
        %v3076 = vpop.permute.xlu0 %3075
        %3077 = vrot.lane.b32.xlu0 %v1942, 32
        %v3078 = vpop.permute.xlu0 %3077
        %3079 = vrot.lane.b32.xlu0 %v1943, 32
        %v3080 = vpop.permute.xlu0 %3079
        %3081 = vrot.lane.b32.xlu0 %v1944, 32
        %v3082 = vpop.permute.xlu0 %3081
        %3083 = vrot.lane.b32.xlu0 %v1945, 32
        %v3084 = vpop.permute.xlu0 %3083
        %3085 = vrot.lane.b32.xlu0 %v1946, 32
        %v3086 = vpop.permute.xlu0 %3085
        %3087 = vrot.lane.b32.xlu0 %v1947, 32
        %v3088 = vpop.permute.xlu0 %3087
        %3089 = vrot.lane.b32.xlu0 %v1948, 32
        %v3090 = vpop.permute.xlu0 %3089
        %3091 = vrot.lane.b32.xlu0 %v1949, 32
        %v3092 = vpop.permute.xlu0 %3091
        %3093 = vrot.lane.b32.xlu0 %v1950, 32
        %v3094 = vpop.permute.xlu0 %3093
        %3095 = vrot.lane.b32.xlu0 %v1951, 32
        %v3096 = vpop.permute.xlu0 %3095
        %3097 = vrot.lane.b32.xlu0 %v1952, 32
        %v3098 = vpop.permute.xlu0 %3097
        %3099 = vrot.lane.b32.xlu0 %v1953, 32
        %v3100 = vpop.permute.xlu0 %3099
        %3101 = vrot.lane.b32.xlu0 %v1954, 32
        %v3102 = vpop.permute.xlu0 %3101
        %3103 = vrot.lane.b32.xlu0 %v1955, 32
        %v3104 = vpop.permute.xlu0 %3103
        %3105 = vrot.lane.b32.xlu0 %v1956, 32
        %v3106 = vpop.permute.xlu0 %3105
        %3107 = vrot.lane.b32.xlu0 %v1957, 32
        %v3108 = vpop.permute.xlu0 %3107
        %3109 = vrot.lane.b32.xlu0 %v1958, 32
        %v3110 = vpop.permute.xlu0 %3109
        %3111 = vrot.lane.b32.xlu0 %v1959, 32
        %v3112 = vpop.permute.xlu0 %3111
        %3113 = vrot.lane.b32.xlu0 %v1960, 32
        %v3114 = vpop.permute.xlu0 %3113
        %3115 = vrot.lane.b32.xlu0 %v1961, 32
        %v3116 = vpop.permute.xlu0 %3115
        %3117 = vrot.lane.b32.xlu0 %v1962, 32
        %v3118 = vpop.permute.xlu0 %3117
        %3119 = vrot.lane.b32.xlu0 %v1963, 32
        %v3120 = vpop.permute.xlu0 %3119
        %3121 = vrot.lane.b32.xlu0 %v1964, 32
        %v3122 = vpop.permute.xlu0 %3121
        %3123 = vrot.lane.b32.xlu0 %v1965, 32
        %v3124 = vpop.permute.xlu0 %3123
        %3125 = vrot.lane.b32.xlu0 %v1966, 32
        %v3126 = vpop.permute.xlu0 %3125
        %s3159 = scalar_lea.vmem %s357, 384 [#allocation10]
        %3160 = vst.msk [vmem:[%s3159] sm:$0xf] %vm1678, %v3064
        %3161 = vst.msk [vmem:[%s3159 + $0x4] sm:$0xf] %vm1678, %v3066
        %3162 = vst.msk [vmem:[%s3159 + $0x8] sm:$0xf] %vm1678, %v3068
        %3163 = vst.msk [vmem:[%s3159 + $0xc] sm:$0xf] %vm1678, %v3070
        %3164 = vst.msk [vmem:[%s3159 + $0x10] sm:$0xf] %vm1678, %v3072
        %3165 = vst.msk [vmem:[%s3159 + $0x14] sm:$0xf] %vm1678, %v3074
        %3166 = vst.msk [vmem:[%s3159 + $0x18] sm:$0xf] %vm1678, %v3076
        %3167 = vst.msk [vmem:[%s3159 + $0x1c] sm:$0xf] %vm1678, %v3078
        %3168 = vst.msk [vmem:[%s3159 + $0x20] sm:$0xf] %vm1678, %v3080
        %3169 = vst.msk [vmem:[%s3159 + $0x24] sm:$0xf] %vm1678, %v3082
        %3170 = vst.msk [vmem:[%s3159 + $0x28] sm:$0xf] %vm1678, %v3084
        %3171 = vst.msk [vmem:[%s3159 + $0x2c] sm:$0xf] %vm1678, %v3086
        %3172 = vst.msk [vmem:[%s3159 + $0x30] sm:$0xf] %vm1678, %v3088
        %3173 = vst.msk [vmem:[%s3159 + $0x34] sm:$0xf] %vm1678, %v3090
        %3174 = vst.msk [vmem:[%s3159 + $0x38] sm:$0xf] %vm1678, %v3092
        %3175 = vst.msk [vmem:[%s3159 + $0x3c] sm:$0xf] %vm1678, %v3094
        %3176 = vst.msk [vmem:[%s3159 + $0x40] sm:$0xf] %vm1678, %v3096
        %3177 = vst.msk [vmem:[%s3159 + $0x44] sm:$0xf] %vm1678, %v3098
        %3178 = vst.msk [vmem:[%s3159 + $0x48] sm:$0xf] %vm1678, %v3100
        %3179 = vst.msk [vmem:[%s3159 + $0x4c] sm:$0xf] %vm1678, %v3102
        %3180 = vst.msk [vmem:[%s3159 + $0x50] sm:$0xf] %vm1678, %v3104
        %3181 = vst.msk [vmem:[%s3159 + $0x54] sm:$0xf] %vm1678, %v3106
        %3182 = vst.msk [vmem:[%s3159 + $0x58] sm:$0xf] %vm1678, %v3108
        %3183 = vst.msk [vmem:[%s3159 + $0x5c] sm:$0xf] %vm1678, %v3110
        %3184 = vst.msk [vmem:[%s3159 + $0x60] sm:$0xf] %vm1678, %v3112
        %3185 = vst.msk [vmem:[%s3159 + $0x64] sm:$0xf] %vm1678, %v3114
        %3186 = vst.msk [vmem:[%s3159 + $0x68] sm:$0xf] %vm1678, %v3116
        %3187 = vst.msk [vmem:[%s3159 + $0x6c] sm:$0xf] %vm1678, %v3118
        %3188 = vst.msk [vmem:[%s3159 + $0x70] sm:$0xf] %vm1678, %v3120
        %3189 = vst.msk [vmem:[%s3159 + $0x74] sm:$0xf] %vm1678, %v3122
        %3190 = vst.msk [vmem:[%s3159 + $0x78] sm:$0xf] %vm1678, %v3124
        %3191 = vst.msk [vmem:[%s3159 + $0x7c] sm:$0xf] %vm1678, %v3126
        %s3192 = sand.u32 %s145, 1
        %s3193 = scalar_lea.sflag [#allocation4], %s3192
        %s3194 = sand.u32 %s145, 1
        %s3195 = smul.addr %s3194, 128
        %s3196 = scalar_lea.vmem [#allocation7], %s3195
        %s3197 = sand.u32 %s171, 1
        %s3198 = sand.u32 %s171, 1
        %s3199 = smul.addr %s3198, 512
        %s3200 = scalar_lea.vmem [#allocation8], %s3199
        %s3201 = sand.u32 %s197, 1
        %s3202 = sand.u32 %s197, 1
        %s3203 = smul.addr %s3202, 512
        %s3204 = scalar_lea.vmem [#allocation9], %s3203
        %s3205 = sand.u32 %s223, 1
        %s3206 = sand.u32 %s223, 1
        %s3207 = smul.addr %s3206, 512
        %s3208 = scalar_lea.vmem [#allocation10], %s3207
        // Predicated region
        $region49: #{tpu_custom_call.1} parent=39 // pred_check
          %p3209 = pneg %p155
        $region50: #{tpu_custom_call.1} parent=39 // pred_check_branch
          %3211 = sbr.rel (%p3209) target = $region52
        $region51: #{tpu_custom_call.1} parent=39 // pred_region
          %s3212 = smul.u32 32, %s27
          %s3214 = ssub.s32 2048, 2048
          %3215 = vsyncadd %s3193, %s3214
          %s3216 = smul.addr %s3212, 64
          %s3217 = scalar_lea.hbm %s5, %s3216
          %s3218 = sshll.u32 %s3196, 4
          %s3219 = int_to_ptr.vmem [resolvable:$true] %s3218
          %3224 = dma.vmem_to_hbm [thread:$0]  %s3219, 2048, %s3217, %s3193, 64, 64, 4
        $region52: #{tpu_custom_call.1} parent=39 // pred_fallthru
          _
        // Predicated region
        $region53: #{tpu_custom_call.1} parent=39 // pred_check
          %p3225 = pneg %p181
        $region54: #{tpu_custom_call.1} parent=39 // pred_check_branch
          %3227 = sbr.rel (%p3225) target = $region56
        $region55: #{tpu_custom_call.1} parent=39 // pred_region
          %s3228 = smul.u32 32, %s27
          %s3229 = smul.addr %s3228, 4
          %s3230 = scalar_lea.vmem %s6, %s3229
          // Predicated region
          $region57: #{tpu_custom_call.1} parent=55 // pred_check
            _
          $region58: #{tpu_custom_call.1} parent=55 // pred_check_branch
            %3232 = sbr.rel (0) target = $region60
          $region59: #{tpu_custom_call.1} parent=55 // pred_region
            // Predicated region
            $region61: #{tpu_custom_call.1} parent=59 // pred_check
              _
            $region62: #{tpu_custom_call.1} parent=59 // pred_check_branch
              %3234 = sbr.rel target = $region64
            $region63: #{tpu_custom_call.1} parent=59 // pred_region
              // Predicated region
              $region76: #{tpu_custom_call.1} parent=63 // pred_check
                _
              $region77: #{tpu_custom_call.1} parent=63 // pred_check_branch
                %3504 = sbr.rel (0) target = $region79
              $region78: #{tpu_custom_call.1} parent=63 // pred_region
                loop: start=0, step=1, limit=1
                $region80: #{tpu_custom_call.1} parent=78 // loop_pre_header
                  _
                $region81: #{tpu_custom_call.1} parent=78 // loop_header
                  %s3506 = sphi 0, %s3510
                  %p3507 = scmp.ge.s32.totalorder %s3506, 1
                  %s3511 = sphi %s3200, %s3200
                  %s3512 = sphi %s3230, %s3230
                $region82: #{tpu_custom_call.1} parent=78 // loop_header_branch
                  %3509 = sbr.rel (%p3507) target = $region86
                $region83: #{tpu_custom_call.1} parent=78 // loop_body
                  _
                $region84: #{tpu_custom_call.1} parent=78 // loop_footer
                  %s3510 = sadd.s32 1, %s3506
                $region85: #{tpu_custom_call.1} parent=78 // loop_footer_branch
                  %3505 = sbr.rel target = $region81
                $region86: #{tpu_custom_call.1} parent=78 // loop_exit
                  _
                %s3514 = ssub.s32 16, 1
                loop: start=0, step=1, limit=1
                $region87: #{tpu_custom_call.1} parent=78 // loop_pre_header
                  _
                $region88: #{tpu_custom_call.1} parent=78 // loop_header
                  %s3516 = sphi 0, %s3520
                  %p3517 = scmp.ge.s32.totalorder %s3516, 1
                  %s3521 = sphi %s3200, %s3200
                  %s3522 = sphi %s3230, %s3230
                $region89: #{tpu_custom_call.1} parent=78 // loop_header_branch
                  %3519 = sbr.rel (%p3517) target = $region93
                $region90: #{tpu_custom_call.1} parent=78 // loop_body
                  %v3523 = vld [vmem:[%s3521] sm:%s3514]
                  %3524 = vst [vmem:[%s3522] sm:%s3514] %v3523
                  %v3525 = vld [vmem:[%s3521 + $0x4] sm:%s3514]
                  %3526 = vst [vmem:[%s3522 + $0x4] sm:%s3514] %v3525
                  %v3527 = vld [vmem:[%s3521 + $0x8] sm:%s3514]
                  %3528 = vst [vmem:[%s3522 + $0x8] sm:%s3514] %v3527
                  %v3529 = vld [vmem:[%s3521 + $0xc] sm:%s3514]
                  %3530 = vst [vmem:[%s3522 + $0xc] sm:%s3514] %v3529
                  %v3531 = vld [vmem:[%s3521 + $0x10] sm:%s3514]
                  %3532 = vst [vmem:[%s3522 + $0x10] sm:%s3514] %v3531
                  %v3533 = vld [vmem:[%s3521 + $0x14] sm:%s3514]
                  %3534 = vst [vmem:[%s3522 + $0x14] sm:%s3514] %v3533
                  %v3535 = vld [vmem:[%s3521 + $0x18] sm:%s3514]
                  %3536 = vst [vmem:[%s3522 + $0x18] sm:%s3514] %v3535
                  %v3537 = vld [vmem:[%s3521 + $0x1c] sm:%s3514]
                  %3538 = vst [vmem:[%s3522 + $0x1c] sm:%s3514] %v3537
                  %v3539 = vld [vmem:[%s3521 + $0x20] sm:%s3514]
                  %3540 = vst [vmem:[%s3522 + $0x20] sm:%s3514] %v3539
                  %v3541 = vld [vmem:[%s3521 + $0x24] sm:%s3514]
                  %3542 = vst [vmem:[%s3522 + $0x24] sm:%s3514] %v3541
                  %v3543 = vld [vmem:[%s3521 + $0x28] sm:%s3514]
                  %3544 = vst [vmem:[%s3522 + $0x28] sm:%s3514] %v3543
                  %v3545 = vld [vmem:[%s3521 + $0x2c] sm:%s3514]
                  %3546 = vst [vmem:[%s3522 + $0x2c] sm:%s3514] %v3545
                  %v3547 = vld [vmem:[%s3521 + $0x30] sm:%s3514]
                  %3548 = vst [vmem:[%s3522 + $0x30] sm:%s3514] %v3547
                  %v3549 = vld [vmem:[%s3521 + $0x34] sm:%s3514]
                  %3550 = vst [vmem:[%s3522 + $0x34] sm:%s3514] %v3549
                  %v3551 = vld [vmem:[%s3521 + $0x38] sm:%s3514]
                  %3552 = vst [vmem:[%s3522 + $0x38] sm:%s3514] %v3551
                  %v3553 = vld [vmem:[%s3521 + $0x3c] sm:%s3514]
                  %3554 = vst [vmem:[%s3522 + $0x3c] sm:%s3514] %v3553
                  %v3555 = vld [vmem:[%s3521 + $0x40] sm:%s3514]
                  %3556 = vst [vmem:[%s3522 + $0x40] sm:%s3514] %v3555
                  %v3557 = vld [vmem:[%s3521 + $0x44] sm:%s3514]
                  %3558 = vst [vmem:[%s3522 + $0x44] sm:%s3514] %v3557
                  %v3559 = vld [vmem:[%s3521 + $0x48] sm:%s3514]
                  %3560 = vst [vmem:[%s3522 + $0x48] sm:%s3514] %v3559
                  %v3561 = vld [vmem:[%s3521 + $0x4c] sm:%s3514]
                  %3562 = vst [vmem:[%s3522 + $0x4c] sm:%s3514] %v3561
                  %v3563 = vld [vmem:[%s3521 + $0x50] sm:%s3514]
                  %3564 = vst [vmem:[%s3522 + $0x50] sm:%s3514] %v3563
                  %v3565 = vld [vmem:[%s3521 + $0x54] sm:%s3514]
                  %3566 = vst [vmem:[%s3522 + $0x54] sm:%s3514] %v3565
                  %v3567 = vld [vmem:[%s3521 + $0x58] sm:%s3514]
                  %3568 = vst [vmem:[%s3522 + $0x58] sm:%s3514] %v3567
                  %v3569 = vld [vmem:[%s3521 + $0x5c] sm:%s3514]
                  %3570 = vst [vmem:[%s3522 + $0x5c] sm:%s3514] %v3569
                  %v3571 = vld [vmem:[%s3521 + $0x60] sm:%s3514]
                  %3572 = vst [vmem:[%s3522 + $0x60] sm:%s3514] %v3571
                  %v3573 = vld [vmem:[%s3521 + $0x64] sm:%s3514]
                  %3574 = vst [vmem:[%s3522 + $0x64] sm:%s3514] %v3573
                  %v3575 = vld [vmem:[%s3521 + $0x68] sm:%s3514]
                  %3576 = vst [vmem:[%s3522 + $0x68] sm:%s3514] %v3575
                  %v3577 = vld [vmem:[%s3521 + $0x6c] sm:%s3514]
                  %3578 = vst [vmem:[%s3522 + $0x6c] sm:%s3514] %v3577
                  %v3579 = vld [vmem:[%s3521 + $0x70] sm:%s3514]
                  %3580 = vst [vmem:[%s3522 + $0x70] sm:%s3514] %v3579
                  %v3581 = vld [vmem:[%s3521 + $0x74] sm:%s3514]
                  %3582 = vst [vmem:[%s3522 + $0x74] sm:%s3514] %v3581
                  %v3583 = vld [vmem:[%s3521 + $0x78] sm:%s3514]
                  %3584 = vst [vmem:[%s3522 + $0x78] sm:%s3514] %v3583
                  %v3585 = vld [vmem:[%s3521 + $0x7c] sm:%s3514]
                  %3586 = vst [vmem:[%s3522 + $0x7c] sm:%s3514] %v3585
                  %v3587 = vld [vmem:[%s3521 + $0x80] sm:%s3514]
                  %3588 = vst [vmem:[%s3522 + $0x200] sm:%s3514] %v3587
                  %v3589 = vld [vmem:[%s3521 + $0x84] sm:%s3514]
                  %3590 = vst [vmem:[%s3522 + $0x204] sm:%s3514] %v3589
                  %v3591 = vld [vmem:[%s3521 + $0x88] sm:%s3514]
                  %3592 = vst [vmem:[%s3522 + $0x208] sm:%s3514] %v3591
                  %v3593 = vld [vmem:[%s3521 + $0x8c] sm:%s3514]
                  %3594 = vst [vmem:[%s3522 + $0x20c] sm:%s3514] %v3593
                  %v3595 = vld [vmem:[%s3521 + $0x90] sm:%s3514]
                  %3596 = vst [vmem:[%s3522 + $0x210] sm:%s3514] %v3595
                  %v3597 = vld [vmem:[%s3521 + $0x94] sm:%s3514]
                  %3598 = vst [vmem:[%s3522 + $0x214] sm:%s3514] %v3597
                  %v3599 = vld [vmem:[%s3521 + $0x98] sm:%s3514]
                  %3600 = vst [vmem:[%s3522 + $0x218] sm:%s3514] %v3599
                  %v3601 = vld [vmem:[%s3521 + $0x9c] sm:%s3514]
                  %3602 = vst [vmem:[%s3522 + $0x21c] sm:%s3514] %v3601
                  %v3603 = vld [vmem:[%s3521 + $0xa0] sm:%s3514]
                  %3604 = vst [vmem:[%s3522 + $0x220] sm:%s3514] %v3603
                  %v3605 = vld [vmem:[%s3521 + $0xa4] sm:%s3514]
                  %3606 = vst [vmem:[%s3522 + $0x224] sm:%s3514] %v3605
                  %v3607 = vld [vmem:[%s3521 + $0xa8] sm:%s3514]
                  %3608 = vst [vmem:[%s3522 + $0x228] sm:%s3514] %v3607
                  %v3609 = vld [vmem:[%s3521 + $0xac] sm:%s3514]
                  %3610 = vst [vmem:[%s3522 + $0x22c] sm:%s3514] %v3609
                  %v3611 = vld [vmem:[%s3521 + $0xb0] sm:%s3514]
                  %3612 = vst [vmem:[%s3522 + $0x230] sm:%s3514] %v3611
                  %v3613 = vld [vmem:[%s3521 + $0xb4] sm:%s3514]
                  %3614 = vst [vmem:[%s3522 + $0x234] sm:%s3514] %v3613
                  %v3615 = vld [vmem:[%s3521 + $0xb8] sm:%s3514]
                  %3616 = vst [vmem:[%s3522 + $0x238] sm:%s3514] %v3615
                  %v3617 = vld [vmem:[%s3521 + $0xbc] sm:%s3514]
                  %3618 = vst [vmem:[%s3522 + $0x23c] sm:%s3514] %v3617
                  %v3619 = vld [vmem:[%s3521 + $0xc0] sm:%s3514]
                  %3620 = vst [vmem:[%s3522 + $0x240] sm:%s3514] %v3619
                  %v3621 = vld [vmem:[%s3521 + $0xc4] sm:%s3514]
                  %3622 = vst [vmem:[%s3522 + $0x244] sm:%s3514] %v3621
                  %v3623 = vld [vmem:[%s3521 + $0xc8] sm:%s3514]
                  %3624 = vst [vmem:[%s3522 + $0x248] sm:%s3514] %v3623
                  %v3625 = vld [vmem:[%s3521 + $0xcc] sm:%s3514]
                  %3626 = vst [vmem:[%s3522 + $0x24c] sm:%s3514] %v3625
                  %v3627 = vld [vmem:[%s3521 + $0xd0] sm:%s3514]
                  %3628 = vst [vmem:[%s3522 + $0x250] sm:%s3514] %v3627
                  %v3629 = vld [vmem:[%s3521 + $0xd4] sm:%s3514]
                  %3630 = vst [vmem:[%s3522 + $0x254] sm:%s3514] %v3629
                  %v3631 = vld [vmem:[%s3521 + $0xd8] sm:%s3514]
                  %3632 = vst [vmem:[%s3522 + $0x258] sm:%s3514] %v3631
                  %v3633 = vld [vmem:[%s3521 + $0xdc] sm:%s3514]
                  %3634 = vst [vmem:[%s3522 + $0x25c] sm:%s3514] %v3633
                  %v3635 = vld [vmem:[%s3521 + $0xe0] sm:%s3514]
                  %3636 = vst [vmem:[%s3522 + $0x260] sm:%s3514] %v3635
                  %v3637 = vld [vmem:[%s3521 + $0xe4] sm:%s3514]
                  %3638 = vst [vmem:[%s3522 + $0x264] sm:%s3514] %v3637
                  %v3639 = vld [vmem:[%s3521 + $0xe8] sm:%s3514]
                  %3640 = vst [vmem:[%s3522 + $0x268] sm:%s3514] %v3639
                  %v3641 = vld [vmem:[%s3521 + $0xec] sm:%s3514]
                  %3642 = vst [vmem:[%s3522 + $0x26c] sm:%s3514] %v3641
                  %v3643 = vld [vmem:[%s3521 + $0xf0] sm:%s3514]
                  %3644 = vst [vmem:[%s3522 + $0x270] sm:%s3514] %v3643
                  %v3645 = vld [vmem:[%s3521 + $0xf4] sm:%s3514]
                  %3646 = vst [vmem:[%s3522 + $0x274] sm:%s3514] %v3645
                  %v3647 = vld [vmem:[%s3521 + $0xf8] sm:%s3514]
                  %3648 = vst [vmem:[%s3522 + $0x278] sm:%s3514] %v3647
                  %v3649 = vld [vmem:[%s3521 + $0xfc] sm:%s3514]
                  %3650 = vst [vmem:[%s3522 + $0x27c] sm:%s3514] %v3649
                  %v3651 = vld [vmem:[%s3521 + $0x100] sm:%s3514]
                  %3652 = vst [vmem:[%s3522 + $0x400] sm:%s3514] %v3651
                  %v3653 = vld [vmem:[%s3521 + $0x104] sm:%s3514]
                  %3654 = vst [vmem:[%s3522 + $0x404] sm:%s3514] %v3653
                  %v3655 = vld [vmem:[%s3521 + $0x108] sm:%s3514]
                  %3656 = vst [vmem:[%s3522 + $0x408] sm:%s3514] %v3655
                  %v3657 = vld [vmem:[%s3521 + $0x10c] sm:%s3514]
                  %3658 = vst [vmem:[%s3522 + $0x40c] sm:%s3514] %v3657
                  %v3659 = vld [vmem:[%s3521 + $0x110] sm:%s3514]
                  %3660 = vst [vmem:[%s3522 + $0x410] sm:%s3514] %v3659
                  %v3661 = vld [vmem:[%s3521 + $0x114] sm:%s3514]
                  %3662 = vst [vmem:[%s3522 + $0x414] sm:%s3514] %v3661
                  %v3663 = vld [vmem:[%s3521 + $0x118] sm:%s3514]
                  %3664 = vst [vmem:[%s3522 + $0x418] sm:%s3514] %v3663
                  %v3665 = vld [vmem:[%s3521 + $0x11c] sm:%s3514]
                  %3666 = vst [vmem:[%s3522 + $0x41c] sm:%s3514] %v3665
                  %v3667 = vld [vmem:[%s3521 + $0x120] sm:%s3514]
                  %3668 = vst [vmem:[%s3522 + $0x420] sm:%s3514] %v3667
                  %v3669 = vld [vmem:[%s3521 + $0x124] sm:%s3514]
                  %3670 = vst [vmem:[%s3522 + $0x424] sm:%s3514] %v3669
                  %v3671 = vld [vmem:[%s3521 + $0x128] sm:%s3514]
                  %3672 = vst [vmem:[%s3522 + $0x428] sm:%s3514] %v3671
                  %v3673 = vld [vmem:[%s3521 + $0x12c] sm:%s3514]
                  %3674 = vst [vmem:[%s3522 + $0x42c] sm:%s3514] %v3673
                  %v3675 = vld [vmem:[%s3521 + $0x130] sm:%s3514]
                  %3676 = vst [vmem:[%s3522 + $0x430] sm:%s3514] %v3675
                  %v3677 = vld [vmem:[%s3521 + $0x134] sm:%s3514]
                  %3678 = vst [vmem:[%s3522 + $0x434] sm:%s3514] %v3677
                  %v3679 = vld [vmem:[%s3521 + $0x138] sm:%s3514]
                  %3680 = vst [vmem:[%s3522 + $0x438] sm:%s3514] %v3679
                  %v3681 = vld [vmem:[%s3521 + $0x13c] sm:%s3514]
                  %3682 = vst [vmem:[%s3522 + $0x43c] sm:%s3514] %v3681
                  %v3683 = vld [vmem:[%s3521 + $0x140] sm:%s3514]
                  %3684 = vst [vmem:[%s3522 + $0x440] sm:%s3514] %v3683
                  %v3685 = vld [vmem:[%s3521 + $0x144] sm:%s3514]
                  %3686 = vst [vmem:[%s3522 + $0x444] sm:%s3514] %v3685
                  %v3687 = vld [vmem:[%s3521 + $0x148] sm:%s3514]
                  %3688 = vst [vmem:[%s3522 + $0x448] sm:%s3514] %v3687
                  %v3689 = vld [vmem:[%s3521 + $0x14c] sm:%s3514]
                  %3690 = vst [vmem:[%s3522 + $0x44c] sm:%s3514] %v3689
                  %v3691 = vld [vmem:[%s3521 + $0x150] sm:%s3514]
                  %3692 = vst [vmem:[%s3522 + $0x450] sm:%s3514] %v3691
                  %v3693 = vld [vmem:[%s3521 + $0x154] sm:%s3514]
                  %3694 = vst [vmem:[%s3522 + $0x454] sm:%s3514] %v3693
                  %v3695 = vld [vmem:[%s3521 + $0x158] sm:%s3514]
                  %3696 = vst [vmem:[%s3522 + $0x458] sm:%s3514] %v3695
                  %v3697 = vld [vmem:[%s3521 + $0x15c] sm:%s3514]
                  %3698 = vst [vmem:[%s3522 + $0x45c] sm:%s3514] %v3697
                  %v3699 = vld [vmem:[%s3521 + $0x160] sm:%s3514]
                  %3700 = vst [vmem:[%s3522 + $0x460] sm:%s3514] %v3699
                  %v3701 = vld [vmem:[%s3521 + $0x164] sm:%s3514]
                  %3702 = vst [vmem:[%s3522 + $0x464] sm:%s3514] %v3701
                  %v3703 = vld [vmem:[%s3521 + $0x168] sm:%s3514]
                  %3704 = vst [vmem:[%s3522 + $0x468] sm:%s3514] %v3703
                  %v3705 = vld [vmem:[%s3521 + $0x16c] sm:%s3514]
                  %3706 = vst [vmem:[%s3522 + $0x46c] sm:%s3514] %v3705
                  %v3707 = vld [vmem:[%s3521 + $0x170] sm:%s3514]
                  %3708 = vst [vmem:[%s3522 + $0x470] sm:%s3514] %v3707
                  %v3709 = vld [vmem:[%s3521 + $0x174] sm:%s3514]
                  %3710 = vst [vmem:[%s3522 + $0x474] sm:%s3514] %v3709
                  %v3711 = vld [vmem:[%s3521 + $0x178] sm:%s3514]
                  %3712 = vst [vmem:[%s3522 + $0x478] sm:%s3514] %v3711
                  %v3713 = vld [vmem:[%s3521 + $0x17c] sm:%s3514]
                  %3714 = vst [vmem:[%s3522 + $0x47c] sm:%s3514] %v3713
                  %v3715 = vld [vmem:[%s3521 + $0x180] sm:%s3514]
                  %3716 = vst [vmem:[%s3522 + $0x600] sm:%s3514] %v3715
                  %v3717 = vld [vmem:[%s3521 + $0x184] sm:%s3514]
                  %3718 = vst [vmem:[%s3522 + $0x604] sm:%s3514] %v3717
                  %v3719 = vld [vmem:[%s3521 + $0x188] sm:%s3514]
                  %3720 = vst [vmem:[%s3522 + $0x608] sm:%s3514] %v3719
                  %v3721 = vld [vmem:[%s3521 + $0x18c] sm:%s3514]
                  %3722 = vst [vmem:[%s3522 + $0x60c] sm:%s3514] %v3721
                  %v3723 = vld [vmem:[%s3521 + $0x190] sm:%s3514]
                  %3724 = vst [vmem:[%s3522 + $0x610] sm:%s3514] %v3723
                  %v3725 = vld [vmem:[%s3521 + $0x194] sm:%s3514]
                  %3726 = vst [vmem:[%s3522 + $0x614] sm:%s3514] %v3725
                  %v3727 = vld [vmem:[%s3521 + $0x198] sm:%s3514]
                  %3728 = vst [vmem:[%s3522 + $0x618] sm:%s3514] %v3727
                  %v3729 = vld [vmem:[%s3521 + $0x19c] sm:%s3514]
                  %3730 = vst [vmem:[%s3522 + $0x61c] sm:%s3514] %v3729
                  %v3731 = vld [vmem:[%s3521 + $0x1a0] sm:%s3514]
                  %3732 = vst [vmem:[%s3522 + $0x620] sm:%s3514] %v3731
                  %v3733 = vld [vmem:[%s3521 + $0x1a4] sm:%s3514]
                  %3734 = vst [vmem:[%s3522 + $0x624] sm:%s3514] %v3733
                  %v3735 = vld [vmem:[%s3521 + $0x1a8] sm:%s3514]
                  %3736 = vst [vmem:[%s3522 + $0x628] sm:%s3514] %v3735
                  %v3737 = vld [vmem:[%s3521 + $0x1ac] sm:%s3514]
                  %3738 = vst [vmem:[%s3522 + $0x62c] sm:%s3514] %v3737
                  %v3739 = vld [vmem:[%s3521 + $0x1b0] sm:%s3514]
                  %3740 = vst [vmem:[%s3522 + $0x630] sm:%s3514] %v3739
                  %v3741 = vld [vmem:[%s3521 + $0x1b4] sm:%s3514]
                  %3742 = vst [vmem:[%s3522 + $0x634] sm:%s3514] %v3741
                  %v3743 = vld [vmem:[%s3521 + $0x1b8] sm:%s3514]
                  %3744 = vst [vmem:[%s3522 + $0x638] sm:%s3514] %v3743
                  %v3745 = vld [vmem:[%s3521 + $0x1bc] sm:%s3514]
                  %3746 = vst [vmem:[%s3522 + $0x63c] sm:%s3514] %v3745
                  %v3747 = vld [vmem:[%s3521 + $0x1c0] sm:%s3514]
                  %3748 = vst [vmem:[%s3522 + $0x640] sm:%s3514] %v3747
                  %v3749 = vld [vmem:[%s3521 + $0x1c4] sm:%s3514]
                  %3750 = vst [vmem:[%s3522 + $0x644] sm:%s3514] %v3749
                  %v3751 = vld [vmem:[%s3521 + $0x1c8] sm:%s3514]
                  %3752 = vst [vmem:[%s3522 + $0x648] sm:%s3514] %v3751
                  %v3753 = vld [vmem:[%s3521 + $0x1cc] sm:%s3514]
                  %3754 = vst [vmem:[%s3522 + $0x64c] sm:%s3514] %v3753
                  %v3755 = vld [vmem:[%s3521 + $0x1d0] sm:%s3514]
                  %3756 = vst [vmem:[%s3522 + $0x650] sm:%s3514] %v3755
                  %v3757 = vld [vmem:[%s3521 + $0x1d4] sm:%s3514]
                  %3758 = vst [vmem:[%s3522 + $0x654] sm:%s3514] %v3757
                  %v3759 = vld [vmem:[%s3521 + $0x1d8] sm:%s3514]
                  %3760 = vst [vmem:[%s3522 + $0x658] sm:%s3514] %v3759
                  %v3761 = vld [vmem:[%s3521 + $0x1dc] sm:%s3514]
                  %3762 = vst [vmem:[%s3522 + $0x65c] sm:%s3514] %v3761
                  %v3763 = vld [vmem:[%s3521 + $0x1e0] sm:%s3514]
                  %3764 = vst [vmem:[%s3522 + $0x660] sm:%s3514] %v3763
                  %v3765 = vld [vmem:[%s3521 + $0x1e4] sm:%s3514]
                  %3766 = vst [vmem:[%s3522 + $0x664] sm:%s3514] %v3765
                  %v3767 = vld [vmem:[%s3521 + $0x1e8] sm:%s3514]
                  %3768 = vst [vmem:[%s3522 + $0x668] sm:%s3514] %v3767
                  %v3769 = vld [vmem:[%s3521 + $0x1ec] sm:%s3514]
                  %3770 = vst [vmem:[%s3522 + $0x66c] sm:%s3514] %v3769
                  %v3771 = vld [vmem:[%s3521 + $0x1f0] sm:%s3514]
                  %3772 = vst [vmem:[%s3522 + $0x670] sm:%s3514] %v3771
                  %v3773 = vld [vmem:[%s3521 + $0x1f4] sm:%s3514]
                  %3774 = vst [vmem:[%s3522 + $0x674] sm:%s3514] %v3773
                  %v3775 = vld [vmem:[%s3521 + $0x1f8] sm:%s3514]
                  %3776 = vst [vmem:[%s3522 + $0x678] sm:%s3514] %v3775
                  %v3777 = vld [vmem:[%s3521 + $0x1fc] sm:%s3514]
                  %3778 = vst [vmem:[%s3522 + $0x67c] sm:%s3514] %v3777
                $region91: #{tpu_custom_call.1} parent=78 // loop_footer
                  %s3520 = sadd.s32 1, %s3516
                $region92: #{tpu_custom_call.1} parent=78 // loop_footer_branch
                  %3515 = sbr.rel target = $region88
                $region93: #{tpu_custom_call.1} parent=78 // loop_exit
                  _
              $region79: #{tpu_custom_call.1} parent=63 // pred_fallthru
                _
            $region64: #{tpu_custom_call.1} parent=59 // pred_fallthru
              _
            // Predicated region
            $region65: #{tpu_custom_call.1} parent=59 // pred_check
              _
            $region66: #{tpu_custom_call.1} parent=59 // pred_check_branch
              %3236 = sbr.rel (0) target = $region68
            $region67: #{tpu_custom_call.1} parent=59 // pred_region
              %s3238 = ssub.s32 16, 1
              loop: start=0, step=1, limit=1
              $region69: #{tpu_custom_call.1} parent=67 // loop_pre_header
                _
              $region70: #{tpu_custom_call.1} parent=67 // loop_header
                %s3240 = sphi 0, %s3244
                %p3241 = scmp.ge.s32.totalorder %s3240, 1
                %s3245 = sphi %s3200, %s3200
                %s3246 = sphi %s3230, %s3230
              $region71: #{tpu_custom_call.1} parent=67 // loop_header_branch
                %3243 = sbr.rel (%p3241) target = $region75
              $region72: #{tpu_custom_call.1} parent=67 // loop_body
                %v3247 = vld [vmem:[%s3245] sm:%s3238]
                %3248 = vst [vmem:[%s3246] sm:%s3238] %v3247
                %v3249 = vld [vmem:[%s3245 + $0x4] sm:%s3238]
                %3250 = vst [vmem:[%s3246 + $0x4] sm:%s3238] %v3249
                %v3251 = vld [vmem:[%s3245 + $0x8] sm:%s3238]
                %3252 = vst [vmem:[%s3246 + $0x8] sm:%s3238] %v3251
                %v3253 = vld [vmem:[%s3245 + $0xc] sm:%s3238]
                %3254 = vst [vmem:[%s3246 + $0xc] sm:%s3238] %v3253
                %v3255 = vld [vmem:[%s3245 + $0x10] sm:%s3238]
                %3256 = vst [vmem:[%s3246 + $0x10] sm:%s3238] %v3255
                %v3257 = vld [vmem:[%s3245 + $0x14] sm:%s3238]
                %3258 = vst [vmem:[%s3246 + $0x14] sm:%s3238] %v3257
                %v3259 = vld [vmem:[%s3245 + $0x18] sm:%s3238]
                %3260 = vst [vmem:[%s3246 + $0x18] sm:%s3238] %v3259
                %v3261 = vld [vmem:[%s3245 + $0x1c] sm:%s3238]
                %3262 = vst [vmem:[%s3246 + $0x1c] sm:%s3238] %v3261
                %v3263 = vld [vmem:[%s3245 + $0x20] sm:%s3238]
                %3264 = vst [vmem:[%s3246 + $0x20] sm:%s3238] %v3263
                %v3265 = vld [vmem:[%s3245 + $0x24] sm:%s3238]
                %3266 = vst [vmem:[%s3246 + $0x24] sm:%s3238] %v3265
                %v3267 = vld [vmem:[%s3245 + $0x28] sm:%s3238]
                %3268 = vst [vmem:[%s3246 + $0x28] sm:%s3238] %v3267
                %v3269 = vld [vmem:[%s3245 + $0x2c] sm:%s3238]
                %3270 = vst [vmem:[%s3246 + $0x2c] sm:%s3238] %v3269
                %v3271 = vld [vmem:[%s3245 + $0x30] sm:%s3238]
                %3272 = vst [vmem:[%s3246 + $0x30] sm:%s3238] %v3271
                %v3273 = vld [vmem:[%s3245 + $0x34] sm:%s3238]
                %3274 = vst [vmem:[%s3246 + $0x34] sm:%s3238] %v3273
                %v3275 = vld [vmem:[%s3245 + $0x38] sm:%s3238]
                %3276 = vst [vmem:[%s3246 + $0x38] sm:%s3238] %v3275
                %v3277 = vld [vmem:[%s3245 + $0x3c] sm:%s3238]
                %3278 = vst [vmem:[%s3246 + $0x3c] sm:%s3238] %v3277
                %v3279 = vld [vmem:[%s3245 + $0x40] sm:%s3238]
                %3280 = vst [vmem:[%s3246 + $0x40] sm:%s3238] %v3279
                %v3281 = vld [vmem:[%s3245 + $0x44] sm:%s3238]
                %3282 = vst [vmem:[%s3246 + $0x44] sm:%s3238] %v3281
                %v3283 = vld [vmem:[%s3245 + $0x48] sm:%s3238]
                %3284 = vst [vmem:[%s3246 + $0x48] sm:%s3238] %v3283
                %v3285 = vld [vmem:[%s3245 + $0x4c] sm:%s3238]
                %3286 = vst [vmem:[%s3246 + $0x4c] sm:%s3238] %v3285
                %v3287 = vld [vmem:[%s3245 + $0x50] sm:%s3238]
                %3288 = vst [vmem:[%s3246 + $0x50] sm:%s3238] %v3287
                %v3289 = vld [vmem:[%s3245 + $0x54] sm:%s3238]
                %3290 = vst [vmem:[%s3246 + $0x54] sm:%s3238] %v3289
                %v3291 = vld [vmem:[%s3245 + $0x58] sm:%s3238]
                %3292 = vst [vmem:[%s3246 + $0x58] sm:%s3238] %v3291
                %v3293 = vld [vmem:[%s3245 + $0x5c] sm:%s3238]
                %3294 = vst [vmem:[%s3246 + $0x5c] sm:%s3238] %v3293
                %v3295 = vld [vmem:[%s3245 + $0x60] sm:%s3238]
                %3296 = vst [vmem:[%s3246 + $0x60] sm:%s3238] %v3295
                %v3297 = vld [vmem:[%s3245 + $0x64] sm:%s3238]
                %3298 = vst [vmem:[%s3246 + $0x64] sm:%s3238] %v3297
                %v3299 = vld [vmem:[%s3245 + $0x68] sm:%s3238]
                %3300 = vst [vmem:[%s3246 + $0x68] sm:%s3238] %v3299
                %v3301 = vld [vmem:[%s3245 + $0x6c] sm:%s3238]
                %3302 = vst [vmem:[%s3246 + $0x6c] sm:%s3238] %v3301
                %v3303 = vld [vmem:[%s3245 + $0x70] sm:%s3238]
                %3304 = vst [vmem:[%s3246 + $0x70] sm:%s3238] %v3303
                %v3305 = vld [vmem:[%s3245 + $0x74] sm:%s3238]
                %3306 = vst [vmem:[%s3246 + $0x74] sm:%s3238] %v3305
                %v3307 = vld [vmem:[%s3245 + $0x78] sm:%s3238]
                %3308 = vst [vmem:[%s3246 + $0x78] sm:%s3238] %v3307
                %v3309 = vld [vmem:[%s3245 + $0x7c] sm:%s3238]
                %3310 = vst [vmem:[%s3246 + $0x7c] sm:%s3238] %v3309
                %v3311 = vld [vmem:[%s3245 + $0x80] sm:%s3238]
                %3312 = vst [vmem:[%s3246 + $0x200] sm:%s3238] %v3311
                %v3313 = vld [vmem:[%s3245 + $0x84] sm:%s3238]
                %3314 = vst [vmem:[%s3246 + $0x204] sm:%s3238] %v3313
                %v3315 = vld [vmem:[%s3245 + $0x88] sm:%s3238]
                %3316 = vst [vmem:[%s3246 + $0x208] sm:%s3238] %v3315
                %v3317 = vld [vmem:[%s3245 + $0x8c] sm:%s3238]
                %3318 = vst [vmem:[%s3246 + $0x20c] sm:%s3238] %v3317
                %v3319 = vld [vmem:[%s3245 + $0x90] sm:%s3238]
                %3320 = vst [vmem:[%s3246 + $0x210] sm:%s3238] %v3319
                %v3321 = vld [vmem:[%s3245 + $0x94] sm:%s3238]
                %3322 = vst [vmem:[%s3246 + $0x214] sm:%s3238] %v3321
                %v3323 = vld [vmem:[%s3245 + $0x98] sm:%s3238]
                %3324 = vst [vmem:[%s3246 + $0x218] sm:%s3238] %v3323
                %v3325 = vld [vmem:[%s3245 + $0x9c] sm:%s3238]
                %3326 = vst [vmem:[%s3246 + $0x21c] sm:%s3238] %v3325
                %v3327 = vld [vmem:[%s3245 + $0xa0] sm:%s3238]
                %3328 = vst [vmem:[%s3246 + $0x220] sm:%s3238] %v3327
                %v3329 = vld [vmem:[%s3245 + $0xa4] sm:%s3238]
                %3330 = vst [vmem:[%s3246 + $0x224] sm:%s3238] %v3329
                %v3331 = vld [vmem:[%s3245 + $0xa8] sm:%s3238]
                %3332 = vst [vmem:[%s3246 + $0x228] sm:%s3238] %v3331
                %v3333 = vld [vmem:[%s3245 + $0xac] sm:%s3238]
                %3334 = vst [vmem:[%s3246 + $0x22c] sm:%s3238] %v3333
                %v3335 = vld [vmem:[%s3245 + $0xb0] sm:%s3238]
                %3336 = vst [vmem:[%s3246 + $0x230] sm:%s3238] %v3335
                %v3337 = vld [vmem:[%s3245 + $0xb4] sm:%s3238]
                %3338 = vst [vmem:[%s3246 + $0x234] sm:%s3238] %v3337
                %v3339 = vld [vmem:[%s3245 + $0xb8] sm:%s3238]
                %3340 = vst [vmem:[%s3246 + $0x238] sm:%s3238] %v3339
                %v3341 = vld [vmem:[%s3245 + $0xbc] sm:%s3238]
                %3342 = vst [vmem:[%s3246 + $0x23c] sm:%s3238] %v3341
                %v3343 = vld [vmem:[%s3245 + $0xc0] sm:%s3238]
                %3344 = vst [vmem:[%s3246 + $0x240] sm:%s3238] %v3343
                %v3345 = vld [vmem:[%s3245 + $0xc4] sm:%s3238]
                %3346 = vst [vmem:[%s3246 + $0x244] sm:%s3238] %v3345
                %v3347 = vld [vmem:[%s3245 + $0xc8] sm:%s3238]
                %3348 = vst [vmem:[%s3246 + $0x248] sm:%s3238] %v3347
                %v3349 = vld [vmem:[%s3245 + $0xcc] sm:%s3238]
                %3350 = vst [vmem:[%s3246 + $0x24c] sm:%s3238] %v3349
                %v3351 = vld [vmem:[%s3245 + $0xd0] sm:%s3238]
                %3352 = vst [vmem:[%s3246 + $0x250] sm:%s3238] %v3351
                %v3353 = vld [vmem:[%s3245 + $0xd4] sm:%s3238]
                %3354 = vst [vmem:[%s3246 + $0x254] sm:%s3238] %v3353
                %v3355 = vld [vmem:[%s3245 + $0xd8] sm:%s3238]
                %3356 = vst [vmem:[%s3246 + $0x258] sm:%s3238] %v3355
                %v3357 = vld [vmem:[%s3245 + $0xdc] sm:%s3238]
                %3358 = vst [vmem:[%s3246 + $0x25c] sm:%s3238] %v3357
                %v3359 = vld [vmem:[%s3245 + $0xe0] sm:%s3238]
                %3360 = vst [vmem:[%s3246 + $0x260] sm:%s3238] %v3359
                %v3361 = vld [vmem:[%s3245 + $0xe4] sm:%s3238]
                %3362 = vst [vmem:[%s3246 + $0x264] sm:%s3238] %v3361
                %v3363 = vld [vmem:[%s3245 + $0xe8] sm:%s3238]
                %3364 = vst [vmem:[%s3246 + $0x268] sm:%s3238] %v3363
                %v3365 = vld [vmem:[%s3245 + $0xec] sm:%s3238]
                %3366 = vst [vmem:[%s3246 + $0x26c] sm:%s3238] %v3365
                %v3367 = vld [vmem:[%s3245 + $0xf0] sm:%s3238]
                %3368 = vst [vmem:[%s3246 + $0x270] sm:%s3238] %v3367
                %v3369 = vld [vmem:[%s3245 + $0xf4] sm:%s3238]
                %3370 = vst [vmem:[%s3246 + $0x274] sm:%s3238] %v3369
                %v3371 = vld [vmem:[%s3245 + $0xf8] sm:%s3238]
                %3372 = vst [vmem:[%s3246 + $0x278] sm:%s3238] %v3371
                %v3373 = vld [vmem:[%s3245 + $0xfc] sm:%s3238]
                %3374 = vst [vmem:[%s3246 + $0x27c] sm:%s3238] %v3373
                %v3375 = vld [vmem:[%s3245 + $0x100] sm:%s3238]
                %3376 = vst [vmem:[%s3246 + $0x400] sm:%s3238] %v3375
                %v3377 = vld [vmem:[%s3245 + $0x104] sm:%s3238]
                %3378 = vst [vmem:[%s3246 + $0x404] sm:%s3238] %v3377
                %v3379 = vld [vmem:[%s3245 + $0x108] sm:%s3238]
                %3380 = vst [vmem:[%s3246 + $0x408] sm:%s3238] %v3379
                %v3381 = vld [vmem:[%s3245 + $0x10c] sm:%s3238]
                %3382 = vst [vmem:[%s3246 + $0x40c] sm:%s3238] %v3381
                %v3383 = vld [vmem:[%s3245 + $0x110] sm:%s3238]
                %3384 = vst [vmem:[%s3246 + $0x410] sm:%s3238] %v3383
                %v3385 = vld [vmem:[%s3245 + $0x114] sm:%s3238]
                %3386 = vst [vmem:[%s3246 + $0x414] sm:%s3238] %v3385
                %v3387 = vld [vmem:[%s3245 + $0x118] sm:%s3238]
                %3388 = vst [vmem:[%s3246 + $0x418] sm:%s3238] %v3387
                %v3389 = vld [vmem:[%s3245 + $0x11c] sm:%s3238]
                %3390 = vst [vmem:[%s3246 + $0x41c] sm:%s3238] %v3389
                %v3391 = vld [vmem:[%s3245 + $0x120] sm:%s3238]
                %3392 = vst [vmem:[%s3246 + $0x420] sm:%s3238] %v3391
                %v3393 = vld [vmem:[%s3245 + $0x124] sm:%s3238]
                %3394 = vst [vmem:[%s3246 + $0x424] sm:%s3238] %v3393
                %v3395 = vld [vmem:[%s3245 + $0x128] sm:%s3238]
                %3396 = vst [vmem:[%s3246 + $0x428] sm:%s3238] %v3395
                %v3397 = vld [vmem:[%s3245 + $0x12c] sm:%s3238]
                %3398 = vst [vmem:[%s3246 + $0x42c] sm:%s3238] %v3397
                %v3399 = vld [vmem:[%s3245 + $0x130] sm:%s3238]
                %3400 = vst [vmem:[%s3246 + $0x430] sm:%s3238] %v3399
                %v3401 = vld [vmem:[%s3245 + $0x134] sm:%s3238]
                %3402 = vst [vmem:[%s3246 + $0x434] sm:%s3238] %v3401
                %v3403 = vld [vmem:[%s3245 + $0x138] sm:%s3238]
                %3404 = vst [vmem:[%s3246 + $0x438] sm:%s3238] %v3403
                %v3405 = vld [vmem:[%s3245 + $0x13c] sm:%s3238]
                %3406 = vst [vmem:[%s3246 + $0x43c] sm:%s3238] %v3405
                %v3407 = vld [vmem:[%s3245 + $0x140] sm:%s3238]
                %3408 = vst [vmem:[%s3246 + $0x440] sm:%s3238] %v3407
                %v3409 = vld [vmem:[%s3245 + $0x144] sm:%s3238]
                %3410 = vst [vmem:[%s3246 + $0x444] sm:%s3238] %v3409
                %v3411 = vld [vmem:[%s3245 + $0x148] sm:%s3238]
                %3412 = vst [vmem:[%s3246 + $0x448] sm:%s3238] %v3411
                %v3413 = vld [vmem:[%s3245 + $0x14c] sm:%s3238]
                %3414 = vst [vmem:[%s3246 + $0x44c] sm:%s3238] %v3413
                %v3415 = vld [vmem:[%s3245 + $0x150] sm:%s3238]
                %3416 = vst [vmem:[%s3246 + $0x450] sm:%s3238] %v3415
                %v3417 = vld [vmem:[%s3245 + $0x154] sm:%s3238]
                %3418 = vst [vmem:[%s3246 + $0x454] sm:%s3238] %v3417
                %v3419 = vld [vmem:[%s3245 + $0x158] sm:%s3238]
                %3420 = vst [vmem:[%s3246 + $0x458] sm:%s3238] %v3419
                %v3421 = vld [vmem:[%s3245 + $0x15c] sm:%s3238]
                %3422 = vst [vmem:[%s3246 + $0x45c] sm:%s3238] %v3421
                %v3423 = vld [vmem:[%s3245 + $0x160] sm:%s3238]
                %3424 = vst [vmem:[%s3246 + $0x460] sm:%s3238] %v3423
                %v3425 = vld [vmem:[%s3245 + $0x164] sm:%s3238]
                %3426 = vst [vmem:[%s3246 + $0x464] sm:%s3238] %v3425
                %v3427 = vld [vmem:[%s3245 + $0x168] sm:%s3238]
                %3428 = vst [vmem:[%s3246 + $0x468] sm:%s3238] %v3427
                %v3429 = vld [vmem:[%s3245 + $0x16c] sm:%s3238]
                %3430 = vst [vmem:[%s3246 + $0x46c] sm:%s3238] %v3429
                %v3431 = vld [vmem:[%s3245 + $0x170] sm:%s3238]
                %3432 = vst [vmem:[%s3246 + $0x470] sm:%s3238] %v3431
                %v3433 = vld [vmem:[%s3245 + $0x174] sm:%s3238]
                %3434 = vst [vmem:[%s3246 + $0x474] sm:%s3238] %v3433
                %v3435 = vld [vmem:[%s3245 + $0x178] sm:%s3238]
                %3436 = vst [vmem:[%s3246 + $0x478] sm:%s3238] %v3435
                %v3437 = vld [vmem:[%s3245 + $0x17c] sm:%s3238]
                %3438 = vst [vmem:[%s3246 + $0x47c] sm:%s3238] %v3437
                %v3439 = vld [vmem:[%s3245 + $0x180] sm:%s3238]
                %3440 = vst [vmem:[%s3246 + $0x600] sm:%s3238] %v3439
                %v3441 = vld [vmem:[%s3245 + $0x184] sm:%s3238]
                %3442 = vst [vmem:[%s3246 + $0x604] sm:%s3238] %v3441
                %v3443 = vld [vmem:[%s3245 + $0x188] sm:%s3238]
                %3444 = vst [vmem:[%s3246 + $0x608] sm:%s3238] %v3443
                %v3445 = vld [vmem:[%s3245 + $0x18c] sm:%s3238]
                %3446 = vst [vmem:[%s3246 + $0x60c] sm:%s3238] %v3445
                %v3447 = vld [vmem:[%s3245 + $0x190] sm:%s3238]
                %3448 = vst [vmem:[%s3246 + $0x610] sm:%s3238] %v3447
                %v3449 = vld [vmem:[%s3245 + $0x194] sm:%s3238]
                %3450 = vst [vmem:[%s3246 + $0x614] sm:%s3238] %v3449
                %v3451 = vld [vmem:[%s3245 + $0x198] sm:%s3238]
                %3452 = vst [vmem:[%s3246 + $0x618] sm:%s3238] %v3451
                %v3453 = vld [vmem:[%s3245 + $0x19c] sm:%s3238]
                %3454 = vst [vmem:[%s3246 + $0x61c] sm:%s3238] %v3453
                %v3455 = vld [vmem:[%s3245 + $0x1a0] sm:%s3238]
                %3456 = vst [vmem:[%s3246 + $0x620] sm:%s3238] %v3455
                %v3457 = vld [vmem:[%s3245 + $0x1a4] sm:%s3238]
                %3458 = vst [vmem:[%s3246 + $0x624] sm:%s3238] %v3457
                %v3459 = vld [vmem:[%s3245 + $0x1a8] sm:%s3238]
                %3460 = vst [vmem:[%s3246 + $0x628] sm:%s3238] %v3459
                %v3461 = vld [vmem:[%s3245 + $0x1ac] sm:%s3238]
                %3462 = vst [vmem:[%s3246 + $0x62c] sm:%s3238] %v3461
                %v3463 = vld [vmem:[%s3245 + $0x1b0] sm:%s3238]
                %3464 = vst [vmem:[%s3246 + $0x630] sm:%s3238] %v3463
                %v3465 = vld [vmem:[%s3245 + $0x1b4] sm:%s3238]
                %3466 = vst [vmem:[%s3246 + $0x634] sm:%s3238] %v3465
                %v3467 = vld [vmem:[%s3245 + $0x1b8] sm:%s3238]
                %3468 = vst [vmem:[%s3246 + $0x638] sm:%s3238] %v3467
                %v3469 = vld [vmem:[%s3245 + $0x1bc] sm:%s3238]
                %3470 = vst [vmem:[%s3246 + $0x63c] sm:%s3238] %v3469
                %v3471 = vld [vmem:[%s3245 + $0x1c0] sm:%s3238]
                %3472 = vst [vmem:[%s3246 + $0x640] sm:%s3238] %v3471
                %v3473 = vld [vmem:[%s3245 + $0x1c4] sm:%s3238]
                %3474 = vst [vmem:[%s3246 + $0x644] sm:%s3238] %v3473
                %v3475 = vld [vmem:[%s3245 + $0x1c8] sm:%s3238]
                %3476 = vst [vmem:[%s3246 + $0x648] sm:%s3238] %v3475
                %v3477 = vld [vmem:[%s3245 + $0x1cc] sm:%s3238]
                %3478 = vst [vmem:[%s3246 + $0x64c] sm:%s3238] %v3477
                %v3479 = vld [vmem:[%s3245 + $0x1d0] sm:%s3238]
                %3480 = vst [vmem:[%s3246 + $0x650] sm:%s3238] %v3479
                %v3481 = vld [vmem:[%s3245 + $0x1d4] sm:%s3238]
                %3482 = vst [vmem:[%s3246 + $0x654] sm:%s3238] %v3481
                %v3483 = vld [vmem:[%s3245 + $0x1d8] sm:%s3238]
                %3484 = vst [vmem:[%s3246 + $0x658] sm:%s3238] %v3483
                %v3485 = vld [vmem:[%s3245 + $0x1dc] sm:%s3238]
                %3486 = vst [vmem:[%s3246 + $0x65c] sm:%s3238] %v3485
                %v3487 = vld [vmem:[%s3245 + $0x1e0] sm:%s3238]
                %3488 = vst [vmem:[%s3246 + $0x660] sm:%s3238] %v3487
                %v3489 = vld [vmem:[%s3245 + $0x1e4] sm:%s3238]
                %3490 = vst [vmem:[%s3246 + $0x664] sm:%s3238] %v3489
                %v3491 = vld [vmem:[%s3245 + $0x1e8] sm:%s3238]
                %3492 = vst [vmem:[%s3246 + $0x668] sm:%s3238] %v3491
                %v3493 = vld [vmem:[%s3245 + $0x1ec] sm:%s3238]
                %3494 = vst [vmem:[%s3246 + $0x66c] sm:%s3238] %v3493
                %v3495 = vld [vmem:[%s3245 + $0x1f0] sm:%s3238]
                %3496 = vst [vmem:[%s3246 + $0x670] sm:%s3238] %v3495
                %v3497 = vld [vmem:[%s3245 + $0x1f4] sm:%s3238]
                %3498 = vst [vmem:[%s3246 + $0x674] sm:%s3238] %v3497
                %v3499 = vld [vmem:[%s3245 + $0x1f8] sm:%s3238]
                %3500 = vst [vmem:[%s3246 + $0x678] sm:%s3238] %v3499
                %v3501 = vld [vmem:[%s3245 + $0x1fc] sm:%s3238]
                %3502 = vst [vmem:[%s3246 + $0x67c] sm:%s3238] %v3501
              $region73: #{tpu_custom_call.1} parent=67 // loop_footer
                %s3244 = sadd.s32 1, %s3240
              $region74: #{tpu_custom_call.1} parent=67 // loop_footer_branch
                %3239 = sbr.rel target = $region70
              $region75: #{tpu_custom_call.1} parent=67 // loop_exit
                _
            $region68: #{tpu_custom_call.1} parent=59 // pred_fallthru
              _
          $region60: #{tpu_custom_call.1} parent=55 // pred_fallthru
            _
          %3779 = vnop
        $region56: #{tpu_custom_call.1} parent=39 // pred_fallthru
          _
        // Predicated region
        $region94: #{tpu_custom_call.1} parent=39 // pred_check
          %p3780 = pneg %p207
        $region95: #{tpu_custom_call.1} parent=39 // pred_check_branch
          %3782 = sbr.rel (%p3780) target = $region97
        $region96: #{tpu_custom_call.1} parent=39 // pred_region
          %s3783 = smul.u32 32, %s27
          %s3784 = smul.addr %s3783, 4
          %s3785 = scalar_lea.vmem %s7, %s3784
          // Predicated region
          $region98: #{tpu_custom_call.1} parent=96 // pred_check
            _
          $region99: #{tpu_custom_call.1} parent=96 // pred_check_branch
            %3787 = sbr.rel (0) target = $region101
          $region100: #{tpu_custom_call.1} parent=96 // pred_region
            // Predicated region
            $region102: #{tpu_custom_call.1} parent=100 // pred_check
              _
            $region103: #{tpu_custom_call.1} parent=100 // pred_check_branch
              %3789 = sbr.rel target = $region105
            $region104: #{tpu_custom_call.1} parent=100 // pred_region
              // Predicated region
              $region117: #{tpu_custom_call.1} parent=104 // pred_check
                _
              $region118: #{tpu_custom_call.1} parent=104 // pred_check_branch
                %4059 = sbr.rel (0) target = $region120
              $region119: #{tpu_custom_call.1} parent=104 // pred_region
                loop: start=0, step=1, limit=1
                $region121: #{tpu_custom_call.1} parent=119 // loop_pre_header
                  _
                $region122: #{tpu_custom_call.1} parent=119 // loop_header
                  %s4061 = sphi 0, %s4065
                  %p4062 = scmp.ge.s32.totalorder %s4061, 1
                  %s4066 = sphi %s3204, %s3204
                  %s4067 = sphi %s3785, %s3785
                $region123: #{tpu_custom_call.1} parent=119 // loop_header_branch
                  %4064 = sbr.rel (%p4062) target = $region127
                $region124: #{tpu_custom_call.1} parent=119 // loop_body
                  _
                $region125: #{tpu_custom_call.1} parent=119 // loop_footer
                  %s4065 = sadd.s32 1, %s4061
                $region126: #{tpu_custom_call.1} parent=119 // loop_footer_branch
                  %4060 = sbr.rel target = $region122
                $region127: #{tpu_custom_call.1} parent=119 // loop_exit
                  _
                %s4069 = ssub.s32 16, 1
                loop: start=0, step=1, limit=1
                $region128: #{tpu_custom_call.1} parent=119 // loop_pre_header
                  _
                $region129: #{tpu_custom_call.1} parent=119 // loop_header
                  %s4071 = sphi 0, %s4075
                  %p4072 = scmp.ge.s32.totalorder %s4071, 1
                  %s4076 = sphi %s3204, %s3204
                  %s4077 = sphi %s3785, %s3785
                $region130: #{tpu_custom_call.1} parent=119 // loop_header_branch
                  %4074 = sbr.rel (%p4072) target = $region134
                $region131: #{tpu_custom_call.1} parent=119 // loop_body
                  %v4078 = vld [vmem:[%s4076] sm:%s4069]
                  %4079 = vst [vmem:[%s4077] sm:%s4069] %v4078
                  %v4080 = vld [vmem:[%s4076 + $0x4] sm:%s4069]
                  %4081 = vst [vmem:[%s4077 + $0x4] sm:%s4069] %v4080
                  %v4082 = vld [vmem:[%s4076 + $0x8] sm:%s4069]
                  %4083 = vst [vmem:[%s4077 + $0x8] sm:%s4069] %v4082
                  %v4084 = vld [vmem:[%s4076 + $0xc] sm:%s4069]
                  %4085 = vst [vmem:[%s4077 + $0xc] sm:%s4069] %v4084
                  %v4086 = vld [vmem:[%s4076 + $0x10] sm:%s4069]
                  %4087 = vst [vmem:[%s4077 + $0x10] sm:%s4069] %v4086
                  %v4088 = vld [vmem:[%s4076 + $0x14] sm:%s4069]
                  %4089 = vst [vmem:[%s4077 + $0x14] sm:%s4069] %v4088
                  %v4090 = vld [vmem:[%s4076 + $0x18] sm:%s4069]
                  %4091 = vst [vmem:[%s4077 + $0x18] sm:%s4069] %v4090
                  %v4092 = vld [vmem:[%s4076 + $0x1c] sm:%s4069]
                  %4093 = vst [vmem:[%s4077 + $0x1c] sm:%s4069] %v4092
                  %v4094 = vld [vmem:[%s4076 + $0x20] sm:%s4069]
                  %4095 = vst [vmem:[%s4077 + $0x20] sm:%s4069] %v4094
                  %v4096 = vld [vmem:[%s4076 + $0x24] sm:%s4069]
                  %4097 = vst [vmem:[%s4077 + $0x24] sm:%s4069] %v4096
                  %v4098 = vld [vmem:[%s4076 + $0x28] sm:%s4069]
                  %4099 = vst [vmem:[%s4077 + $0x28] sm:%s4069] %v4098
                  %v4100 = vld [vmem:[%s4076 + $0x2c] sm:%s4069]
                  %4101 = vst [vmem:[%s4077 + $0x2c] sm:%s4069] %v4100
                  %v4102 = vld [vmem:[%s4076 + $0x30] sm:%s4069]
                  %4103 = vst [vmem:[%s4077 + $0x30] sm:%s4069] %v4102
                  %v4104 = vld [vmem:[%s4076 + $0x34] sm:%s4069]
                  %4105 = vst [vmem:[%s4077 + $0x34] sm:%s4069] %v4104
                  %v4106 = vld [vmem:[%s4076 + $0x38] sm:%s4069]
                  %4107 = vst [vmem:[%s4077 + $0x38] sm:%s4069] %v4106
                  %v4108 = vld [vmem:[%s4076 + $0x3c] sm:%s4069]
                  %4109 = vst [vmem:[%s4077 + $0x3c] sm:%s4069] %v4108
                  %v4110 = vld [vmem:[%s4076 + $0x40] sm:%s4069]
                  %4111 = vst [vmem:[%s4077 + $0x40] sm:%s4069] %v4110
                  %v4112 = vld [vmem:[%s4076 + $0x44] sm:%s4069]
                  %4113 = vst [vmem:[%s4077 + $0x44] sm:%s4069] %v4112
                  %v4114 = vld [vmem:[%s4076 + $0x48] sm:%s4069]
                  %4115 = vst [vmem:[%s4077 + $0x48] sm:%s4069] %v4114
                  %v4116 = vld [vmem:[%s4076 + $0x4c] sm:%s4069]
                  %4117 = vst [vmem:[%s4077 + $0x4c] sm:%s4069] %v4116
                  %v4118 = vld [vmem:[%s4076 + $0x50] sm:%s4069]
                  %4119 = vst [vmem:[%s4077 + $0x50] sm:%s4069] %v4118
                  %v4120 = vld [vmem:[%s4076 + $0x54] sm:%s4069]
                  %4121 = vst [vmem:[%s4077 + $0x54] sm:%s4069] %v4120
                  %v4122 = vld [vmem:[%s4076 + $0x58] sm:%s4069]
                  %4123 = vst [vmem:[%s4077 + $0x58] sm:%s4069] %v4122
                  %v4124 = vld [vmem:[%s4076 + $0x5c] sm:%s4069]
                  %4125 = vst [vmem:[%s4077 + $0x5c] sm:%s4069] %v4124
                  %v4126 = vld [vmem:[%s4076 + $0x60] sm:%s4069]
                  %4127 = vst [vmem:[%s4077 + $0x60] sm:%s4069] %v4126
                  %v4128 = vld [vmem:[%s4076 + $0x64] sm:%s4069]
                  %4129 = vst [vmem:[%s4077 + $0x64] sm:%s4069] %v4128
                  %v4130 = vld [vmem:[%s4076 + $0x68] sm:%s4069]
                  %4131 = vst [vmem:[%s4077 + $0x68] sm:%s4069] %v4130
                  %v4132 = vld [vmem:[%s4076 + $0x6c] sm:%s4069]
                  %4133 = vst [vmem:[%s4077 + $0x6c] sm:%s4069] %v4132
                  %v4134 = vld [vmem:[%s4076 + $0x70] sm:%s4069]
                  %4135 = vst [vmem:[%s4077 + $0x70] sm:%s4069] %v4134
                  %v4136 = vld [vmem:[%s4076 + $0x74] sm:%s4069]
                  %4137 = vst [vmem:[%s4077 + $0x74] sm:%s4069] %v4136
                  %v4138 = vld [vmem:[%s4076 + $0x78] sm:%s4069]
                  %4139 = vst [vmem:[%s4077 + $0x78] sm:%s4069] %v4138
                  %v4140 = vld [vmem:[%s4076 + $0x7c] sm:%s4069]
                  %4141 = vst [vmem:[%s4077 + $0x7c] sm:%s4069] %v4140
                  %v4142 = vld [vmem:[%s4076 + $0x80] sm:%s4069]
                  %4143 = vst [vmem:[%s4077 + $0x200] sm:%s4069] %v4142
                  %v4144 = vld [vmem:[%s4076 + $0x84] sm:%s4069]
                  %4145 = vst [vmem:[%s4077 + $0x204] sm:%s4069] %v4144
                  %v4146 = vld [vmem:[%s4076 + $0x88] sm:%s4069]
                  %4147 = vst [vmem:[%s4077 + $0x208] sm:%s4069] %v4146
                  %v4148 = vld [vmem:[%s4076 + $0x8c] sm:%s4069]
                  %4149 = vst [vmem:[%s4077 + $0x20c] sm:%s4069] %v4148
                  %v4150 = vld [vmem:[%s4076 + $0x90] sm:%s4069]
                  %4151 = vst [vmem:[%s4077 + $0x210] sm:%s4069] %v4150
                  %v4152 = vld [vmem:[%s4076 + $0x94] sm:%s4069]
                  %4153 = vst [vmem:[%s4077 + $0x214] sm:%s4069] %v4152
                  %v4154 = vld [vmem:[%s4076 + $0x98] sm:%s4069]
                  %4155 = vst [vmem:[%s4077 + $0x218] sm:%s4069] %v4154
                  %v4156 = vld [vmem:[%s4076 + $0x9c] sm:%s4069]
                  %4157 = vst [vmem:[%s4077 + $0x21c] sm:%s4069] %v4156
                  %v4158 = vld [vmem:[%s4076 + $0xa0] sm:%s4069]
                  %4159 = vst [vmem:[%s4077 + $0x220] sm:%s4069] %v4158
                  %v4160 = vld [vmem:[%s4076 + $0xa4] sm:%s4069]
                  %4161 = vst [vmem:[%s4077 + $0x224] sm:%s4069] %v4160
                  %v4162 = vld [vmem:[%s4076 + $0xa8] sm:%s4069]
                  %4163 = vst [vmem:[%s4077 + $0x228] sm:%s4069] %v4162
                  %v4164 = vld [vmem:[%s4076 + $0xac] sm:%s4069]
                  %4165 = vst [vmem:[%s4077 + $0x22c] sm:%s4069] %v4164
                  %v4166 = vld [vmem:[%s4076 + $0xb0] sm:%s4069]
                  %4167 = vst [vmem:[%s4077 + $0x230] sm:%s4069] %v4166
                  %v4168 = vld [vmem:[%s4076 + $0xb4] sm:%s4069]
                  %4169 = vst [vmem:[%s4077 + $0x234] sm:%s4069] %v4168
                  %v4170 = vld [vmem:[%s4076 + $0xb8] sm:%s4069]
                  %4171 = vst [vmem:[%s4077 + $0x238] sm:%s4069] %v4170
                  %v4172 = vld [vmem:[%s4076 + $0xbc] sm:%s4069]
                  %4173 = vst [vmem:[%s4077 + $0x23c] sm:%s4069] %v4172
                  %v4174 = vld [vmem:[%s4076 + $0xc0] sm:%s4069]
                  %4175 = vst [vmem:[%s4077 + $0x240] sm:%s4069] %v4174
                  %v4176 = vld [vmem:[%s4076 + $0xc4] sm:%s4069]
                  %4177 = vst [vmem:[%s4077 + $0x244] sm:%s4069] %v4176
                  %v4178 = vld [vmem:[%s4076 + $0xc8] sm:%s4069]
                  %4179 = vst [vmem:[%s4077 + $0x248] sm:%s4069] %v4178
                  %v4180 = vld [vmem:[%s4076 + $0xcc] sm:%s4069]
                  %4181 = vst [vmem:[%s4077 + $0x24c] sm:%s4069] %v4180
                  %v4182 = vld [vmem:[%s4076 + $0xd0] sm:%s4069]
                  %4183 = vst [vmem:[%s4077 + $0x250] sm:%s4069] %v4182
                  %v4184 = vld [vmem:[%s4076 + $0xd4] sm:%s4069]
                  %4185 = vst [vmem:[%s4077 + $0x254] sm:%s4069] %v4184
                  %v4186 = vld [vmem:[%s4076 + $0xd8] sm:%s4069]
                  %4187 = vst [vmem:[%s4077 + $0x258] sm:%s4069] %v4186
                  %v4188 = vld [vmem:[%s4076 + $0xdc] sm:%s4069]
                  %4189 = vst [vmem:[%s4077 + $0x25c] sm:%s4069] %v4188
                  %v4190 = vld [vmem:[%s4076 + $0xe0] sm:%s4069]
                  %4191 = vst [vmem:[%s4077 + $0x260] sm:%s4069] %v4190
                  %v4192 = vld [vmem:[%s4076 + $0xe4] sm:%s4069]
                  %4193 = vst [vmem:[%s4077 + $0x264] sm:%s4069] %v4192
                  %v4194 = vld [vmem:[%s4076 + $0xe8] sm:%s4069]
                  %4195 = vst [vmem:[%s4077 + $0x268] sm:%s4069] %v4194
                  %v4196 = vld [vmem:[%s4076 + $0xec] sm:%s4069]
                  %4197 = vst [vmem:[%s4077 + $0x26c] sm:%s4069] %v4196
                  %v4198 = vld [vmem:[%s4076 + $0xf0] sm:%s4069]
                  %4199 = vst [vmem:[%s4077 + $0x270] sm:%s4069] %v4198
                  %v4200 = vld [vmem:[%s4076 + $0xf4] sm:%s4069]
                  %4201 = vst [vmem:[%s4077 + $0x274] sm:%s4069] %v4200
                  %v4202 = vld [vmem:[%s4076 + $0xf8] sm:%s4069]
                  %4203 = vst [vmem:[%s4077 + $0x278] sm:%s4069] %v4202
                  %v4204 = vld [vmem:[%s4076 + $0xfc] sm:%s4069]
                  %4205 = vst [vmem:[%s4077 + $0x27c] sm:%s4069] %v4204
                  %v4206 = vld [vmem:[%s4076 + $0x100] sm:%s4069]
                  %4207 = vst [vmem:[%s4077 + $0x400] sm:%s4069] %v4206
                  %v4208 = vld [vmem:[%s4076 + $0x104] sm:%s4069]
                  %4209 = vst [vmem:[%s4077 + $0x404] sm:%s4069] %v4208
                  %v4210 = vld [vmem:[%s4076 + $0x108] sm:%s4069]
                  %4211 = vst [vmem:[%s4077 + $0x408] sm:%s4069] %v4210
                  %v4212 = vld [vmem:[%s4076 + $0x10c] sm:%s4069]
                  %4213 = vst [vmem:[%s4077 + $0x40c] sm:%s4069] %v4212
                  %v4214 = vld [vmem:[%s4076 + $0x110] sm:%s4069]
                  %4215 = vst [vmem:[%s4077 + $0x410] sm:%s4069] %v4214
                  %v4216 = vld [vmem:[%s4076 + $0x114] sm:%s4069]
                  %4217 = vst [vmem:[%s4077 + $0x414] sm:%s4069] %v4216
                  %v4218 = vld [vmem:[%s4076 + $0x118] sm:%s4069]
                  %4219 = vst [vmem:[%s4077 + $0x418] sm:%s4069] %v4218
                  %v4220 = vld [vmem:[%s4076 + $0x11c] sm:%s4069]
                  %4221 = vst [vmem:[%s4077 + $0x41c] sm:%s4069] %v4220
                  %v4222 = vld [vmem:[%s4076 + $0x120] sm:%s4069]
                  %4223 = vst [vmem:[%s4077 + $0x420] sm:%s4069] %v4222
                  %v4224 = vld [vmem:[%s4076 + $0x124] sm:%s4069]
                  %4225 = vst [vmem:[%s4077 + $0x424] sm:%s4069] %v4224
                  %v4226 = vld [vmem:[%s4076 + $0x128] sm:%s4069]
                  %4227 = vst [vmem:[%s4077 + $0x428] sm:%s4069] %v4226
                  %v4228 = vld [vmem:[%s4076 + $0x12c] sm:%s4069]
                  %4229 = vst [vmem:[%s4077 + $0x42c] sm:%s4069] %v4228
                  %v4230 = vld [vmem:[%s4076 + $0x130] sm:%s4069]
                  %4231 = vst [vmem:[%s4077 + $0x430] sm:%s4069] %v4230
                  %v4232 = vld [vmem:[%s4076 + $0x134] sm:%s4069]
                  %4233 = vst [vmem:[%s4077 + $0x434] sm:%s4069] %v4232
                  %v4234 = vld [vmem:[%s4076 + $0x138] sm:%s4069]
                  %4235 = vst [vmem:[%s4077 + $0x438] sm:%s4069] %v4234
                  %v4236 = vld [vmem:[%s4076 + $0x13c] sm:%s4069]
                  %4237 = vst [vmem:[%s4077 + $0x43c] sm:%s4069] %v4236
                  %v4238 = vld [vmem:[%s4076 + $0x140] sm:%s4069]
                  %4239 = vst [vmem:[%s4077 + $0x440] sm:%s4069] %v4238
                  %v4240 = vld [vmem:[%s4076 + $0x144] sm:%s4069]
                  %4241 = vst [vmem:[%s4077 + $0x444] sm:%s4069] %v4240
                  %v4242 = vld [vmem:[%s4076 + $0x148] sm:%s4069]
                  %4243 = vst [vmem:[%s4077 + $0x448] sm:%s4069] %v4242
                  %v4244 = vld [vmem:[%s4076 + $0x14c] sm:%s4069]
                  %4245 = vst [vmem:[%s4077 + $0x44c] sm:%s4069] %v4244
                  %v4246 = vld [vmem:[%s4076 + $0x150] sm:%s4069]
                  %4247 = vst [vmem:[%s4077 + $0x450] sm:%s4069] %v4246
                  %v4248 = vld [vmem:[%s4076 + $0x154] sm:%s4069]
                  %4249 = vst [vmem:[%s4077 + $0x454] sm:%s4069] %v4248
                  %v4250 = vld [vmem:[%s4076 + $0x158] sm:%s4069]
                  %4251 = vst [vmem:[%s4077 + $0x458] sm:%s4069] %v4250
                  %v4252 = vld [vmem:[%s4076 + $0x15c] sm:%s4069]
                  %4253 = vst [vmem:[%s4077 + $0x45c] sm:%s4069] %v4252
                  %v4254 = vld [vmem:[%s4076 + $0x160] sm:%s4069]
                  %4255 = vst [vmem:[%s4077 + $0x460] sm:%s4069] %v4254
                  %v4256 = vld [vmem:[%s4076 + $0x164] sm:%s4069]
                  %4257 = vst [vmem:[%s4077 + $0x464] sm:%s4069] %v4256
                  %v4258 = vld [vmem:[%s4076 + $0x168] sm:%s4069]
                  %4259 = vst [vmem:[%s4077 + $0x468] sm:%s4069] %v4258
                  %v4260 = vld [vmem:[%s4076 + $0x16c] sm:%s4069]
                  %4261 = vst [vmem:[%s4077 + $0x46c] sm:%s4069] %v4260
                  %v4262 = vld [vmem:[%s4076 + $0x170] sm:%s4069]
                  %4263 = vst [vmem:[%s4077 + $0x470] sm:%s4069] %v4262
                  %v4264 = vld [vmem:[%s4076 + $0x174] sm:%s4069]
                  %4265 = vst [vmem:[%s4077 + $0x474] sm:%s4069] %v4264
                  %v4266 = vld [vmem:[%s4076 + $0x178] sm:%s4069]
                  %4267 = vst [vmem:[%s4077 + $0x478] sm:%s4069] %v4266
                  %v4268 = vld [vmem:[%s4076 + $0x17c] sm:%s4069]
                  %4269 = vst [vmem:[%s4077 + $0x47c] sm:%s4069] %v4268
                  %v4270 = vld [vmem:[%s4076 + $0x180] sm:%s4069]
                  %4271 = vst [vmem:[%s4077 + $0x600] sm:%s4069] %v4270
                  %v4272 = vld [vmem:[%s4076 + $0x184] sm:%s4069]
                  %4273 = vst [vmem:[%s4077 + $0x604] sm:%s4069] %v4272
                  %v4274 = vld [vmem:[%s4076 + $0x188] sm:%s4069]
                  %4275 = vst [vmem:[%s4077 + $0x608] sm:%s4069] %v4274
                  %v4276 = vld [vmem:[%s4076 + $0x18c] sm:%s4069]
                  %4277 = vst [vmem:[%s4077 + $0x60c] sm:%s4069] %v4276
                  %v4278 = vld [vmem:[%s4076 + $0x190] sm:%s4069]
                  %4279 = vst [vmem:[%s4077 + $0x610] sm:%s4069] %v4278
                  %v4280 = vld [vmem:[%s4076 + $0x194] sm:%s4069]
                  %4281 = vst [vmem:[%s4077 + $0x614] sm:%s4069] %v4280
                  %v4282 = vld [vmem:[%s4076 + $0x198] sm:%s4069]
                  %4283 = vst [vmem:[%s4077 + $0x618] sm:%s4069] %v4282
                  %v4284 = vld [vmem:[%s4076 + $0x19c] sm:%s4069]
                  %4285 = vst [vmem:[%s4077 + $0x61c] sm:%s4069] %v4284
                  %v4286 = vld [vmem:[%s4076 + $0x1a0] sm:%s4069]
                  %4287 = vst [vmem:[%s4077 + $0x620] sm:%s4069] %v4286
                  %v4288 = vld [vmem:[%s4076 + $0x1a4] sm:%s4069]
                  %4289 = vst [vmem:[%s4077 + $0x624] sm:%s4069] %v4288
                  %v4290 = vld [vmem:[%s4076 + $0x1a8] sm:%s4069]
                  %4291 = vst [vmem:[%s4077 + $0x628] sm:%s4069] %v4290
                  %v4292 = vld [vmem:[%s4076 + $0x1ac] sm:%s4069]
                  %4293 = vst [vmem:[%s4077 + $0x62c] sm:%s4069] %v4292
                  %v4294 = vld [vmem:[%s4076 + $0x1b0] sm:%s4069]
                  %4295 = vst [vmem:[%s4077 + $0x630] sm:%s4069] %v4294
                  %v4296 = vld [vmem:[%s4076 + $0x1b4] sm:%s4069]
                  %4297 = vst [vmem:[%s4077 + $0x634] sm:%s4069] %v4296
                  %v4298 = vld [vmem:[%s4076 + $0x1b8] sm:%s4069]
                  %4299 = vst [vmem:[%s4077 + $0x638] sm:%s4069] %v4298
                  %v4300 = vld [vmem:[%s4076 + $0x1bc] sm:%s4069]
                  %4301 = vst [vmem:[%s4077 + $0x63c] sm:%s4069] %v4300
                  %v4302 = vld [vmem:[%s4076 + $0x1c0] sm:%s4069]
                  %4303 = vst [vmem:[%s4077 + $0x640] sm:%s4069] %v4302
                  %v4304 = vld [vmem:[%s4076 + $0x1c4] sm:%s4069]
                  %4305 = vst [vmem:[%s4077 + $0x644] sm:%s4069] %v4304
                  %v4306 = vld [vmem:[%s4076 + $0x1c8] sm:%s4069]
                  %4307 = vst [vmem:[%s4077 + $0x648] sm:%s4069] %v4306
                  %v4308 = vld [vmem:[%s4076 + $0x1cc] sm:%s4069]
                  %4309 = vst [vmem:[%s4077 + $0x64c] sm:%s4069] %v4308
                  %v4310 = vld [vmem:[%s4076 + $0x1d0] sm:%s4069]
                  %4311 = vst [vmem:[%s4077 + $0x650] sm:%s4069] %v4310
                  %v4312 = vld [vmem:[%s4076 + $0x1d4] sm:%s4069]
                  %4313 = vst [vmem:[%s4077 + $0x654] sm:%s4069] %v4312
                  %v4314 = vld [vmem:[%s4076 + $0x1d8] sm:%s4069]
                  %4315 = vst [vmem:[%s4077 + $0x658] sm:%s4069] %v4314
                  %v4316 = vld [vmem:[%s4076 + $0x1dc] sm:%s4069]
                  %4317 = vst [vmem:[%s4077 + $0x65c] sm:%s4069] %v4316
                  %v4318 = vld [vmem:[%s4076 + $0x1e0] sm:%s4069]
                  %4319 = vst [vmem:[%s4077 + $0x660] sm:%s4069] %v4318
                  %v4320 = vld [vmem:[%s4076 + $0x1e4] sm:%s4069]
                  %4321 = vst [vmem:[%s4077 + $0x664] sm:%s4069] %v4320
                  %v4322 = vld [vmem:[%s4076 + $0x1e8] sm:%s4069]
                  %4323 = vst [vmem:[%s4077 + $0x668] sm:%s4069] %v4322
                  %v4324 = vld [vmem:[%s4076 + $0x1ec] sm:%s4069]
                  %4325 = vst [vmem:[%s4077 + $0x66c] sm:%s4069] %v4324
                  %v4326 = vld [vmem:[%s4076 + $0x1f0] sm:%s4069]
                  %4327 = vst [vmem:[%s4077 + $0x670] sm:%s4069] %v4326
                  %v4328 = vld [vmem:[%s4076 + $0x1f4] sm:%s4069]
                  %4329 = vst [vmem:[%s4077 + $0x674] sm:%s4069] %v4328
                  %v4330 = vld [vmem:[%s4076 + $0x1f8] sm:%s4069]
                  %4331 = vst [vmem:[%s4077 + $0x678] sm:%s4069] %v4330
                  %v4332 = vld [vmem:[%s4076 + $0x1fc] sm:%s4069]
                  %4333 = vst [vmem:[%s4077 + $0x67c] sm:%s4069] %v4332
                $region132: #{tpu_custom_call.1} parent=119 // loop_footer
                  %s4075 = sadd.s32 1, %s4071
                $region133: #{tpu_custom_call.1} parent=119 // loop_footer_branch
                  %4070 = sbr.rel target = $region129
                $region134: #{tpu_custom_call.1} parent=119 // loop_exit
                  _
              $region120: #{tpu_custom_call.1} parent=104 // pred_fallthru
                _
            $region105: #{tpu_custom_call.1} parent=100 // pred_fallthru
              _
            // Predicated region
            $region106: #{tpu_custom_call.1} parent=100 // pred_check
              _
            $region107: #{tpu_custom_call.1} parent=100 // pred_check_branch
              %3791 = sbr.rel (0) target = $region109
            $region108: #{tpu_custom_call.1} parent=100 // pred_region
              %s3793 = ssub.s32 16, 1
              loop: start=0, step=1, limit=1
              $region110: #{tpu_custom_call.1} parent=108 // loop_pre_header
                _
              $region111: #{tpu_custom_call.1} parent=108 // loop_header
                %s3795 = sphi 0, %s3799
                %p3796 = scmp.ge.s32.totalorder %s3795, 1
                %s3800 = sphi %s3204, %s3204
                %s3801 = sphi %s3785, %s3785
              $region112: #{tpu_custom_call.1} parent=108 // loop_header_branch
                %3798 = sbr.rel (%p3796) target = $region116
              $region113: #{tpu_custom_call.1} parent=108 // loop_body
                %v3802 = vld [vmem:[%s3800] sm:%s3793]
                %3803 = vst [vmem:[%s3801] sm:%s3793] %v3802
                %v3804 = vld [vmem:[%s3800 + $0x4] sm:%s3793]
                %3805 = vst [vmem:[%s3801 + $0x4] sm:%s3793] %v3804
                %v3806 = vld [vmem:[%s3800 + $0x8] sm:%s3793]
                %3807 = vst [vmem:[%s3801 + $0x8] sm:%s3793] %v3806
                %v3808 = vld [vmem:[%s3800 + $0xc] sm:%s3793]
                %3809 = vst [vmem:[%s3801 + $0xc] sm:%s3793] %v3808
                %v3810 = vld [vmem:[%s3800 + $0x10] sm:%s3793]
                %3811 = vst [vmem:[%s3801 + $0x10] sm:%s3793] %v3810
                %v3812 = vld [vmem:[%s3800 + $0x14] sm:%s3793]
                %3813 = vst [vmem:[%s3801 + $0x14] sm:%s3793] %v3812
                %v3814 = vld [vmem:[%s3800 + $0x18] sm:%s3793]
                %3815 = vst [vmem:[%s3801 + $0x18] sm:%s3793] %v3814
                %v3816 = vld [vmem:[%s3800 + $0x1c] sm:%s3793]
                %3817 = vst [vmem:[%s3801 + $0x1c] sm:%s3793] %v3816
                %v3818 = vld [vmem:[%s3800 + $0x20] sm:%s3793]
                %3819 = vst [vmem:[%s3801 + $0x20] sm:%s3793] %v3818
                %v3820 = vld [vmem:[%s3800 + $0x24] sm:%s3793]
                %3821 = vst [vmem:[%s3801 + $0x24] sm:%s3793] %v3820
                %v3822 = vld [vmem:[%s3800 + $0x28] sm:%s3793]
                %3823 = vst [vmem:[%s3801 + $0x28] sm:%s3793] %v3822
                %v3824 = vld [vmem:[%s3800 + $0x2c] sm:%s3793]
                %3825 = vst [vmem:[%s3801 + $0x2c] sm:%s3793] %v3824
                %v3826 = vld [vmem:[%s3800 + $0x30] sm:%s3793]
                %3827 = vst [vmem:[%s3801 + $0x30] sm:%s3793] %v3826
                %v3828 = vld [vmem:[%s3800 + $0x34] sm:%s3793]
                %3829 = vst [vmem:[%s3801 + $0x34] sm:%s3793] %v3828
                %v3830 = vld [vmem:[%s3800 + $0x38] sm:%s3793]
                %3831 = vst [vmem:[%s3801 + $0x38] sm:%s3793] %v3830
                %v3832 = vld [vmem:[%s3800 + $0x3c] sm:%s3793]
                %3833 = vst [vmem:[%s3801 + $0x3c] sm:%s3793] %v3832
                %v3834 = vld [vmem:[%s3800 + $0x40] sm:%s3793]
                %3835 = vst [vmem:[%s3801 + $0x40] sm:%s3793] %v3834
                %v3836 = vld [vmem:[%s3800 + $0x44] sm:%s3793]
                %3837 = vst [vmem:[%s3801 + $0x44] sm:%s3793] %v3836
                %v3838 = vld [vmem:[%s3800 + $0x48] sm:%s3793]
                %3839 = vst [vmem:[%s3801 + $0x48] sm:%s3793] %v3838
                %v3840 = vld [vmem:[%s3800 + $0x4c] sm:%s3793]
                %3841 = vst [vmem:[%s3801 + $0x4c] sm:%s3793] %v3840
                %v3842 = vld [vmem:[%s3800 + $0x50] sm:%s3793]
                %3843 = vst [vmem:[%s3801 + $0x50] sm:%s3793] %v3842
                %v3844 = vld [vmem:[%s3800 + $0x54] sm:%s3793]
                %3845 = vst [vmem:[%s3801 + $0x54] sm:%s3793] %v3844
                %v3846 = vld [vmem:[%s3800 + $0x58] sm:%s3793]
                %3847 = vst [vmem:[%s3801 + $0x58] sm:%s3793] %v3846
                %v3848 = vld [vmem:[%s3800 + $0x5c] sm:%s3793]
                %3849 = vst [vmem:[%s3801 + $0x5c] sm:%s3793] %v3848
                %v3850 = vld [vmem:[%s3800 + $0x60] sm:%s3793]
                %3851 = vst [vmem:[%s3801 + $0x60] sm:%s3793] %v3850
                %v3852 = vld [vmem:[%s3800 + $0x64] sm:%s3793]
                %3853 = vst [vmem:[%s3801 + $0x64] sm:%s3793] %v3852
                %v3854 = vld [vmem:[%s3800 + $0x68] sm:%s3793]
                %3855 = vst [vmem:[%s3801 + $0x68] sm:%s3793] %v3854
                %v3856 = vld [vmem:[%s3800 + $0x6c] sm:%s3793]
                %3857 = vst [vmem:[%s3801 + $0x6c] sm:%s3793] %v3856
                %v3858 = vld [vmem:[%s3800 + $0x70] sm:%s3793]
                %3859 = vst [vmem:[%s3801 + $0x70] sm:%s3793] %v3858
                %v3860 = vld [vmem:[%s3800 + $0x74] sm:%s3793]
                %3861 = vst [vmem:[%s3801 + $0x74] sm:%s3793] %v3860
                %v3862 = vld [vmem:[%s3800 + $0x78] sm:%s3793]
                %3863 = vst [vmem:[%s3801 + $0x78] sm:%s3793] %v3862
                %v3864 = vld [vmem:[%s3800 + $0x7c] sm:%s3793]
                %3865 = vst [vmem:[%s3801 + $0x7c] sm:%s3793] %v3864
                %v3866 = vld [vmem:[%s3800 + $0x80] sm:%s3793]
                %3867 = vst [vmem:[%s3801 + $0x200] sm:%s3793] %v3866
                %v3868 = vld [vmem:[%s3800 + $0x84] sm:%s3793]
                %3869 = vst [vmem:[%s3801 + $0x204] sm:%s3793] %v3868
                %v3870 = vld [vmem:[%s3800 + $0x88] sm:%s3793]
                %3871 = vst [vmem:[%s3801 + $0x208] sm:%s3793] %v3870
                %v3872 = vld [vmem:[%s3800 + $0x8c] sm:%s3793]
                %3873 = vst [vmem:[%s3801 + $0x20c] sm:%s3793] %v3872
                %v3874 = vld [vmem:[%s3800 + $0x90] sm:%s3793]
                %3875 = vst [vmem:[%s3801 + $0x210] sm:%s3793] %v3874
                %v3876 = vld [vmem:[%s3800 + $0x94] sm:%s3793]
                %3877 = vst [vmem:[%s3801 + $0x214] sm:%s3793] %v3876
                %v3878 = vld [vmem:[%s3800 + $0x98] sm:%s3793]
                %3879 = vst [vmem:[%s3801 + $0x218] sm:%s3793] %v3878
                %v3880 = vld [vmem:[%s3800 + $0x9c] sm:%s3793]
                %3881 = vst [vmem:[%s3801 + $0x21c] sm:%s3793] %v3880
                %v3882 = vld [vmem:[%s3800 + $0xa0] sm:%s3793]
                %3883 = vst [vmem:[%s3801 + $0x220] sm:%s3793] %v3882
                %v3884 = vld [vmem:[%s3800 + $0xa4] sm:%s3793]
                %3885 = vst [vmem:[%s3801 + $0x224] sm:%s3793] %v3884
                %v3886 = vld [vmem:[%s3800 + $0xa8] sm:%s3793]
                %3887 = vst [vmem:[%s3801 + $0x228] sm:%s3793] %v3886
                %v3888 = vld [vmem:[%s3800 + $0xac] sm:%s3793]
                %3889 = vst [vmem:[%s3801 + $0x22c] sm:%s3793] %v3888
                %v3890 = vld [vmem:[%s3800 + $0xb0] sm:%s3793]
                %3891 = vst [vmem:[%s3801 + $0x230] sm:%s3793] %v3890
                %v3892 = vld [vmem:[%s3800 + $0xb4] sm:%s3793]
                %3893 = vst [vmem:[%s3801 + $0x234] sm:%s3793] %v3892
                %v3894 = vld [vmem:[%s3800 + $0xb8] sm:%s3793]
                %3895 = vst [vmem:[%s3801 + $0x238] sm:%s3793] %v3894
                %v3896 = vld [vmem:[%s3800 + $0xbc] sm:%s3793]
                %3897 = vst [vmem:[%s3801 + $0x23c] sm:%s3793] %v3896
                %v3898 = vld [vmem:[%s3800 + $0xc0] sm:%s3793]
                %3899 = vst [vmem:[%s3801 + $0x240] sm:%s3793] %v3898
                %v3900 = vld [vmem:[%s3800 + $0xc4] sm:%s3793]
                %3901 = vst [vmem:[%s3801 + $0x244] sm:%s3793] %v3900
                %v3902 = vld [vmem:[%s3800 + $0xc8] sm:%s3793]
                %3903 = vst [vmem:[%s3801 + $0x248] sm:%s3793] %v3902
                %v3904 = vld [vmem:[%s3800 + $0xcc] sm:%s3793]
                %3905 = vst [vmem:[%s3801 + $0x24c] sm:%s3793] %v3904
                %v3906 = vld [vmem:[%s3800 + $0xd0] sm:%s3793]
                %3907 = vst [vmem:[%s3801 + $0x250] sm:%s3793] %v3906
                %v3908 = vld [vmem:[%s3800 + $0xd4] sm:%s3793]
                %3909 = vst [vmem:[%s3801 + $0x254] sm:%s3793] %v3908
                %v3910 = vld [vmem:[%s3800 + $0xd8] sm:%s3793]
                %3911 = vst [vmem:[%s3801 + $0x258] sm:%s3793] %v3910
                %v3912 = vld [vmem:[%s3800 + $0xdc] sm:%s3793]
                %3913 = vst [vmem:[%s3801 + $0x25c] sm:%s3793] %v3912
                %v3914 = vld [vmem:[%s3800 + $0xe0] sm:%s3793]
                %3915 = vst [vmem:[%s3801 + $0x260] sm:%s3793] %v3914
                %v3916 = vld [vmem:[%s3800 + $0xe4] sm:%s3793]
                %3917 = vst [vmem:[%s3801 + $0x264] sm:%s3793] %v3916
                %v3918 = vld [vmem:[%s3800 + $0xe8] sm:%s3793]
                %3919 = vst [vmem:[%s3801 + $0x268] sm:%s3793] %v3918
                %v3920 = vld [vmem:[%s3800 + $0xec] sm:%s3793]
                %3921 = vst [vmem:[%s3801 + $0x26c] sm:%s3793] %v3920
                %v3922 = vld [vmem:[%s3800 + $0xf0] sm:%s3793]
                %3923 = vst [vmem:[%s3801 + $0x270] sm:%s3793] %v3922
                %v3924 = vld [vmem:[%s3800 + $0xf4] sm:%s3793]
                %3925 = vst [vmem:[%s3801 + $0x274] sm:%s3793] %v3924
                %v3926 = vld [vmem:[%s3800 + $0xf8] sm:%s3793]
                %3927 = vst [vmem:[%s3801 + $0x278] sm:%s3793] %v3926
                %v3928 = vld [vmem:[%s3800 + $0xfc] sm:%s3793]
                %3929 = vst [vmem:[%s3801 + $0x27c] sm:%s3793] %v3928
                %v3930 = vld [vmem:[%s3800 + $0x100] sm:%s3793]
                %3931 = vst [vmem:[%s3801 + $0x400] sm:%s3793] %v3930
                %v3932 = vld [vmem:[%s3800 + $0x104] sm:%s3793]
                %3933 = vst [vmem:[%s3801 + $0x404] sm:%s3793] %v3932
                %v3934 = vld [vmem:[%s3800 + $0x108] sm:%s3793]
                %3935 = vst [vmem:[%s3801 + $0x408] sm:%s3793] %v3934
                %v3936 = vld [vmem:[%s3800 + $0x10c] sm:%s3793]
                %3937 = vst [vmem:[%s3801 + $0x40c] sm:%s3793] %v3936
                %v3938 = vld [vmem:[%s3800 + $0x110] sm:%s3793]
                %3939 = vst [vmem:[%s3801 + $0x410] sm:%s3793] %v3938
                %v3940 = vld [vmem:[%s3800 + $0x114] sm:%s3793]
                %3941 = vst [vmem:[%s3801 + $0x414] sm:%s3793] %v3940
                %v3942 = vld [vmem:[%s3800 + $0x118] sm:%s3793]
                %3943 = vst [vmem:[%s3801 + $0x418] sm:%s3793] %v3942
                %v3944 = vld [vmem:[%s3800 + $0x11c] sm:%s3793]
                %3945 = vst [vmem:[%s3801 + $0x41c] sm:%s3793] %v3944
                %v3946 = vld [vmem:[%s3800 + $0x120] sm:%s3793]
                %3947 = vst [vmem:[%s3801 + $0x420] sm:%s3793] %v3946
                %v3948 = vld [vmem:[%s3800 + $0x124] sm:%s3793]
                %3949 = vst [vmem:[%s3801 + $0x424] sm:%s3793] %v3948
                %v3950 = vld [vmem:[%s3800 + $0x128] sm:%s3793]
                %3951 = vst [vmem:[%s3801 + $0x428] sm:%s3793] %v3950
                %v3952 = vld [vmem:[%s3800 + $0x12c] sm:%s3793]
                %3953 = vst [vmem:[%s3801 + $0x42c] sm:%s3793] %v3952
                %v3954 = vld [vmem:[%s3800 + $0x130] sm:%s3793]
                %3955 = vst [vmem:[%s3801 + $0x430] sm:%s3793] %v3954
                %v3956 = vld [vmem:[%s3800 + $0x134] sm:%s3793]
                %3957 = vst [vmem:[%s3801 + $0x434] sm:%s3793] %v3956
                %v3958 = vld [vmem:[%s3800 + $0x138] sm:%s3793]
                %3959 = vst [vmem:[%s3801 + $0x438] sm:%s3793] %v3958
                %v3960 = vld [vmem:[%s3800 + $0x13c] sm:%s3793]
                %3961 = vst [vmem:[%s3801 + $0x43c] sm:%s3793] %v3960
                %v3962 = vld [vmem:[%s3800 + $0x140] sm:%s3793]
                %3963 = vst [vmem:[%s3801 + $0x440] sm:%s3793] %v3962
                %v3964 = vld [vmem:[%s3800 + $0x144] sm:%s3793]
                %3965 = vst [vmem:[%s3801 + $0x444] sm:%s3793] %v3964
                %v3966 = vld [vmem:[%s3800 + $0x148] sm:%s3793]
                %3967 = vst [vmem:[%s3801 + $0x448] sm:%s3793] %v3966
                %v3968 = vld [vmem:[%s3800 + $0x14c] sm:%s3793]
                %3969 = vst [vmem:[%s3801 + $0x44c] sm:%s3793] %v3968
                %v3970 = vld [vmem:[%s3800 + $0x150] sm:%s3793]
                %3971 = vst [vmem:[%s3801 + $0x450] sm:%s3793] %v3970
                %v3972 = vld [vmem:[%s3800 + $0x154] sm:%s3793]
                %3973 = vst [vmem:[%s3801 + $0x454] sm:%s3793] %v3972
                %v3974 = vld [vmem:[%s3800 + $0x158] sm:%s3793]
                %3975 = vst [vmem:[%s3801 + $0x458] sm:%s3793] %v3974
                %v3976 = vld [vmem:[%s3800 + $0x15c] sm:%s3793]
                %3977 = vst [vmem:[%s3801 + $0x45c] sm:%s3793] %v3976
                %v3978 = vld [vmem:[%s3800 + $0x160] sm:%s3793]
                %3979 = vst [vmem:[%s3801 + $0x460] sm:%s3793] %v3978
                %v3980 = vld [vmem:[%s3800 + $0x164] sm:%s3793]
                %3981 = vst [vmem:[%s3801 + $0x464] sm:%s3793] %v3980
                %v3982 = vld [vmem:[%s3800 + $0x168] sm:%s3793]
                %3983 = vst [vmem:[%s3801 + $0x468] sm:%s3793] %v3982
                %v3984 = vld [vmem:[%s3800 + $0x16c] sm:%s3793]
                %3985 = vst [vmem:[%s3801 + $0x46c] sm:%s3793] %v3984
                %v3986 = vld [vmem:[%s3800 + $0x170] sm:%s3793]
                %3987 = vst [vmem:[%s3801 + $0x470] sm:%s3793] %v3986
                %v3988 = vld [vmem:[%s3800 + $0x174] sm:%s3793]
                %3989 = vst [vmem:[%s3801 + $0x474] sm:%s3793] %v3988
                %v3990 = vld [vmem:[%s3800 + $0x178] sm:%s3793]
                %3991 = vst [vmem:[%s3801 + $0x478] sm:%s3793] %v3990
                %v3992 = vld [vmem:[%s3800 + $0x17c] sm:%s3793]
                %3993 = vst [vmem:[%s3801 + $0x47c] sm:%s3793] %v3992
                %v3994 = vld [vmem:[%s3800 + $0x180] sm:%s3793]
                %3995 = vst [vmem:[%s3801 + $0x600] sm:%s3793] %v3994
                %v3996 = vld [vmem:[%s3800 + $0x184] sm:%s3793]
                %3997 = vst [vmem:[%s3801 + $0x604] sm:%s3793] %v3996
                %v3998 = vld [vmem:[%s3800 + $0x188] sm:%s3793]
                %3999 = vst [vmem:[%s3801 + $0x608] sm:%s3793] %v3998
                %v4000 = vld [vmem:[%s3800 + $0x18c] sm:%s3793]
                %4001 = vst [vmem:[%s3801 + $0x60c] sm:%s3793] %v4000
                %v4002 = vld [vmem:[%s3800 + $0x190] sm:%s3793]
                %4003 = vst [vmem:[%s3801 + $0x610] sm:%s3793] %v4002
                %v4004 = vld [vmem:[%s3800 + $0x194] sm:%s3793]
                %4005 = vst [vmem:[%s3801 + $0x614] sm:%s3793] %v4004
                %v4006 = vld [vmem:[%s3800 + $0x198] sm:%s3793]
                %4007 = vst [vmem:[%s3801 + $0x618] sm:%s3793] %v4006
                %v4008 = vld [vmem:[%s3800 + $0x19c] sm:%s3793]
                %4009 = vst [vmem:[%s3801 + $0x61c] sm:%s3793] %v4008
                %v4010 = vld [vmem:[%s3800 + $0x1a0] sm:%s3793]
                %4011 = vst [vmem:[%s3801 + $0x620] sm:%s3793] %v4010
                %v4012 = vld [vmem:[%s3800 + $0x1a4] sm:%s3793]
                %4013 = vst [vmem:[%s3801 + $0x624] sm:%s3793] %v4012
                %v4014 = vld [vmem:[%s3800 + $0x1a8] sm:%s3793]
                %4015 = vst [vmem:[%s3801 + $0x628] sm:%s3793] %v4014
                %v4016 = vld [vmem:[%s3800 + $0x1ac] sm:%s3793]
                %4017 = vst [vmem:[%s3801 + $0x62c] sm:%s3793] %v4016
                %v4018 = vld [vmem:[%s3800 + $0x1b0] sm:%s3793]
                %4019 = vst [vmem:[%s3801 + $0x630] sm:%s3793] %v4018
                %v4020 = vld [vmem:[%s3800 + $0x1b4] sm:%s3793]
                %4021 = vst [vmem:[%s3801 + $0x634] sm:%s3793] %v4020
                %v4022 = vld [vmem:[%s3800 + $0x1b8] sm:%s3793]
                %4023 = vst [vmem:[%s3801 + $0x638] sm:%s3793] %v4022
                %v4024 = vld [vmem:[%s3800 + $0x1bc] sm:%s3793]
                %4025 = vst [vmem:[%s3801 + $0x63c] sm:%s3793] %v4024
                %v4026 = vld [vmem:[%s3800 + $0x1c0] sm:%s3793]
                %4027 = vst [vmem:[%s3801 + $0x640] sm:%s3793] %v4026
                %v4028 = vld [vmem:[%s3800 + $0x1c4] sm:%s3793]
                %4029 = vst [vmem:[%s3801 + $0x644] sm:%s3793] %v4028
                %v4030 = vld [vmem:[%s3800 + $0x1c8] sm:%s3793]
                %4031 = vst [vmem:[%s3801 + $0x648] sm:%s3793] %v4030
                %v4032 = vld [vmem:[%s3800 + $0x1cc] sm:%s3793]
                %4033 = vst [vmem:[%s3801 + $0x64c] sm:%s3793] %v4032
                %v4034 = vld [vmem:[%s3800 + $0x1d0] sm:%s3793]
                %4035 = vst [vmem:[%s3801 + $0x650] sm:%s3793] %v4034
                %v4036 = vld [vmem:[%s3800 + $0x1d4] sm:%s3793]
                %4037 = vst [vmem:[%s3801 + $0x654] sm:%s3793] %v4036
                %v4038 = vld [vmem:[%s3800 + $0x1d8] sm:%s3793]
                %4039 = vst [vmem:[%s3801 + $0x658] sm:%s3793] %v4038
                %v4040 = vld [vmem:[%s3800 + $0x1dc] sm:%s3793]
                %4041 = vst [vmem:[%s3801 + $0x65c] sm:%s3793] %v4040
                %v4042 = vld [vmem:[%s3800 + $0x1e0] sm:%s3793]
                %4043 = vst [vmem:[%s3801 + $0x660] sm:%s3793] %v4042
                %v4044 = vld [vmem:[%s3800 + $0x1e4] sm:%s3793]
                %4045 = vst [vmem:[%s3801 + $0x664] sm:%s3793] %v4044
                %v4046 = vld [vmem:[%s3800 + $0x1e8] sm:%s3793]
                %4047 = vst [vmem:[%s3801 + $0x668] sm:%s3793] %v4046
                %v4048 = vld [vmem:[%s3800 + $0x1ec] sm:%s3793]
                %4049 = vst [vmem:[%s3801 + $0x66c] sm:%s3793] %v4048
                %v4050 = vld [vmem:[%s3800 + $0x1f0] sm:%s3793]
                %4051 = vst [vmem:[%s3801 + $0x670] sm:%s3793] %v4050
                %v4052 = vld [vmem:[%s3800 + $0x1f4] sm:%s3793]
                %4053 = vst [vmem:[%s3801 + $0x674] sm:%s3793] %v4052
                %v4054 = vld [vmem:[%s3800 + $0x1f8] sm:%s3793]
                %4055 = vst [vmem:[%s3801 + $0x678] sm:%s3793] %v4054
                %v4056 = vld [vmem:[%s3800 + $0x1fc] sm:%s3793]
                %4057 = vst [vmem:[%s3801 + $0x67c] sm:%s3793] %v4056
              $region114: #{tpu_custom_call.1} parent=108 // loop_footer
                %s3799 = sadd.s32 1, %s3795
              $region115: #{tpu_custom_call.1} parent=108 // loop_footer_branch
                %3794 = sbr.rel target = $region111
              $region116: #{tpu_custom_call.1} parent=108 // loop_exit
                _
            $region109: #{tpu_custom_call.1} parent=100 // pred_fallthru
              _
          $region101: #{tpu_custom_call.1} parent=96 // pred_fallthru
            _
          %4334 = vnop
        $region97: #{tpu_custom_call.1} parent=39 // pred_fallthru
          _
        // Predicated region
        $region135: #{tpu_custom_call.1} parent=39 // pred_check
          %p4335 = pneg %p233
        $region136: #{tpu_custom_call.1} parent=39 // pred_check_branch
          %4337 = sbr.rel (%p4335) target = $region138
        $region137: #{tpu_custom_call.1} parent=39 // pred_region
          %s4338 = smul.u32 32, %s27
          %s4339 = smul.addr %s4338, 4
          %s4340 = scalar_lea.vmem %s8, %s4339
          // Predicated region
          $region139: #{tpu_custom_call.1} parent=137 // pred_check
            _
          $region140: #{tpu_custom_call.1} parent=137 // pred_check_branch
            %4342 = sbr.rel (0) target = $region142
          $region141: #{tpu_custom_call.1} parent=137 // pred_region
            // Predicated region
            $region143: #{tpu_custom_call.1} parent=141 // pred_check
              _
            $region144: #{tpu_custom_call.1} parent=141 // pred_check_branch
              %4344 = sbr.rel target = $region146
            $region145: #{tpu_custom_call.1} parent=141 // pred_region
              // Predicated region
              $region158: #{tpu_custom_call.1} parent=145 // pred_check
                _
              $region159: #{tpu_custom_call.1} parent=145 // pred_check_branch
                %4614 = sbr.rel (0) target = $region161
              $region160: #{tpu_custom_call.1} parent=145 // pred_region
                loop: start=0, step=1, limit=1
                $region162: #{tpu_custom_call.1} parent=160 // loop_pre_header
                  _
                $region163: #{tpu_custom_call.1} parent=160 // loop_header
                  %s4616 = sphi 0, %s4620
                  %p4617 = scmp.ge.s32.totalorder %s4616, 1
                  %s4621 = sphi %s3208, %s3208
                  %s4622 = sphi %s4340, %s4340
                $region164: #{tpu_custom_call.1} parent=160 // loop_header_branch
                  %4619 = sbr.rel (%p4617) target = $region168
                $region165: #{tpu_custom_call.1} parent=160 // loop_body
                  _
                $region166: #{tpu_custom_call.1} parent=160 // loop_footer
                  %s4620 = sadd.s32 1, %s4616
                $region167: #{tpu_custom_call.1} parent=160 // loop_footer_branch
                  %4615 = sbr.rel target = $region163
                $region168: #{tpu_custom_call.1} parent=160 // loop_exit
                  _
                %s4624 = ssub.s32 16, 1
                loop: start=0, step=1, limit=1
                $region169: #{tpu_custom_call.1} parent=160 // loop_pre_header
                  _
                $region170: #{tpu_custom_call.1} parent=160 // loop_header
                  %s4626 = sphi 0, %s4630
                  %p4627 = scmp.ge.s32.totalorder %s4626, 1
                  %s4631 = sphi %s3208, %s3208
                  %s4632 = sphi %s4340, %s4340
                $region171: #{tpu_custom_call.1} parent=160 // loop_header_branch
                  %4629 = sbr.rel (%p4627) target = $region175
                $region172: #{tpu_custom_call.1} parent=160 // loop_body
                  %v4633 = vld [vmem:[%s4631] sm:%s4624]
                  %4634 = vst [vmem:[%s4632] sm:%s4624] %v4633
                  %v4635 = vld [vmem:[%s4631 + $0x4] sm:%s4624]
                  %4636 = vst [vmem:[%s4632 + $0x4] sm:%s4624] %v4635
                  %v4637 = vld [vmem:[%s4631 + $0x8] sm:%s4624]
                  %4638 = vst [vmem:[%s4632 + $0x8] sm:%s4624] %v4637
                  %v4639 = vld [vmem:[%s4631 + $0xc] sm:%s4624]
                  %4640 = vst [vmem:[%s4632 + $0xc] sm:%s4624] %v4639
                  %v4641 = vld [vmem:[%s4631 + $0x10] sm:%s4624]
                  %4642 = vst [vmem:[%s4632 + $0x10] sm:%s4624] %v4641
                  %v4643 = vld [vmem:[%s4631 + $0x14] sm:%s4624]
                  %4644 = vst [vmem:[%s4632 + $0x14] sm:%s4624] %v4643
                  %v4645 = vld [vmem:[%s4631 + $0x18] sm:%s4624]
                  %4646 = vst [vmem:[%s4632 + $0x18] sm:%s4624] %v4645
                  %v4647 = vld [vmem:[%s4631 + $0x1c] sm:%s4624]
                  %4648 = vst [vmem:[%s4632 + $0x1c] sm:%s4624] %v4647
                  %v4649 = vld [vmem:[%s4631 + $0x20] sm:%s4624]
                  %4650 = vst [vmem:[%s4632 + $0x20] sm:%s4624] %v4649
                  %v4651 = vld [vmem:[%s4631 + $0x24] sm:%s4624]
                  %4652 = vst [vmem:[%s4632 + $0x24] sm:%s4624] %v4651
                  %v4653 = vld [vmem:[%s4631 + $0x28] sm:%s4624]
                  %4654 = vst [vmem:[%s4632 + $0x28] sm:%s4624] %v4653
                  %v4655 = vld [vmem:[%s4631 + $0x2c] sm:%s4624]
                  %4656 = vst [vmem:[%s4632 + $0x2c] sm:%s4624] %v4655
                  %v4657 = vld [vmem:[%s4631 + $0x30] sm:%s4624]
                  %4658 = vst [vmem:[%s4632 + $0x30] sm:%s4624] %v4657
                  %v4659 = vld [vmem:[%s4631 + $0x34] sm:%s4624]
                  %4660 = vst [vmem:[%s4632 + $0x34] sm:%s4624] %v4659
                  %v4661 = vld [vmem:[%s4631 + $0x38] sm:%s4624]
                  %4662 = vst [vmem:[%s4632 + $0x38] sm:%s4624] %v4661
                  %v4663 = vld [vmem:[%s4631 + $0x3c] sm:%s4624]
                  %4664 = vst [vmem:[%s4632 + $0x3c] sm:%s4624] %v4663
                  %v4665 = vld [vmem:[%s4631 + $0x40] sm:%s4624]
                  %4666 = vst [vmem:[%s4632 + $0x40] sm:%s4624] %v4665
                  %v4667 = vld [vmem:[%s4631 + $0x44] sm:%s4624]
                  %4668 = vst [vmem:[%s4632 + $0x44] sm:%s4624] %v4667
                  %v4669 = vld [vmem:[%s4631 + $0x48] sm:%s4624]
                  %4670 = vst [vmem:[%s4632 + $0x48] sm:%s4624] %v4669
                  %v4671 = vld [vmem:[%s4631 + $0x4c] sm:%s4624]
                  %4672 = vst [vmem:[%s4632 + $0x4c] sm:%s4624] %v4671
                  %v4673 = vld [vmem:[%s4631 + $0x50] sm:%s4624]
                  %4674 = vst [vmem:[%s4632 + $0x50] sm:%s4624] %v4673
                  %v4675 = vld [vmem:[%s4631 + $0x54] sm:%s4624]
                  %4676 = vst [vmem:[%s4632 + $0x54] sm:%s4624] %v4675
                  %v4677 = vld [vmem:[%s4631 + $0x58] sm:%s4624]
                  %4678 = vst [vmem:[%s4632 + $0x58] sm:%s4624] %v4677
                  %v4679 = vld [vmem:[%s4631 + $0x5c] sm:%s4624]
                  %4680 = vst [vmem:[%s4632 + $0x5c] sm:%s4624] %v4679
                  %v4681 = vld [vmem:[%s4631 + $0x60] sm:%s4624]
                  %4682 = vst [vmem:[%s4632 + $0x60] sm:%s4624] %v4681
                  %v4683 = vld [vmem:[%s4631 + $0x64] sm:%s4624]
                  %4684 = vst [vmem:[%s4632 + $0x64] sm:%s4624] %v4683
                  %v4685 = vld [vmem:[%s4631 + $0x68] sm:%s4624]
                  %4686 = vst [vmem:[%s4632 + $0x68] sm:%s4624] %v4685
                  %v4687 = vld [vmem:[%s4631 + $0x6c] sm:%s4624]
                  %4688 = vst [vmem:[%s4632 + $0x6c] sm:%s4624] %v4687
                  %v4689 = vld [vmem:[%s4631 + $0x70] sm:%s4624]
                  %4690 = vst [vmem:[%s4632 + $0x70] sm:%s4624] %v4689
                  %v4691 = vld [vmem:[%s4631 + $0x74] sm:%s4624]
                  %4692 = vst [vmem:[%s4632 + $0x74] sm:%s4624] %v4691
                  %v4693 = vld [vmem:[%s4631 + $0x78] sm:%s4624]
                  %4694 = vst [vmem:[%s4632 + $0x78] sm:%s4624] %v4693
                  %v4695 = vld [vmem:[%s4631 + $0x7c] sm:%s4624]
                  %4696 = vst [vmem:[%s4632 + $0x7c] sm:%s4624] %v4695
                  %v4697 = vld [vmem:[%s4631 + $0x80] sm:%s4624]
                  %4698 = vst [vmem:[%s4632 + $0x200] sm:%s4624] %v4697
                  %v4699 = vld [vmem:[%s4631 + $0x84] sm:%s4624]
                  %4700 = vst [vmem:[%s4632 + $0x204] sm:%s4624] %v4699
                  %v4701 = vld [vmem:[%s4631 + $0x88] sm:%s4624]
                  %4702 = vst [vmem:[%s4632 + $0x208] sm:%s4624] %v4701
                  %v4703 = vld [vmem:[%s4631 + $0x8c] sm:%s4624]
                  %4704 = vst [vmem:[%s4632 + $0x20c] sm:%s4624] %v4703
                  %v4705 = vld [vmem:[%s4631 + $0x90] sm:%s4624]
                  %4706 = vst [vmem:[%s4632 + $0x210] sm:%s4624] %v4705
                  %v4707 = vld [vmem:[%s4631 + $0x94] sm:%s4624]
                  %4708 = vst [vmem:[%s4632 + $0x214] sm:%s4624] %v4707
                  %v4709 = vld [vmem:[%s4631 + $0x98] sm:%s4624]
                  %4710 = vst [vmem:[%s4632 + $0x218] sm:%s4624] %v4709
                  %v4711 = vld [vmem:[%s4631 + $0x9c] sm:%s4624]
                  %4712 = vst [vmem:[%s4632 + $0x21c] sm:%s4624] %v4711
                  %v4713 = vld [vmem:[%s4631 + $0xa0] sm:%s4624]
                  %4714 = vst [vmem:[%s4632 + $0x220] sm:%s4624] %v4713
                  %v4715 = vld [vmem:[%s4631 + $0xa4] sm:%s4624]
                  %4716 = vst [vmem:[%s4632 + $0x224] sm:%s4624] %v4715
                  %v4717 = vld [vmem:[%s4631 + $0xa8] sm:%s4624]
                  %4718 = vst [vmem:[%s4632 + $0x228] sm:%s4624] %v4717
                  %v4719 = vld [vmem:[%s4631 + $0xac] sm:%s4624]
                  %4720 = vst [vmem:[%s4632 + $0x22c] sm:%s4624] %v4719
                  %v4721 = vld [vmem:[%s4631 + $0xb0] sm:%s4624]
                  %4722 = vst [vmem:[%s4632 + $0x230] sm:%s4624] %v4721
                  %v4723 = vld [vmem:[%s4631 + $0xb4] sm:%s4624]
                  %4724 = vst [vmem:[%s4632 + $0x234] sm:%s4624] %v4723
                  %v4725 = vld [vmem:[%s4631 + $0xb8] sm:%s4624]
                  %4726 = vst [vmem:[%s4632 + $0x238] sm:%s4624] %v4725
                  %v4727 = vld [vmem:[%s4631 + $0xbc] sm:%s4624]
                  %4728 = vst [vmem:[%s4632 + $0x23c] sm:%s4624] %v4727
                  %v4729 = vld [vmem:[%s4631 + $0xc0] sm:%s4624]
                  %4730 = vst [vmem:[%s4632 + $0x240] sm:%s4624] %v4729
                  %v4731 = vld [vmem:[%s4631 + $0xc4] sm:%s4624]
                  %4732 = vst [vmem:[%s4632 + $0x244] sm:%s4624] %v4731
                  %v4733 = vld [vmem:[%s4631 + $0xc8] sm:%s4624]
                  %4734 = vst [vmem:[%s4632 + $0x248] sm:%s4624] %v4733
                  %v4735 = vld [vmem:[%s4631 + $0xcc] sm:%s4624]
                  %4736 = vst [vmem:[%s4632 + $0x24c] sm:%s4624] %v4735
                  %v4737 = vld [vmem:[%s4631 + $0xd0] sm:%s4624]
                  %4738 = vst [vmem:[%s4632 + $0x250] sm:%s4624] %v4737
                  %v4739 = vld [vmem:[%s4631 + $0xd4] sm:%s4624]
                  %4740 = vst [vmem:[%s4632 + $0x254] sm:%s4624] %v4739
                  %v4741 = vld [vmem:[%s4631 + $0xd8] sm:%s4624]
                  %4742 = vst [vmem:[%s4632 + $0x258] sm:%s4624] %v4741
                  %v4743 = vld [vmem:[%s4631 + $0xdc] sm:%s4624]
                  %4744 = vst [vmem:[%s4632 + $0x25c] sm:%s4624] %v4743
                  %v4745 = vld [vmem:[%s4631 + $0xe0] sm:%s4624]
                  %4746 = vst [vmem:[%s4632 + $0x260] sm:%s4624] %v4745
                  %v4747 = vld [vmem:[%s4631 + $0xe4] sm:%s4624]
                  %4748 = vst [vmem:[%s4632 + $0x264] sm:%s4624] %v4747
                  %v4749 = vld [vmem:[%s4631 + $0xe8] sm:%s4624]
                  %4750 = vst [vmem:[%s4632 + $0x268] sm:%s4624] %v4749
                  %v4751 = vld [vmem:[%s4631 + $0xec] sm:%s4624]
                  %4752 = vst [vmem:[%s4632 + $0x26c] sm:%s4624] %v4751
                  %v4753 = vld [vmem:[%s4631 + $0xf0] sm:%s4624]
                  %4754 = vst [vmem:[%s4632 + $0x270] sm:%s4624] %v4753
                  %v4755 = vld [vmem:[%s4631 + $0xf4] sm:%s4624]
                  %4756 = vst [vmem:[%s4632 + $0x274] sm:%s4624] %v4755
                  %v4757 = vld [vmem:[%s4631 + $0xf8] sm:%s4624]
                  %4758 = vst [vmem:[%s4632 + $0x278] sm:%s4624] %v4757
                  %v4759 = vld [vmem:[%s4631 + $0xfc] sm:%s4624]
                  %4760 = vst [vmem:[%s4632 + $0x27c] sm:%s4624] %v4759
                  %v4761 = vld [vmem:[%s4631 + $0x100] sm:%s4624]
                  %4762 = vst [vmem:[%s4632 + $0x400] sm:%s4624] %v4761
                  %v4763 = vld [vmem:[%s4631 + $0x104] sm:%s4624]
                  %4764 = vst [vmem:[%s4632 + $0x404] sm:%s4624] %v4763
                  %v4765 = vld [vmem:[%s4631 + $0x108] sm:%s4624]
                  %4766 = vst [vmem:[%s4632 + $0x408] sm:%s4624] %v4765
                  %v4767 = vld [vmem:[%s4631 + $0x10c] sm:%s4624]
                  %4768 = vst [vmem:[%s4632 + $0x40c] sm:%s4624] %v4767
                  %v4769 = vld [vmem:[%s4631 + $0x110] sm:%s4624]
                  %4770 = vst [vmem:[%s4632 + $0x410] sm:%s4624] %v4769
                  %v4771 = vld [vmem:[%s4631 + $0x114] sm:%s4624]
                  %4772 = vst [vmem:[%s4632 + $0x414] sm:%s4624] %v4771
                  %v4773 = vld [vmem:[%s4631 + $0x118] sm:%s4624]
                  %4774 = vst [vmem:[%s4632 + $0x418] sm:%s4624] %v4773
                  %v4775 = vld [vmem:[%s4631 + $0x11c] sm:%s4624]
                  %4776 = vst [vmem:[%s4632 + $0x41c] sm:%s4624] %v4775
                  %v4777 = vld [vmem:[%s4631 + $0x120] sm:%s4624]
                  %4778 = vst [vmem:[%s4632 + $0x420] sm:%s4624] %v4777
                  %v4779 = vld [vmem:[%s4631 + $0x124] sm:%s4624]
                  %4780 = vst [vmem:[%s4632 + $0x424] sm:%s4624] %v4779
                  %v4781 = vld [vmem:[%s4631 + $0x128] sm:%s4624]
                  %4782 = vst [vmem:[%s4632 + $0x428] sm:%s4624] %v4781
                  %v4783 = vld [vmem:[%s4631 + $0x12c] sm:%s4624]
                  %4784 = vst [vmem:[%s4632 + $0x42c] sm:%s4624] %v4783
                  %v4785 = vld [vmem:[%s4631 + $0x130] sm:%s4624]
                  %4786 = vst [vmem:[%s4632 + $0x430] sm:%s4624] %v4785
                  %v4787 = vld [vmem:[%s4631 + $0x134] sm:%s4624]
                  %4788 = vst [vmem:[%s4632 + $0x434] sm:%s4624] %v4787
                  %v4789 = vld [vmem:[%s4631 + $0x138] sm:%s4624]
                  %4790 = vst [vmem:[%s4632 + $0x438] sm:%s4624] %v4789
                  %v4791 = vld [vmem:[%s4631 + $0x13c] sm:%s4624]
                  %4792 = vst [vmem:[%s4632 + $0x43c] sm:%s4624] %v4791
                  %v4793 = vld [vmem:[%s4631 + $0x140] sm:%s4624]
                  %4794 = vst [vmem:[%s4632 + $0x440] sm:%s4624] %v4793
                  %v4795 = vld [vmem:[%s4631 + $0x144] sm:%s4624]
                  %4796 = vst [vmem:[%s4632 + $0x444] sm:%s4624] %v4795
                  %v4797 = vld [vmem:[%s4631 + $0x148] sm:%s4624]
                  %4798 = vst [vmem:[%s4632 + $0x448] sm:%s4624] %v4797
                  %v4799 = vld [vmem:[%s4631 + $0x14c] sm:%s4624]
                  %4800 = vst [vmem:[%s4632 + $0x44c] sm:%s4624] %v4799
                  %v4801 = vld [vmem:[%s4631 + $0x150] sm:%s4624]
                  %4802 = vst [vmem:[%s4632 + $0x450] sm:%s4624] %v4801
                  %v4803 = vld [vmem:[%s4631 + $0x154] sm:%s4624]
                  %4804 = vst [vmem:[%s4632 + $0x454] sm:%s4624] %v4803
                  %v4805 = vld [vmem:[%s4631 + $0x158] sm:%s4624]
                  %4806 = vst [vmem:[%s4632 + $0x458] sm:%s4624] %v4805
                  %v4807 = vld [vmem:[%s4631 + $0x15c] sm:%s4624]
                  %4808 = vst [vmem:[%s4632 + $0x45c] sm:%s4624] %v4807
                  %v4809 = vld [vmem:[%s4631 + $0x160] sm:%s4624]
                  %4810 = vst [vmem:[%s4632 + $0x460] sm:%s4624] %v4809
                  %v4811 = vld [vmem:[%s4631 + $0x164] sm:%s4624]
                  %4812 = vst [vmem:[%s4632 + $0x464] sm:%s4624] %v4811
                  %v4813 = vld [vmem:[%s4631 + $0x168] sm:%s4624]
                  %4814 = vst [vmem:[%s4632 + $0x468] sm:%s4624] %v4813
                  %v4815 = vld [vmem:[%s4631 + $0x16c] sm:%s4624]
                  %4816 = vst [vmem:[%s4632 + $0x46c] sm:%s4624] %v4815
                  %v4817 = vld [vmem:[%s4631 + $0x170] sm:%s4624]
                  %4818 = vst [vmem:[%s4632 + $0x470] sm:%s4624] %v4817
                  %v4819 = vld [vmem:[%s4631 + $0x174] sm:%s4624]
                  %4820 = vst [vmem:[%s4632 + $0x474] sm:%s4624] %v4819
                  %v4821 = vld [vmem:[%s4631 + $0x178] sm:%s4624]
                  %4822 = vst [vmem:[%s4632 + $0x478] sm:%s4624] %v4821
                  %v4823 = vld [vmem:[%s4631 + $0x17c] sm:%s4624]
                  %4824 = vst [vmem:[%s4632 + $0x47c] sm:%s4624] %v4823
                  %v4825 = vld [vmem:[%s4631 + $0x180] sm:%s4624]
                  %4826 = vst [vmem:[%s4632 + $0x600] sm:%s4624] %v4825
                  %v4827 = vld [vmem:[%s4631 + $0x184] sm:%s4624]
                  %4828 = vst [vmem:[%s4632 + $0x604] sm:%s4624] %v4827
                  %v4829 = vld [vmem:[%s4631 + $0x188] sm:%s4624]
                  %4830 = vst [vmem:[%s4632 + $0x608] sm:%s4624] %v4829
                  %v4831 = vld [vmem:[%s4631 + $0x18c] sm:%s4624]
                  %4832 = vst [vmem:[%s4632 + $0x60c] sm:%s4624] %v4831
                  %v4833 = vld [vmem:[%s4631 + $0x190] sm:%s4624]
                  %4834 = vst [vmem:[%s4632 + $0x610] sm:%s4624] %v4833
                  %v4835 = vld [vmem:[%s4631 + $0x194] sm:%s4624]
                  %4836 = vst [vmem:[%s4632 + $0x614] sm:%s4624] %v4835
                  %v4837 = vld [vmem:[%s4631 + $0x198] sm:%s4624]
                  %4838 = vst [vmem:[%s4632 + $0x618] sm:%s4624] %v4837
                  %v4839 = vld [vmem:[%s4631 + $0x19c] sm:%s4624]
                  %4840 = vst [vmem:[%s4632 + $0x61c] sm:%s4624] %v4839
                  %v4841 = vld [vmem:[%s4631 + $0x1a0] sm:%s4624]
                  %4842 = vst [vmem:[%s4632 + $0x620] sm:%s4624] %v4841
                  %v4843 = vld [vmem:[%s4631 + $0x1a4] sm:%s4624]
                  %4844 = vst [vmem:[%s4632 + $0x624] sm:%s4624] %v4843
                  %v4845 = vld [vmem:[%s4631 + $0x1a8] sm:%s4624]
                  %4846 = vst [vmem:[%s4632 + $0x628] sm:%s4624] %v4845
                  %v4847 = vld [vmem:[%s4631 + $0x1ac] sm:%s4624]
                  %4848 = vst [vmem:[%s4632 + $0x62c] sm:%s4624] %v4847
                  %v4849 = vld [vmem:[%s4631 + $0x1b0] sm:%s4624]
                  %4850 = vst [vmem:[%s4632 + $0x630] sm:%s4624] %v4849
                  %v4851 = vld [vmem:[%s4631 + $0x1b4] sm:%s4624]
                  %4852 = vst [vmem:[%s4632 + $0x634] sm:%s4624] %v4851
                  %v4853 = vld [vmem:[%s4631 + $0x1b8] sm:%s4624]
                  %4854 = vst [vmem:[%s4632 + $0x638] sm:%s4624] %v4853
                  %v4855 = vld [vmem:[%s4631 + $0x1bc] sm:%s4624]
                  %4856 = vst [vmem:[%s4632 + $0x63c] sm:%s4624] %v4855
                  %v4857 = vld [vmem:[%s4631 + $0x1c0] sm:%s4624]
                  %4858 = vst [vmem:[%s4632 + $0x640] sm:%s4624] %v4857
                  %v4859 = vld [vmem:[%s4631 + $0x1c4] sm:%s4624]
                  %4860 = vst [vmem:[%s4632 + $0x644] sm:%s4624] %v4859
                  %v4861 = vld [vmem:[%s4631 + $0x1c8] sm:%s4624]
                  %4862 = vst [vmem:[%s4632 + $0x648] sm:%s4624] %v4861
                  %v4863 = vld [vmem:[%s4631 + $0x1cc] sm:%s4624]
                  %4864 = vst [vmem:[%s4632 + $0x64c] sm:%s4624] %v4863
                  %v4865 = vld [vmem:[%s4631 + $0x1d0] sm:%s4624]
                  %4866 = vst [vmem:[%s4632 + $0x650] sm:%s4624] %v4865
                  %v4867 = vld [vmem:[%s4631 + $0x1d4] sm:%s4624]
                  %4868 = vst [vmem:[%s4632 + $0x654] sm:%s4624] %v4867
                  %v4869 = vld [vmem:[%s4631 + $0x1d8] sm:%s4624]
                  %4870 = vst [vmem:[%s4632 + $0x658] sm:%s4624] %v4869
                  %v4871 = vld [vmem:[%s4631 + $0x1dc] sm:%s4624]
                  %4872 = vst [vmem:[%s4632 + $0x65c] sm:%s4624] %v4871
                  %v4873 = vld [vmem:[%s4631 + $0x1e0] sm:%s4624]
                  %4874 = vst [vmem:[%s4632 + $0x660] sm:%s4624] %v4873
                  %v4875 = vld [vmem:[%s4631 + $0x1e4] sm:%s4624]
                  %4876 = vst [vmem:[%s4632 + $0x664] sm:%s4624] %v4875
                  %v4877 = vld [vmem:[%s4631 + $0x1e8] sm:%s4624]
                  %4878 = vst [vmem:[%s4632 + $0x668] sm:%s4624] %v4877
                  %v4879 = vld [vmem:[%s4631 + $0x1ec] sm:%s4624]
                  %4880 = vst [vmem:[%s4632 + $0x66c] sm:%s4624] %v4879
                  %v4881 = vld [vmem:[%s4631 + $0x1f0] sm:%s4624]
                  %4882 = vst [vmem:[%s4632 + $0x670] sm:%s4624] %v4881
                  %v4883 = vld [vmem:[%s4631 + $0x1f4] sm:%s4624]
                  %4884 = vst [vmem:[%s4632 + $0x674] sm:%s4624] %v4883
                  %v4885 = vld [vmem:[%s4631 + $0x1f8] sm:%s4624]
                  %4886 = vst [vmem:[%s4632 + $0x678] sm:%s4624] %v4885
                  %v4887 = vld [vmem:[%s4631 + $0x1fc] sm:%s4624]
                  %4888 = vst [vmem:[%s4632 + $0x67c] sm:%s4624] %v4887
                $region173: #{tpu_custom_call.1} parent=160 // loop_footer
                  %s4630 = sadd.s32 1, %s4626
                $region174: #{tpu_custom_call.1} parent=160 // loop_footer_branch
                  %4625 = sbr.rel target = $region170
                $region175: #{tpu_custom_call.1} parent=160 // loop_exit
                  _
              $region161: #{tpu_custom_call.1} parent=145 // pred_fallthru
                _
            $region146: #{tpu_custom_call.1} parent=141 // pred_fallthru
              _
            // Predicated region
            $region147: #{tpu_custom_call.1} parent=141 // pred_check
              _
            $region148: #{tpu_custom_call.1} parent=141 // pred_check_branch
              %4346 = sbr.rel (0) target = $region150
            $region149: #{tpu_custom_call.1} parent=141 // pred_region
              %s4348 = ssub.s32 16, 1
              loop: start=0, step=1, limit=1
              $region151: #{tpu_custom_call.1} parent=149 // loop_pre_header
                _
              $region152: #{tpu_custom_call.1} parent=149 // loop_header
                %s4350 = sphi 0, %s4354
                %p4351 = scmp.ge.s32.totalorder %s4350, 1
                %s4355 = sphi %s3208, %s3208
                %s4356 = sphi %s4340, %s4340
              $region153: #{tpu_custom_call.1} parent=149 // loop_header_branch
                %4353 = sbr.rel (%p4351) target = $region157
              $region154: #{tpu_custom_call.1} parent=149 // loop_body
                %v4357 = vld [vmem:[%s4355] sm:%s4348]
                %4358 = vst [vmem:[%s4356] sm:%s4348] %v4357
                %v4359 = vld [vmem:[%s4355 + $0x4] sm:%s4348]
                %4360 = vst [vmem:[%s4356 + $0x4] sm:%s4348] %v4359
                %v4361 = vld [vmem:[%s4355 + $0x8] sm:%s4348]
                %4362 = vst [vmem:[%s4356 + $0x8] sm:%s4348] %v4361
                %v4363 = vld [vmem:[%s4355 + $0xc] sm:%s4348]
                %4364 = vst [vmem:[%s4356 + $0xc] sm:%s4348] %v4363
                %v4365 = vld [vmem:[%s4355 + $0x10] sm:%s4348]
                %4366 = vst [vmem:[%s4356 + $0x10] sm:%s4348] %v4365
                %v4367 = vld [vmem:[%s4355 + $0x14] sm:%s4348]
                %4368 = vst [vmem:[%s4356 + $0x14] sm:%s4348] %v4367
                %v4369 = vld [vmem:[%s4355 + $0x18] sm:%s4348]
                %4370 = vst [vmem:[%s4356 + $0x18] sm:%s4348] %v4369
                %v4371 = vld [vmem:[%s4355 + $0x1c] sm:%s4348]
                %4372 = vst [vmem:[%s4356 + $0x1c] sm:%s4348] %v4371
                %v4373 = vld [vmem:[%s4355 + $0x20] sm:%s4348]
                %4374 = vst [vmem:[%s4356 + $0x20] sm:%s4348] %v4373
                %v4375 = vld [vmem:[%s4355 + $0x24] sm:%s4348]
                %4376 = vst [vmem:[%s4356 + $0x24] sm:%s4348] %v4375
                %v4377 = vld [vmem:[%s4355 + $0x28] sm:%s4348]
                %4378 = vst [vmem:[%s4356 + $0x28] sm:%s4348] %v4377
                %v4379 = vld [vmem:[%s4355 + $0x2c] sm:%s4348]
                %4380 = vst [vmem:[%s4356 + $0x2c] sm:%s4348] %v4379
                %v4381 = vld [vmem:[%s4355 + $0x30] sm:%s4348]
                %4382 = vst [vmem:[%s4356 + $0x30] sm:%s4348] %v4381
                %v4383 = vld [vmem:[%s4355 + $0x34] sm:%s4348]
                %4384 = vst [vmem:[%s4356 + $0x34] sm:%s4348] %v4383
                %v4385 = vld [vmem:[%s4355 + $0x38] sm:%s4348]
                %4386 = vst [vmem:[%s4356 + $0x38] sm:%s4348] %v4385
                %v4387 = vld [vmem:[%s4355 + $0x3c] sm:%s4348]
                %4388 = vst [vmem:[%s4356 + $0x3c] sm:%s4348] %v4387
                %v4389 = vld [vmem:[%s4355 + $0x40] sm:%s4348]
                %4390 = vst [vmem:[%s4356 + $0x40] sm:%s4348] %v4389
                %v4391 = vld [vmem:[%s4355 + $0x44] sm:%s4348]
                %4392 = vst [vmem:[%s4356 + $0x44] sm:%s4348] %v4391
                %v4393 = vld [vmem:[%s4355 + $0x48] sm:%s4348]
                %4394 = vst [vmem:[%s4356 + $0x48] sm:%s4348] %v4393
                %v4395 = vld [vmem:[%s4355 + $0x4c] sm:%s4348]
                %4396 = vst [vmem:[%s4356 + $0x4c] sm:%s4348] %v4395
                %v4397 = vld [vmem:[%s4355 + $0x50] sm:%s4348]
                %4398 = vst [vmem:[%s4356 + $0x50] sm:%s4348] %v4397
                %v4399 = vld [vmem:[%s4355 + $0x54] sm:%s4348]
                %4400 = vst [vmem:[%s4356 + $0x54] sm:%s4348] %v4399
                %v4401 = vld [vmem:[%s4355 + $0x58] sm:%s4348]
                %4402 = vst [vmem:[%s4356 + $0x58] sm:%s4348] %v4401
                %v4403 = vld [vmem:[%s4355 + $0x5c] sm:%s4348]
                %4404 = vst [vmem:[%s4356 + $0x5c] sm:%s4348] %v4403
                %v4405 = vld [vmem:[%s4355 + $0x60] sm:%s4348]
                %4406 = vst [vmem:[%s4356 + $0x60] sm:%s4348] %v4405
                %v4407 = vld [vmem:[%s4355 + $0x64] sm:%s4348]
                %4408 = vst [vmem:[%s4356 + $0x64] sm:%s4348] %v4407
                %v4409 = vld [vmem:[%s4355 + $0x68] sm:%s4348]
                %4410 = vst [vmem:[%s4356 + $0x68] sm:%s4348] %v4409
                %v4411 = vld [vmem:[%s4355 + $0x6c] sm:%s4348]
                %4412 = vst [vmem:[%s4356 + $0x6c] sm:%s4348] %v4411
                %v4413 = vld [vmem:[%s4355 + $0x70] sm:%s4348]
                %4414 = vst [vmem:[%s4356 + $0x70] sm:%s4348] %v4413
                %v4415 = vld [vmem:[%s4355 + $0x74] sm:%s4348]
                %4416 = vst [vmem:[%s4356 + $0x74] sm:%s4348] %v4415
                %v4417 = vld [vmem:[%s4355 + $0x78] sm:%s4348]
                %4418 = vst [vmem:[%s4356 + $0x78] sm:%s4348] %v4417
                %v4419 = vld [vmem:[%s4355 + $0x7c] sm:%s4348]
                %4420 = vst [vmem:[%s4356 + $0x7c] sm:%s4348] %v4419
                %v4421 = vld [vmem:[%s4355 + $0x80] sm:%s4348]
                %4422 = vst [vmem:[%s4356 + $0x200] sm:%s4348] %v4421
                %v4423 = vld [vmem:[%s4355 + $0x84] sm:%s4348]
                %4424 = vst [vmem:[%s4356 + $0x204] sm:%s4348] %v4423
                %v4425 = vld [vmem:[%s4355 + $0x88] sm:%s4348]
                %4426 = vst [vmem:[%s4356 + $0x208] sm:%s4348] %v4425
                %v4427 = vld [vmem:[%s4355 + $0x8c] sm:%s4348]
                %4428 = vst [vmem:[%s4356 + $0x20c] sm:%s4348] %v4427
                %v4429 = vld [vmem:[%s4355 + $0x90] sm:%s4348]
                %4430 = vst [vmem:[%s4356 + $0x210] sm:%s4348] %v4429
                %v4431 = vld [vmem:[%s4355 + $0x94] sm:%s4348]
                %4432 = vst [vmem:[%s4356 + $0x214] sm:%s4348] %v4431
                %v4433 = vld [vmem:[%s4355 + $0x98] sm:%s4348]
                %4434 = vst [vmem:[%s4356 + $0x218] sm:%s4348] %v4433
                %v4435 = vld [vmem:[%s4355 + $0x9c] sm:%s4348]
                %4436 = vst [vmem:[%s4356 + $0x21c] sm:%s4348] %v4435
                %v4437 = vld [vmem:[%s4355 + $0xa0] sm:%s4348]
                %4438 = vst [vmem:[%s4356 + $0x220] sm:%s4348] %v4437
                %v4439 = vld [vmem:[%s4355 + $0xa4] sm:%s4348]
                %4440 = vst [vmem:[%s4356 + $0x224] sm:%s4348] %v4439
                %v4441 = vld [vmem:[%s4355 + $0xa8] sm:%s4348]
                %4442 = vst [vmem:[%s4356 + $0x228] sm:%s4348] %v4441
                %v4443 = vld [vmem:[%s4355 + $0xac] sm:%s4348]
                %4444 = vst [vmem:[%s4356 + $0x22c] sm:%s4348] %v4443
                %v4445 = vld [vmem:[%s4355 + $0xb0] sm:%s4348]
                %4446 = vst [vmem:[%s4356 + $0x230] sm:%s4348] %v4445
                %v4447 = vld [vmem:[%s4355 + $0xb4] sm:%s4348]
                %4448 = vst [vmem:[%s4356 + $0x234] sm:%s4348] %v4447
                %v4449 = vld [vmem:[%s4355 + $0xb8] sm:%s4348]
                %4450 = vst [vmem:[%s4356 + $0x238] sm:%s4348] %v4449
                %v4451 = vld [vmem:[%s4355 + $0xbc] sm:%s4348]
                %4452 = vst [vmem:[%s4356 + $0x23c] sm:%s4348] %v4451
                %v4453 = vld [vmem:[%s4355 + $0xc0] sm:%s4348]
                %4454 = vst [vmem:[%s4356 + $0x240] sm:%s4348] %v4453
                %v4455 = vld [vmem:[%s4355 + $0xc4] sm:%s4348]
                %4456 = vst [vmem:[%s4356 + $0x244] sm:%s4348] %v4455
                %v4457 = vld [vmem:[%s4355 + $0xc8] sm:%s4348]
                %4458 = vst [vmem:[%s4356 + $0x248] sm:%s4348] %v4457
                %v4459 = vld [vmem:[%s4355 + $0xcc] sm:%s4348]
                %4460 = vst [vmem:[%s4356 + $0x24c] sm:%s4348] %v4459
                %v4461 = vld [vmem:[%s4355 + $0xd0] sm:%s4348]
                %4462 = vst [vmem:[%s4356 + $0x250] sm:%s4348] %v4461
                %v4463 = vld [vmem:[%s4355 + $0xd4] sm:%s4348]
                %4464 = vst [vmem:[%s4356 + $0x254] sm:%s4348] %v4463
                %v4465 = vld [vmem:[%s4355 + $0xd8] sm:%s4348]
                %4466 = vst [vmem:[%s4356 + $0x258] sm:%s4348] %v4465
                %v4467 = vld [vmem:[%s4355 + $0xdc] sm:%s4348]
                %4468 = vst [vmem:[%s4356 + $0x25c] sm:%s4348] %v4467
                %v4469 = vld [vmem:[%s4355 + $0xe0] sm:%s4348]
                %4470 = vst [vmem:[%s4356 + $0x260] sm:%s4348] %v4469
                %v4471 = vld [vmem:[%s4355 + $0xe4] sm:%s4348]
                %4472 = vst [vmem:[%s4356 + $0x264] sm:%s4348] %v4471
                %v4473 = vld [vmem:[%s4355 + $0xe8] sm:%s4348]
                %4474 = vst [vmem:[%s4356 + $0x268] sm:%s4348] %v4473
                %v4475 = vld [vmem:[%s4355 + $0xec] sm:%s4348]
                %4476 = vst [vmem:[%s4356 + $0x26c] sm:%s4348] %v4475
                %v4477 = vld [vmem:[%s4355 + $0xf0] sm:%s4348]
                %4478 = vst [vmem:[%s4356 + $0x270] sm:%s4348] %v4477
                %v4479 = vld [vmem:[%s4355 + $0xf4] sm:%s4348]
                %4480 = vst [vmem:[%s4356 + $0x274] sm:%s4348] %v4479
                %v4481 = vld [vmem:[%s4355 + $0xf8] sm:%s4348]
                %4482 = vst [vmem:[%s4356 + $0x278] sm:%s4348] %v4481
                %v4483 = vld [vmem:[%s4355 + $0xfc] sm:%s4348]
                %4484 = vst [vmem:[%s4356 + $0x27c] sm:%s4348] %v4483
                %v4485 = vld [vmem:[%s4355 + $0x100] sm:%s4348]
                %4486 = vst [vmem:[%s4356 + $0x400] sm:%s4348] %v4485
                %v4487 = vld [vmem:[%s4355 + $0x104] sm:%s4348]
                %4488 = vst [vmem:[%s4356 + $0x404] sm:%s4348] %v4487
                %v4489 = vld [vmem:[%s4355 + $0x108] sm:%s4348]
                %4490 = vst [vmem:[%s4356 + $0x408] sm:%s4348] %v4489
                %v4491 = vld [vmem:[%s4355 + $0x10c] sm:%s4348]
                %4492 = vst [vmem:[%s4356 + $0x40c] sm:%s4348] %v4491
                %v4493 = vld [vmem:[%s4355 + $0x110] sm:%s4348]
                %4494 = vst [vmem:[%s4356 + $0x410] sm:%s4348] %v4493
                %v4495 = vld [vmem:[%s4355 + $0x114] sm:%s4348]
                %4496 = vst [vmem:[%s4356 + $0x414] sm:%s4348] %v4495
                %v4497 = vld [vmem:[%s4355 + $0x118] sm:%s4348]
                %4498 = vst [vmem:[%s4356 + $0x418] sm:%s4348] %v4497
                %v4499 = vld [vmem:[%s4355 + $0x11c] sm:%s4348]
                %4500 = vst [vmem:[%s4356 + $0x41c] sm:%s4348] %v4499
                %v4501 = vld [vmem:[%s4355 + $0x120] sm:%s4348]
                %4502 = vst [vmem:[%s4356 + $0x420] sm:%s4348] %v4501
                %v4503 = vld [vmem:[%s4355 + $0x124] sm:%s4348]
                %4504 = vst [vmem:[%s4356 + $0x424] sm:%s4348] %v4503
                %v4505 = vld [vmem:[%s4355 + $0x128] sm:%s4348]
                %4506 = vst [vmem:[%s4356 + $0x428] sm:%s4348] %v4505
                %v4507 = vld [vmem:[%s4355 + $0x12c] sm:%s4348]
                %4508 = vst [vmem:[%s4356 + $0x42c] sm:%s4348] %v4507
                %v4509 = vld [vmem:[%s4355 + $0x130] sm:%s4348]
                %4510 = vst [vmem:[%s4356 + $0x430] sm:%s4348] %v4509
                %v4511 = vld [vmem:[%s4355 + $0x134] sm:%s4348]
                %4512 = vst [vmem:[%s4356 + $0x434] sm:%s4348] %v4511
                %v4513 = vld [vmem:[%s4355 + $0x138] sm:%s4348]
                %4514 = vst [vmem:[%s4356 + $0x438] sm:%s4348] %v4513
                %v4515 = vld [vmem:[%s4355 + $0x13c] sm:%s4348]
                %4516 = vst [vmem:[%s4356 + $0x43c] sm:%s4348] %v4515
                %v4517 = vld [vmem:[%s4355 + $0x140] sm:%s4348]
                %4518 = vst [vmem:[%s4356 + $0x440] sm:%s4348] %v4517
                %v4519 = vld [vmem:[%s4355 + $0x144] sm:%s4348]
                %4520 = vst [vmem:[%s4356 + $0x444] sm:%s4348] %v4519
                %v4521 = vld [vmem:[%s4355 + $0x148] sm:%s4348]
                %4522 = vst [vmem:[%s4356 + $0x448] sm:%s4348] %v4521
                %v4523 = vld [vmem:[%s4355 + $0x14c] sm:%s4348]
                %4524 = vst [vmem:[%s4356 + $0x44c] sm:%s4348] %v4523
                %v4525 = vld [vmem:[%s4355 + $0x150] sm:%s4348]
                %4526 = vst [vmem:[%s4356 + $0x450] sm:%s4348] %v4525
                %v4527 = vld [vmem:[%s4355 + $0x154] sm:%s4348]
                %4528 = vst [vmem:[%s4356 + $0x454] sm:%s4348] %v4527
                %v4529 = vld [vmem:[%s4355 + $0x158] sm:%s4348]
                %4530 = vst [vmem:[%s4356 + $0x458] sm:%s4348] %v4529
                %v4531 = vld [vmem:[%s4355 + $0x15c] sm:%s4348]
                %4532 = vst [vmem:[%s4356 + $0x45c] sm:%s4348] %v4531
                %v4533 = vld [vmem:[%s4355 + $0x160] sm:%s4348]
                %4534 = vst [vmem:[%s4356 + $0x460] sm:%s4348] %v4533
                %v4535 = vld [vmem:[%s4355 + $0x164] sm:%s4348]
                %4536 = vst [vmem:[%s4356 + $0x464] sm:%s4348] %v4535
                %v4537 = vld [vmem:[%s4355 + $0x168] sm:%s4348]
                %4538 = vst [vmem:[%s4356 + $0x468] sm:%s4348] %v4537
                %v4539 = vld [vmem:[%s4355 + $0x16c] sm:%s4348]
                %4540 = vst [vmem:[%s4356 + $0x46c] sm:%s4348] %v4539
                %v4541 = vld [vmem:[%s4355 + $0x170] sm:%s4348]
                %4542 = vst [vmem:[%s4356 + $0x470] sm:%s4348] %v4541
                %v4543 = vld [vmem:[%s4355 + $0x174] sm:%s4348]
                %4544 = vst [vmem:[%s4356 + $0x474] sm:%s4348] %v4543
                %v4545 = vld [vmem:[%s4355 + $0x178] sm:%s4348]
                %4546 = vst [vmem:[%s4356 + $0x478] sm:%s4348] %v4545
                %v4547 = vld [vmem:[%s4355 + $0x17c] sm:%s4348]
                %4548 = vst [vmem:[%s4356 + $0x47c] sm:%s4348] %v4547
                %v4549 = vld [vmem:[%s4355 + $0x180] sm:%s4348]
                %4550 = vst [vmem:[%s4356 + $0x600] sm:%s4348] %v4549
                %v4551 = vld [vmem:[%s4355 + $0x184] sm:%s4348]
                %4552 = vst [vmem:[%s4356 + $0x604] sm:%s4348] %v4551
                %v4553 = vld [vmem:[%s4355 + $0x188] sm:%s4348]
                %4554 = vst [vmem:[%s4356 + $0x608] sm:%s4348] %v4553
                %v4555 = vld [vmem:[%s4355 + $0x18c] sm:%s4348]
                %4556 = vst [vmem:[%s4356 + $0x60c] sm:%s4348] %v4555
                %v4557 = vld [vmem:[%s4355 + $0x190] sm:%s4348]
                %4558 = vst [vmem:[%s4356 + $0x610] sm:%s4348] %v4557
                %v4559 = vld [vmem:[%s4355 + $0x194] sm:%s4348]
                %4560 = vst [vmem:[%s4356 + $0x614] sm:%s4348] %v4559
                %v4561 = vld [vmem:[%s4355 + $0x198] sm:%s4348]
                %4562 = vst [vmem:[%s4356 + $0x618] sm:%s4348] %v4561
                %v4563 = vld [vmem:[%s4355 + $0x19c] sm:%s4348]
                %4564 = vst [vmem:[%s4356 + $0x61c] sm:%s4348] %v4563
                %v4565 = vld [vmem:[%s4355 + $0x1a0] sm:%s4348]
                %4566 = vst [vmem:[%s4356 + $0x620] sm:%s4348] %v4565
                %v4567 = vld [vmem:[%s4355 + $0x1a4] sm:%s4348]
                %4568 = vst [vmem:[%s4356 + $0x624] sm:%s4348] %v4567
                %v4569 = vld [vmem:[%s4355 + $0x1a8] sm:%s4348]
                %4570 = vst [vmem:[%s4356 + $0x628] sm:%s4348] %v4569
                %v4571 = vld [vmem:[%s4355 + $0x1ac] sm:%s4348]
                %4572 = vst [vmem:[%s4356 + $0x62c] sm:%s4348] %v4571
                %v4573 = vld [vmem:[%s4355 + $0x1b0] sm:%s4348]
                %4574 = vst [vmem:[%s4356 + $0x630] sm:%s4348] %v4573
                %v4575 = vld [vmem:[%s4355 + $0x1b4] sm:%s4348]
                %4576 = vst [vmem:[%s4356 + $0x634] sm:%s4348] %v4575
                %v4577 = vld [vmem:[%s4355 + $0x1b8] sm:%s4348]
                %4578 = vst [vmem:[%s4356 + $0x638] sm:%s4348] %v4577
                %v4579 = vld [vmem:[%s4355 + $0x1bc] sm:%s4348]
                %4580 = vst [vmem:[%s4356 + $0x63c] sm:%s4348] %v4579
                %v4581 = vld [vmem:[%s4355 + $0x1c0] sm:%s4348]
                %4582 = vst [vmem:[%s4356 + $0x640] sm:%s4348] %v4581
                %v4583 = vld [vmem:[%s4355 + $0x1c4] sm:%s4348]
                %4584 = vst [vmem:[%s4356 + $0x644] sm:%s4348] %v4583
                %v4585 = vld [vmem:[%s4355 + $0x1c8] sm:%s4348]
                %4586 = vst [vmem:[%s4356 + $0x648] sm:%s4348] %v4585
                %v4587 = vld [vmem:[%s4355 + $0x1cc] sm:%s4348]
                %4588 = vst [vmem:[%s4356 + $0x64c] sm:%s4348] %v4587
                %v4589 = vld [vmem:[%s4355 + $0x1d0] sm:%s4348]
                %4590 = vst [vmem:[%s4356 + $0x650] sm:%s4348] %v4589
                %v4591 = vld [vmem:[%s4355 + $0x1d4] sm:%s4348]
                %4592 = vst [vmem:[%s4356 + $0x654] sm:%s4348] %v4591
                %v4593 = vld [vmem:[%s4355 + $0x1d8] sm:%s4348]
                %4594 = vst [vmem:[%s4356 + $0x658] sm:%s4348] %v4593
                %v4595 = vld [vmem:[%s4355 + $0x1dc] sm:%s4348]
                %4596 = vst [vmem:[%s4356 + $0x65c] sm:%s4348] %v4595
                %v4597 = vld [vmem:[%s4355 + $0x1e0] sm:%s4348]
                %4598 = vst [vmem:[%s4356 + $0x660] sm:%s4348] %v4597
                %v4599 = vld [vmem:[%s4355 + $0x1e4] sm:%s4348]
                %4600 = vst [vmem:[%s4356 + $0x664] sm:%s4348] %v4599
                %v4601 = vld [vmem:[%s4355 + $0x1e8] sm:%s4348]
                %4602 = vst [vmem:[%s4356 + $0x668] sm:%s4348] %v4601
                %v4603 = vld [vmem:[%s4355 + $0x1ec] sm:%s4348]
                %4604 = vst [vmem:[%s4356 + $0x66c] sm:%s4348] %v4603
                %v4605 = vld [vmem:[%s4355 + $0x1f0] sm:%s4348]
                %4606 = vst [vmem:[%s4356 + $0x670] sm:%s4348] %v4605
                %v4607 = vld [vmem:[%s4355 + $0x1f4] sm:%s4348]
                %4608 = vst [vmem:[%s4356 + $0x674] sm:%s4348] %v4607
                %v4609 = vld [vmem:[%s4355 + $0x1f8] sm:%s4348]
                %4610 = vst [vmem:[%s4356 + $0x678] sm:%s4348] %v4609
                %v4611 = vld [vmem:[%s4355 + $0x1fc] sm:%s4348]
                %4612 = vst [vmem:[%s4356 + $0x67c] sm:%s4348] %v4611
              $region155: #{tpu_custom_call.1} parent=149 // loop_footer
                %s4354 = sadd.s32 1, %s4350
              $region156: #{tpu_custom_call.1} parent=149 // loop_footer_branch
                %4349 = sbr.rel target = $region152
              $region157: #{tpu_custom_call.1} parent=149 // loop_exit
                _
            $region150: #{tpu_custom_call.1} parent=141 // pred_fallthru
              _
          $region142: #{tpu_custom_call.1} parent=137 // pred_fallthru
            _
          %4889 = vnop
        $region138: #{tpu_custom_call.1} parent=39 // pred_fallthru
          _
      $region40: #{tpu_custom_call.1} parent=5 // pred_fallthru
        _
      %p4890 = scmp.le.s32.totalorder 2, %s22
      // Predicated region
      $region176: #{tpu_custom_call.1} parent=5 // pred_check
        %p4891 = pneg %p4890
      $region177: #{tpu_custom_call.1} parent=5 // pred_check_branch
        %4893 = sbr.rel (%p4891) target = $region179
      $region178: #{tpu_custom_call.1} parent=5 // pred_region
        %s4894 = ssub.s32 %s22, 2
        // Predicated region
        $region180: #{tpu_custom_call.1} parent=178 // pred_check
          %p4895 = pneg %p161
        $region181: #{tpu_custom_call.1} parent=178 // pred_check_branch
          %4897 = sbr.rel (%p4895) target = $region183
        $region182: #{tpu_custom_call.1} parent=178 // pred_region
          %s4898 = sand.u32 %s146, 1
          %s4899 = scalar_lea.sflag [#allocation4], %s4898
          %s4900 = sand.u32 %s146, 1
          %s4901 = smul.addr %s4900, 128
          %s4902 = scalar_lea.vmem [#allocation7], %s4901
          %4903 = dma.done %s4899, 2048
        $region183: #{tpu_custom_call.1} parent=178 // pred_fallthru
          _
        // Predicated region
        $region184: #{tpu_custom_call.1} parent=178 // pred_check
          %p4904 = pneg %p187
        $region185: #{tpu_custom_call.1} parent=178 // pred_check_branch
          %4906 = sbr.rel (%p4904) target = $region187
        $region186: #{tpu_custom_call.1} parent=178 // pred_region
          %s4907 = sand.u32 %s172, 1
          %s4908 = sand.u32 %s172, 1
          %s4909 = smul.addr %s4908, 512
          %s4910 = scalar_lea.vmem [#allocation8], %s4909
        $region187: #{tpu_custom_call.1} parent=178 // pred_fallthru
          _
        // Predicated region
        $region188: #{tpu_custom_call.1} parent=178 // pred_check
          %p4911 = pneg %p213
        $region189: #{tpu_custom_call.1} parent=178 // pred_check_branch
          %4913 = sbr.rel (%p4911) target = $region191
        $region190: #{tpu_custom_call.1} parent=178 // pred_region
          %s4914 = sand.u32 %s198, 1
          %s4915 = sand.u32 %s198, 1
          %s4916 = smul.addr %s4915, 512
          %s4917 = scalar_lea.vmem [#allocation9], %s4916
        $region191: #{tpu_custom_call.1} parent=178 // pred_fallthru
          _
        // Predicated region
        $region192: #{tpu_custom_call.1} parent=178 // pred_check
          %p4918 = pneg %p239
        $region193: #{tpu_custom_call.1} parent=178 // pred_check_branch
          %4920 = sbr.rel (%p4918) target = $region195
        $region194: #{tpu_custom_call.1} parent=178 // pred_region
          %s4921 = sand.u32 %s224, 1
          %s4922 = sand.u32 %s224, 1
          %s4923 = smul.addr %s4922, 512
          %s4924 = scalar_lea.vmem [#allocation10], %s4923
        $region195: #{tpu_custom_call.1} parent=178 // pred_fallthru
          _
      $region179: #{tpu_custom_call.1} parent=5 // pred_fallthru
        _
    $region6: #{tpu_custom_call.1} parent=1 // loop_footer
      %s26 = sadd.s32 1, %s22
    $region7: #{tpu_custom_call.1} parent=1 // loop_footer_branch
      %21 = sbr.rel target = $region3
    $region8: #{tpu_custom_call.1} parent=1 // loop_exit
      _
    %4925 = vsyncpa [#allocation3], 1
    %s4926 = scalar_lea.sflag [#allocation3], 1
    %4927 = vsyncpa %s4926, 1
    %4928 = vsyncpa [#allocation6], 1
    %4929 = vsyncpa [#allocation4], 1
    %s4930 = scalar_lea.sflag [#allocation4], 1
    %4931 = vsyncpa %s4930, 1

</llo_original>
